<compile_context>
chip_gen: v5e
topology: v5e:2x2
jax: 0.10.0
libtpu: 0.0.40
codegen_flags: <defaults>
</compile_context>

<pallas_src>
import functools

import jax
import jax.numpy as jnp
from jax import lax
from jax.experimental import pallas as pl
from jax.experimental.pallas import tpu as pltpu


# ---------------------------------------------------------------------------
# Pallas kernels
# ---------------------------------------------------------------------------
def _msrb_stage1_kernel(x_ref, w_ref, b_ref, o_ref, patch_ref, *, K, TH, W):
    # x_ref:     (1, H+K-1, W+K-1, Cin) padded full image (reused across row tiles)
    # w_ref:     (K*K*Cin, Cout) bf16 combined im2col weights (3x3 zero-padded + 5x5)
    # b_ref:     (1, Cout) f32 combined bias
    # o_ref:     (1, TH, W, Cout)
    # patch_ref: (TH*W, K*K*Cin) bf16 VMEM scratch (im2col patch matrix)
    t = pl.program_id(1)
    row0 = pl.multiple_of(t * TH, TH)
    Cin = x_ref.shape[-1]
    Cout = w_ref.shape[-1]

    xs = x_ref[0, pl.ds(row0, TH + K - 1), :, :]          # (TH+K-1, Wp, Cin) f32
    # im2col: one (TH*W, Cin) column block per tap, written into VMEM scratch.
    for kh in range(K):
        for kw in range(K):
            col = xs[kh:kh + TH, kw:kw + W, :].reshape(TH * W, Cin)
            c0 = (kh * K + kw) * Cin
            patch_ref[:, c0:c0 + Cin] = col.astype(jnp.bfloat16)

    # Single big MXU matmul: K_contr = K*K*Cin, bf16 operands, f32 accumulate.
    acc = jnp.dot(patch_ref[...], w_ref[...],
                  preferred_element_type=jnp.float32)     # (TH*W, Cout)
    out = jnp.maximum(acc + b_ref[0], 0.0)                # bias + ReLU in f32
    o_ref[0] = out.reshape(TH, W, Cout).astype(o_ref.dtype)


def _msrb_stage2_kernel(x_ref, w_ref, b_ref, wc_ref, bc_ref, res_ref, o_ref,
                        patch_ref, *, K, TH, W):
    # Fused: dual conv (3x3||5x5, ReLU, concat) -> 1x1 confusion + bias + residual.
    # x_ref:   (1, H+K-1, W+K-1, 2n) padded in2
    # w_ref:   (K*K*2n, 4n) bf16     b_ref:  (1, 4n) f32
    # wc_ref:  (4n, n) bf16          bc_ref: (1, n) f32
    # res_ref: (1, TH, W, n) f32 residual (original x)
    # o_ref:   (1, TH, W, n)
    t = pl.program_id(1)
    row0 = pl.multiple_of(t * TH, TH)
    Cin = x_ref.shape[-1]
    Cout = wc_ref.shape[-1]

    xs = x_ref[0, pl.ds(row0, TH + K - 1), :, :]          # (TH+K-1, Wp, Cin) f32
    for kh in range(K):
        for kw in range(K):
            col = xs[kh:kh + TH, kw:kw + W, :].reshape(TH * W, Cin)
            c0 = (kh * K + kw) * Cin
            patch_ref[:, c0:c0 + Cin] = col.astype(jnp.bfloat16)

    mid = jnp.dot(patch_ref[...], w_ref[...],
                  preferred_element_type=jnp.float32)     # (TH*W, 4n)
    mid = jnp.maximum(mid + b_ref[0], 0.0)                # f32 epilogue
    out = jnp.dot(mid.astype(jnp.bfloat16), wc_ref[...],
                  preferred_element_type=jnp.float32)     # (TH*W, n)
    out = out + bc_ref[0] + res_ref[0].reshape(TH * W, Cout)
    o_ref[0] = out.reshape(TH, W, Cout).astype(o_ref.dtype)


# ---------------------------------------------------------------------------
# Wrappers
# ---------------------------------------------------------------------------
_VMEM_LIMIT = 48 * 1024 * 1024


def _combine_im2col_weights(w3, w5):
    """Zero-pad 3x3 weights into the 5x5 tap grid, concat along Cout, flatten
    to (K*K*Cin, C3+C5) in (kh, kw, cin) order, cast to bf16 for the MXU."""
    K = w5.shape[0]
    p = (K - w3.shape[0]) // 2
    w3p = jnp.pad(w3, ((p, p), (p, p), (0, 0), (0, 0)))
    w = jnp.concatenate([w3p, w5], axis=-1)               # (K, K, Cin, C3+C5)
    _, _, cin, cout = w.shape
    return w.reshape(K * K * cin, cout).astype(jnp.bfloat16)


def msrb_stage1(x, w3, b3, w5, b5, *, th=8):
    """relu(conv3(x)) ++ relu(conv5(x)) along channels, one fused kernel."""
    N, H, W, Cin = x.shape
    K = w5.shape[0]
    assert H % th == 0, (H, th)
    p = K // 2
    x_pad = jnp.pad(x, ((0, 0), (p, p), (p, p), (0, 0)))
    Hp, Wp = H + 2 * p, W + 2 * p

    w = _combine_im2col_weights(w3, w5)                   # (K*K*Cin, 2n) bf16
    b = jnp.concatenate([b3, b5]).reshape(1, -1).astype(jnp.float32)
    Cout = w.shape[-1]
    T = H // th

    flops = 2 * N * H * W * (K * K * Cin) * Cout
    bytes_acc = int(x_pad.size * 4 + w.size * 2 + b.size * 4 + N * H * W * Cout * 4)
    kernel = functools.partial(_msrb_stage1_kernel, K=K, TH=th, W=W)

    return pl.pallas_call(
        kernel,
        out_shape=jax.ShapeDtypeStruct((N, H, W, Cout), jnp.float32),
        grid=(N, T),
        in_specs=[
            pl.BlockSpec((1, Hp, Wp, Cin), lambda n, t: (n, 0, 0, 0)),
            pl.BlockSpec((K * K * Cin, Cout), lambda n, t: (0, 0)),
            pl.BlockSpec((1, Cout), lambda n, t: (0, 0)),
        ],
        out_specs=pl.BlockSpec((1, th, W, Cout), lambda n, t: (n, t, 0, 0)),
        scratch_shapes=[pltpu.VMEM((th * W, K * K * Cin), jnp.bfloat16)],
        compiler_params=pltpu.CompilerParams(
            dimension_semantics=("parallel", "parallel"),
            vmem_limit_bytes=_VMEM_LIMIT),
        cost_estimate=pl.CostEstimate(flops=int(flops), transcendentals=0,
                                      bytes_accessed=bytes_acc),
    )(x_pad, w, b)


def msrb_stage2_confusion(in2, w3, b3, w5, b5, wc, bc, x_res, *, th=8):
    """Fused: relu(conv3(in2)) ++ relu(conv5(in2)) -> 1x1 conv + bias + x_res."""
    N, H, W, Cin = in2.shape
    K = w5.shape[0]
    assert H % th == 0, (H, th)
    p = K // 2
    x_pad = jnp.pad(in2, ((0, 0), (p, p), (p, p), (0, 0)))
    Hp, Wp = H + 2 * p, W + 2 * p

    w = _combine_im2col_weights(w3, w5)                   # (K*K*2n, 4n) bf16
    b = jnp.concatenate([b3, b5]).reshape(1, -1).astype(jnp.float32)
    Cmid = w.shape[-1]
    Cout = wc.shape[-1]
    wc_b = wc.astype(jnp.bfloat16)                        # (4n, n) bf16
    bc_b = bc.reshape(1, -1).astype(jnp.float32)
    T = H // th

    flops = 2 * N * H * W * (K * K * Cin) * Cmid + 2 * N * H * W * Cmid * Cout
    bytes_acc = int(x_pad.size * 4 + w.size * 2 + wc_b.size * 2
                    + x_res.size * 4 + N * H * W * Cout * 4)
    kernel = functools.partial(_msrb_stage2_kernel, K=K, TH=th, W=W)

    return pl.pallas_call(
        kernel,
        out_shape=jax.ShapeDtypeStruct((N, H, W, Cout), jnp.float32),
        grid=(N, T),
        in_specs=[
            pl.BlockSpec((1, Hp, Wp, Cin), lambda n, t: (n, 0, 0, 0)),
            pl.BlockSpec((K * K * Cin, Cmid), lambda n, t: (0, 0)),
            pl.BlockSpec((1, Cmid), lambda n, t: (0, 0)),
            pl.BlockSpec((Cmid, Cout), lambda n, t: (0, 0)),
            pl.BlockSpec((1, Cout), lambda n, t: (0, 0)),
            pl.BlockSpec((1, th, W, Cout), lambda n, t: (n, t, 0, 0)),
        ],
        out_specs=pl.BlockSpec((1, th, W, Cout), lambda n, t: (n, t, 0, 0)),
        scratch_shapes=[pltpu.VMEM((th * W, K * K * Cin), jnp.bfloat16)],
        compiler_params=pltpu.CompilerParams(
            dimension_semantics=("parallel", "parallel"),
            vmem_limit_bytes=_VMEM_LIMIT),
        cost_estimate=pl.CostEstimate(flops=int(flops), transcendentals=0,
                                      bytes_accessed=bytes_acc),
    )(x_pad, w, b, wc_b, bc_b, x_res)


def msrb_forward(x, params, *, th=8):
    """MSRB forward in NHWC. x: (N, H, W, n_feats). Two fused pallas_calls."""
    in2 = msrb_stage1(x, params["w31"], params["b31"],
                      params["w51"], params["b51"], th=th)
    return msrb_stage2_confusion(in2, params["w32"], params["b32"],
                                 params["w52"], params["b52"],
                                 params["wc"], params["bc"], x, th=th)


# ---------------------------------------------------------------------------
# Pure-JAX f32 reference (for correctness check)
# ---------------------------------------------------------------------------
def _conv_ref(x, w, b):
    y = lax.conv_general_dilated(
        x, w, window_strides=(1, 1), padding="SAME",
        dimension_numbers=("NHWC", "HWIO", "NHWC"))
    return y + b.reshape(1, 1, 1, -1)


def msrb_ref(x, p):
    o31 = jax.nn.relu(_conv_ref(x, p["w31"], p["b31"]))
    o51 = jax.nn.relu(_conv_ref(x, p["w51"], p["b51"]))
    in2 = jnp.concatenate([o31, o51], axis=-1)
    o32 = jax.nn.relu(_conv_ref(in2, p["w32"], p["b32"]))
    o52 = jax.nn.relu(_conv_ref(in2, p["w52"], p["b52"]))
    in3 = jnp.concatenate([o32, o52], axis=-1)
    out = lax.conv_general_dilated(
        in3, p["wc"].reshape(1, 1, *p["wc"].shape), (1, 1), "SAME",
        dimension_numbers=("NHWC", "HWIO", "NHWC"))
    return out + p["bc"].reshape(1, 1, 1, -1) + x


# ---------------------------------------------------------------------------
# Deterministic parameter init (synthetic — shapes from MSRB.__init__)
# ---------------------------------------------------------------------------
def init_params(key, n_feats):
    keys = jax.random.split(key, 10)
    scale = 0.05

    def w(k, kh, kw, cin, cout):
        return scale * jax.random.normal(k, (kh, kw, cin, cout), jnp.float32)

    def b(k, cout):
        return scale * jax.random.normal(k, (cout,), jnp.float32)

    n = n_feats
    return {
        "w31": w(keys[0], 3, 3, n, n),         "b31": b(keys[1], n),
        "w51": w(keys[2], 5, 5, n, n),         "b51": b(keys[3], n),
        "w32": w(keys[4], 3, 3, 2 * n, 2 * n), "b32": b(keys[5], 2 * n),
        "w52": w(keys[6], 5, 5, 2 * n, 2 * n), "b52": b(keys[7], 2 * n),
        "wc":  scale * jax.random.normal(keys[8], (4 * n, n), jnp.float32),
        "bc":  b(keys[9], n),
    }


if __name__ == "__main__":
    key = jax.random.PRNGKey(0)
    k_x, k_p = jax.random.split(key)

    N, C, Hs, Ws = 2, 4, 16, 16          # small: batch=2, n_feats=4, 16x16
    # Build the input in PyTorch-style NCHW, then move to NHWC for the kernel.
    x_nchw = jax.random.normal(k_x, (N, C, Hs, Ws), jnp.float32)
    x = jnp.transpose(x_nchw, (0, 2, 3, 1))   # -> NHWC

    params = init_params(k_p, n_feats=C)

    fwd = jax.jit(msrb_forward)
    out = jax.block_until_ready(fwd(x, params))

    ref = msrb_ref(x, params)
    assert out.shape == (N, Hs, Ws, C), out.shape
    # bf16 MXU operands with f32 accumulation -> loosened tolerance vs f32 ref.
    assert jnp.allclose(out, ref, atol=2e-2, rtol=2e-2), (
        float(jnp.max(jnp.abs(out - ref))))

    print("KERNEL_OK")
</pallas_src>

<mosaic_0001>
module attributes {stable_mosaic.version = 11 : i64} {
  func.func @_msrb_stage1_kernel(%arg0: i32, %arg1: i32, %arg2: memref<1x20x20x4xf32, #tpu.memory_space<vmem>>, %arg3: memref<100x8xbf16, #tpu.memory_space<vmem>>, %arg4: memref<1x8xf32, #tpu.memory_space<vmem>>, %arg5: memref<1x8x16x8xf32, #tpu.memory_space<vmem>>, %arg6: memref<128x100xbf16, #tpu.memory_space<vmem>>) attributes {dimension_semantics = [#tpu.dimension_semantics<parallel>, #tpu.dimension_semantics<parallel>], iteration_bounds = array<i64: 2, 2>, scalar_prefetch = 0 : i64, scratch_operands = 1 : i64, tpu.core_type = #tpu.core_type<tc>, window_params = [{transform_indices = @transform_0, window_bounds = array<i64: 1, 20, 20, 4>}, {pipeline_mode = #tpu.pipeline_mode<synchronous>, transform_indices = @transform_1, window_bounds = array<i64: 100, 8>}, {pipeline_mode = #tpu.pipeline_mode<synchronous>, transform_indices = @transform_2, window_bounds = array<i64: 1, 8>}, {transform_indices = @transform_3, window_bounds = array<i64: 1, 8, 16, 8>}]} {
    %c8_i32 = arith.constant 8 : i32
    %0 = arith.muli %arg1, %c8_i32 : i32
    %1 = tpu.assume_multiple %0, 8 : i32
    %c0 = arith.constant 0 : index
    %2 = arith.index_cast %1 : i32 to index
    %c0_0 = arith.constant 0 : index
    %c0_1 = arith.constant 0 : index
    %3 = vector.load %arg2[%c0, %2, %c0_0, %c0_1] : memref<1x20x20x4xf32, #tpu.memory_space<vmem>>, vector<1x12x20x4xf32>
    %4 = vector.shape_cast %3 : vector<1x12x20x4xf32> to vector<12x20x4xf32>
    %5 = vector.extract_strided_slice %4 {offsets = [0, 0, 0], sizes = [8, 16, 4], strides = [1, 1, 1]} : vector<12x20x4xf32> to vector<8x16x4xf32>
    %6 = vector.shape_cast %5 : vector<8x16x4xf32> to vector<128x4xf32>
    %7 = arith.truncf %6 : vector<128x4xf32> to vector<128x4xbf16>
    %c0_2 = arith.constant 0 : index
    %c0_3 = arith.constant 0 : index
    %8 = vector.load %arg6[%c0_2, %c0_3] : memref<128x100xbf16, #tpu.memory_space<vmem>>, vector<128x4xbf16>
    tpu.vector_store %arg6[%c0_2, %c0_3], %7 {strides = array<i32>} : memref<128x100xbf16, #tpu.memory_space<vmem>>, vector<128x4xbf16>,
    %9 = vector.extract_strided_slice %4 {offsets = [0, 1, 0], sizes = [8, 16, 4], strides = [1, 1, 1]} : vector<12x20x4xf32> to vector<8x16x4xf32>
    %10 = vector.shape_cast %9 : vector<8x16x4xf32> to vector<128x4xf32>
    %11 = arith.truncf %10 : vector<128x4xf32> to vector<128x4xbf16>
    %c0_4 = arith.constant 0 : index
    %c4 = arith.constant 4 : index
    %12 = vector.load %arg6[%c0_4, %c4] : memref<128x100xbf16, #tpu.memory_space<vmem>>, vector<128x4xbf16>
    tpu.vector_store %arg6[%c0_4, %c4], %11 {strides = array<i32>} : memref<128x100xbf16, #tpu.memory_space<vmem>>, vector<128x4xbf16>,
    %13 = vector.extract_strided_slice %4 {offsets = [0, 2, 0], sizes = [8, 16, 4], strides = [1, 1, 1]} : vector<12x20x4xf32> to vector<8x16x4xf32>
    %14 = vector.shape_cast %13 : vector<8x16x4xf32> to vector<128x4xf32>
    %15 = arith.truncf %14 : vector<128x4xf32> to vector<128x4xbf16>
    %c0_5 = arith.constant 0 : index
    %c8 = arith.constant 8 : index
    %16 = vector.load %arg6[%c0_5, %c8] : memref<128x100xbf16, #tpu.memory_space<vmem>>, vector<128x4xbf16>
    tpu.vector_store %arg6[%c0_5, %c8], %15 {strides = array<i32>} : memref<128x100xbf16, #tpu.memory_space<vmem>>, vector<128x4xbf16>,
    %17 = vector.extract_strided_slice %4 {offsets = [0, 3, 0], sizes = [8, 16, 4], strides = [1, 1, 1]} : vector<12x20x4xf32> to vector<8x16x4xf32>
    %18 = vector.shape_cast %17 : vector<8x16x4xf32> to vector<128x4xf32>
    %19 = arith.truncf %18 : vector<128x4xf32> to vector<128x4xbf16>
    %c0_6 = arith.constant 0 : index
    %c12 = arith.constant 12 : index
    %20 = vector.load %arg6[%c0_6, %c12] : memref<128x100xbf16, #tpu.memory_space<vmem>>, vector<128x4xbf16>
    tpu.vector_store %arg6[%c0_6, %c12], %19 {strides = array<i32>} : memref<128x100xbf16, #tpu.memory_space<vmem>>, vector<128x4xbf16>,
    %21 = vector.extract_strided_slice %4 {offsets = [0, 4, 0], sizes = [8, 16, 4], strides = [1, 1, 1]} : vector<12x20x4xf32> to vector<8x16x4xf32>
    %22 = vector.shape_cast %21 : vector<8x16x4xf32> to vector<128x4xf32>
    %23 = arith.truncf %22 : vector<128x4xf32> to vector<128x4xbf16>
    %c0_7 = arith.constant 0 : index
    %c16 = arith.constant 16 : index
    %24 = vector.load %arg6[%c0_7, %c16] : memref<128x100xbf16, #tpu.memory_space<vmem>>, vector<128x4xbf16>
    tpu.vector_store %arg6[%c0_7, %c16], %23 {strides = array<i32>} : memref<128x100xbf16, #tpu.memory_space<vmem>>, vector<128x4xbf16>,
    %25 = vector.extract_strided_slice %4 {offsets = [1, 0, 0], sizes = [8, 16, 4], strides = [1, 1, 1]} : vector<12x20x4xf32> to vector<8x16x4xf32>
    %26 = vector.shape_cast %25 : vector<8x16x4xf32> to vector<128x4xf32>
    %27 = arith.truncf %26 : vector<128x4xf32> to vector<128x4xbf16>
    %c0_8 = arith.constant 0 : index
    %c20 = arith.constant 20 : index
    %28 = vector.load %arg6[%c0_8, %c20] : memref<128x100xbf16, #tpu.memory_space<vmem>>, vector<128x4xbf16>
    tpu.vector_store %arg6[%c0_8, %c20], %27 {strides = array<i32>} : memref<128x100xbf16, #tpu.memory_space<vmem>>, vector<128x4xbf16>,
    %29 = vector.extract_strided_slice %4 {offsets = [1, 1, 0], sizes = [8, 16, 4], strides = [1, 1, 1]} : vector<12x20x4xf32> to vector<8x16x4xf32>
    %30 = vector.shape_cast %29 : vector<8x16x4xf32> to vector<128x4xf32>
    %31 = arith.truncf %30 : vector<128x4xf32> to vector<128x4xbf16>
    %c0_9 = arith.constant 0 : index
    %c24 = arith.constant 24 : index
    %32 = vector.load %arg6[%c0_9, %c24] : memref<128x100xbf16, #tpu.memory_space<vmem>>, vector<128x4xbf16>
    tpu.vector_store %arg6[%c0_9, %c24], %31 {strides = array<i32>} : memref<128x100xbf16, #tpu.memory_space<vmem>>, vector<128x4xbf16>,
    %33 = vector.extract_strided_slice %4 {offsets = [1, 2, 0], sizes = [8, 16, 4], strides = [1, 1, 1]} : vector<12x20x4xf32> to vector<8x16x4xf32>
    %34 = vector.shape_cast %33 : vector<8x16x4xf32> to vector<128x4xf32>
    %35 = arith.truncf %34 : vector<128x4xf32> to vector<128x4xbf16>
    %c0_10 = arith.constant 0 : index
    %c28 = arith.constant 28 : index
    %36 = vector.load %arg6[%c0_10, %c28] : memref<128x100xbf16, #tpu.memory_space<vmem>>, vector<128x4xbf16>
    tpu.vector_store %arg6[%c0_10, %c28], %35 {strides = array<i32>} : memref<128x100xbf16, #tpu.memory_space<vmem>>, vector<128x4xbf16>,
    %37 = vector.extract_strided_slice %4 {offsets = [1, 3, 0], sizes = [8, 16, 4], strides = [1, 1, 1]} : vector<12x20x4xf32> to vector<8x16x4xf32>
    %38 = vector.shape_cast %37 : vector<8x16x4xf32> to vector<128x4xf32>
    %39 = arith.truncf %38 : vector<128x4xf32> to vector<128x4xbf16>
    %c0_11 = arith.constant 0 : index
    %c32 = arith.constant 32 : index
    %40 = vector.load %arg6[%c0_11, %c32] : memref<128x100xbf16, #tpu.memory_space<vmem>>, vector<128x4xbf16>
    tpu.vector_store %arg6[%c0_11, %c32], %39 {strides = array<i32>} : memref<128x100xbf16, #tpu.memory_space<vmem>>, vector<128x4xbf16>,
    %41 = vector.extract_strided_slice %4 {offsets = [1, 4, 0], sizes = [8, 16, 4], strides = [1, 1, 1]} : vector<12x20x4xf32> to vector<8x16x4xf32>
    %42 = vector.shape_cast %41 : vector<8x16x4xf32> to vector<128x4xf32>
    %43 = arith.truncf %42 : vector<128x4xf32> to vector<128x4xbf16>
    %c0_12 = arith.constant 0 : index
    %c36 = arith.constant 36 : index
    %44 = vector.load %arg6[%c0_12, %c36] : memref<128x100xbf16, #tpu.memory_space<vmem>>, vector<128x4xbf16>
    tpu.vector_store %arg6[%c0_12, %c36], %43 {strides = array<i32>} : memref<128x100xbf16, #tpu.memory_space<vmem>>, vector<128x4xbf16>,
    %45 = vector.extract_strided_slice %4 {offsets = [2, 0, 0], sizes = [8, 16, 4], strides = [1, 1, 1]} : vector<12x20x4xf32> to vector<8x16x4xf32>
    %46 = vector.shape_cast %45 : vector<8x16x4xf32> to vector<128x4xf32>
    %47 = arith.truncf %46 : vector<128x4xf32> to vector<128x4xbf16>
    %c0_13 = arith.constant 0 : index
    %c40 = arith.constant 40 : index
    %48 = vector.load %arg6[%c0_13, %c40] : memref<128x100xbf16, #tpu.memory_space<vmem>>, vector<128x4xbf16>
    tpu.vector_store %arg6[%c0_13, %c40], %47 {strides = array<i32>} : memref<128x100xbf16, #tpu.memory_space<vmem>>, vector<128x4xbf16>,
    %49 = vector.extract_strided_slice %4 {offsets = [2, 1, 0], sizes = [8, 16, 4], strides = [1, 1, 1]} : vector<12x20x4xf32> to vector<8x16x4xf32>
    %50 = vector.shape_cast %49 : vector<8x16x4xf32> to vector<128x4xf32>
    %51 = arith.truncf %50 : vector<128x4xf32> to vector<128x4xbf16>
    %c0_14 = arith.constant 0 : index
    %c44 = arith.constant 44 : index
    %52 = vector.load %arg6[%c0_14, %c44] : memref<128x100xbf16, #tpu.memory_space<vmem>>, vector<128x4xbf16>
    tpu.vector_store %arg6[%c0_14, %c44], %51 {strides = array<i32>} : memref<128x100xbf16, #tpu.memory_space<vmem>>, vector<128x4xbf16>,
    %53 = vector.extract_strided_slice %4 {offsets = [2, 2, 0], sizes = [8, 16, 4], strides = [1, 1, 1]} : vector<12x20x4xf32> to vector<8x16x4xf32>
    %54 = vector.shape_cast %53 : vector<8x16x4xf32> to vector<128x4xf32>
    %55 = arith.truncf %54 : vector<128x4xf32> to vector<128x4xbf16>
    %c0_15 = arith.constant 0 : index
    %c48 = arith.constant 48 : index
    %56 = vector.load %arg6[%c0_15, %c48] : memref<128x100xbf16, #tpu.memory_space<vmem>>, vector<128x4xbf16>
    tpu.vector_store %arg6[%c0_15, %c48], %55 {strides = array<i32>} : memref<128x100xbf16, #tpu.memory_space<vmem>>, vector<128x4xbf16>,
    %57 = vector.extract_strided_slice %4 {offsets = [2, 3, 0], sizes = [8, 16, 4], strides = [1, 1, 1]} : vector<12x20x4xf32> to vector<8x16x4xf32>
    %58 = vector.shape_cast %57 : vector<8x16x4xf32> to vector<128x4xf32>
    %59 = arith.truncf %58 : vector<128x4xf32> to vector<128x4xbf16>
    %c0_16 = arith.constant 0 : index
    %c52 = arith.constant 52 : index
    %60 = vector.load %arg6[%c0_16, %c52] : memref<128x100xbf16, #tpu.memory_space<vmem>>, vector<128x4xbf16>
    tpu.vector_store %arg6[%c0_16, %c52], %59 {strides = array<i32>} : memref<128x100xbf16, #tpu.memory_space<vmem>>, vector<128x4xbf16>,
    %61 = vector.extract_strided_slice %4 {offsets = [2, 4, 0], sizes = [8, 16, 4], strides = [1, 1, 1]} : vector<12x20x4xf32> to vector<8x16x4xf32>
    %62 = vector.shape_cast %61 : vector<8x16x4xf32> to vector<128x4xf32>
    %63 = arith.truncf %62 : vector<128x4xf32> to vector<128x4xbf16>
    %c0_17 = arith.constant 0 : index
    %c56 = arith.constant 56 : index
    %64 = vector.load %arg6[%c0_17, %c56] : memref<128x100xbf16, #tpu.memory_space<vmem>>, vector<128x4xbf16>
    tpu.vector_store %arg6[%c0_17, %c56], %63 {strides = array<i32>} : memref<128x100xbf16, #tpu.memory_space<vmem>>, vector<128x4xbf16>,
    %65 = vector.extract_strided_slice %4 {offsets = [3, 0, 0], sizes = [8, 16, 4], strides = [1, 1, 1]} : vector<12x20x4xf32> to vector<8x16x4xf32>
    %66 = vector.shape_cast %65 : vector<8x16x4xf32> to vector<128x4xf32>
    %67 = arith.truncf %66 : vector<128x4xf32> to vector<128x4xbf16>
    %c0_18 = arith.constant 0 : index
    %c60 = arith.constant 60 : index
    %68 = vector.load %arg6[%c0_18, %c60] : memref<128x100xbf16, #tpu.memory_space<vmem>>, vector<128x4xbf16>
    tpu.vector_store %arg6[%c0_18, %c60], %67 {strides = array<i32>} : memref<128x100xbf16, #tpu.memory_space<vmem>>, vector<128x4xbf16>,
    %69 = vector.extract_strided_slice %4 {offsets = [3, 1, 0], sizes = [8, 16, 4], strides = [1, 1, 1]} : vector<12x20x4xf32> to vector<8x16x4xf32>
    %70 = vector.shape_cast %69 : vector<8x16x4xf32> to vector<128x4xf32>
    %71 = arith.truncf %70 : vector<128x4xf32> to vector<128x4xbf16>
    %c0_19 = arith.constant 0 : index
    %c64 = arith.constant 64 : index
    %72 = vector.load %arg6[%c0_19, %c64] : memref<128x100xbf16, #tpu.memory_space<vmem>>, vector<128x4xbf16>
    tpu.vector_store %arg6[%c0_19, %c64], %71 {strides = array<i32>} : memref<128x100xbf16, #tpu.memory_space<vmem>>, vector<128x4xbf16>,
    %73 = vector.extract_strided_slice %4 {offsets = [3, 2, 0], sizes = [8, 16, 4], strides = [1, 1, 1]} : vector<12x20x4xf32> to vector<8x16x4xf32>
    %74 = vector.shape_cast %73 : vector<8x16x4xf32> to vector<128x4xf32>
    %75 = arith.truncf %74 : vector<128x4xf32> to vector<128x4xbf16>
    %c0_20 = arith.constant 0 : index
    %c68 = arith.constant 68 : index
    %76 = vector.load %arg6[%c0_20, %c68] : memref<128x100xbf16, #tpu.memory_space<vmem>>, vector<128x4xbf16>
    tpu.vector_store %arg6[%c0_20, %c68], %75 {strides = array<i32>} : memref<128x100xbf16, #tpu.memory_space<vmem>>, vector<128x4xbf16>,
    %77 = vector.extract_strided_slice %4 {offsets = [3, 3, 0], sizes = [8, 16, 4], strides = [1, 1, 1]} : vector<12x20x4xf32> to vector<8x16x4xf32>
    %78 = vector.shape_cast %77 : vector<8x16x4xf32> to vector<128x4xf32>
    %79 = arith.truncf %78 : vector<128x4xf32> to vector<128x4xbf16>
    %c0_21 = arith.constant 0 : index
    %c72 = arith.constant 72 : index
    %80 = vector.load %arg6[%c0_21, %c72] : memref<128x100xbf16, #tpu.memory_space<vmem>>, vector<128x4xbf16>
    tpu.vector_store %arg6[%c0_21, %c72], %79 {strides = array<i32>} : memref<128x100xbf16, #tpu.memory_space<vmem>>, vector<128x4xbf16>,
    %81 = vector.extract_strided_slice %4 {offsets = [3, 4, 0], sizes = [8, 16, 4], strides = [1, 1, 1]} : vector<12x20x4xf32> to vector<8x16x4xf32>
    %82 = vector.shape_cast %81 : vector<8x16x4xf32> to vector<128x4xf32>
    %83 = arith.truncf %82 : vector<128x4xf32> to vector<128x4xbf16>
    %c0_22 = arith.constant 0 : index
    %c76 = arith.constant 76 : index
    %84 = vector.load %arg6[%c0_22, %c76] : memref<128x100xbf16, #tpu.memory_space<vmem>>, vector<128x4xbf16>
    tpu.vector_store %arg6[%c0_22, %c76], %83 {strides = array<i32>} : memref<128x100xbf16, #tpu.memory_space<vmem>>, vector<128x4xbf16>,
    %85 = vector.extract_strided_slice %4 {offsets = [4, 0, 0], sizes = [8, 16, 4], strides = [1, 1, 1]} : vector<12x20x4xf32> to vector<8x16x4xf32>
    %86 = vector.shape_cast %85 : vector<8x16x4xf32> to vector<128x4xf32>
    %87 = arith.truncf %86 : vector<128x4xf32> to vector<128x4xbf16>
    %c0_23 = arith.constant 0 : index
    %c80 = arith.constant 80 : index
    %88 = vector.load %arg6[%c0_23, %c80] : memref<128x100xbf16, #tpu.memory_space<vmem>>, vector<128x4xbf16>
    tpu.vector_store %arg6[%c0_23, %c80], %87 {strides = array<i32>} : memref<128x100xbf16, #tpu.memory_space<vmem>>, vector<128x4xbf16>,
    %89 = vector.extract_strided_slice %4 {offsets = [4, 1, 0], sizes = [8, 16, 4], strides = [1, 1, 1]} : vector<12x20x4xf32> to vector<8x16x4xf32>
    %90 = vector.shape_cast %89 : vector<8x16x4xf32> to vector<128x4xf32>
    %91 = arith.truncf %90 : vector<128x4xf32> to vector<128x4xbf16>
    %c0_24 = arith.constant 0 : index
    %c84 = arith.constant 84 : index
    %92 = vector.load %arg6[%c0_24, %c84] : memref<128x100xbf16, #tpu.memory_space<vmem>>, vector<128x4xbf16>
    tpu.vector_store %arg6[%c0_24, %c84], %91 {strides = array<i32>} : memref<128x100xbf16, #tpu.memory_space<vmem>>, vector<128x4xbf16>,
    %93 = vector.extract_strided_slice %4 {offsets = [4, 2, 0], sizes = [8, 16, 4], strides = [1, 1, 1]} : vector<12x20x4xf32> to vector<8x16x4xf32>
    %94 = vector.shape_cast %93 : vector<8x16x4xf32> to vector<128x4xf32>
    %95 = arith.truncf %94 : vector<128x4xf32> to vector<128x4xbf16>
    %c0_25 = arith.constant 0 : index
    %c88 = arith.constant 88 : index
    %96 = vector.load %arg6[%c0_25, %c88] : memref<128x100xbf16, #tpu.memory_space<vmem>>, vector<128x4xbf16>
    tpu.vector_store %arg6[%c0_25, %c88], %95 {strides = array<i32>} : memref<128x100xbf16, #tpu.memory_space<vmem>>, vector<128x4xbf16>,
    %97 = vector.extract_strided_slice %4 {offsets = [4, 3, 0], sizes = [8, 16, 4], strides = [1, 1, 1]} : vector<12x20x4xf32> to vector<8x16x4xf32>
    %98 = vector.shape_cast %97 : vector<8x16x4xf32> to vector<128x4xf32>
    %99 = arith.truncf %98 : vector<128x4xf32> to vector<128x4xbf16>
    %c0_26 = arith.constant 0 : index
    %c92 = arith.constant 92 : index
    %100 = vector.load %arg6[%c0_26, %c92] : memref<128x100xbf16, #tpu.memory_space<vmem>>, vector<128x4xbf16>
    tpu.vector_store %arg6[%c0_26, %c92], %99 {strides = array<i32>} : memref<128x100xbf16, #tpu.memory_space<vmem>>, vector<128x4xbf16>,
    %101 = vector.extract_strided_slice %4 {offsets = [4, 4, 0], sizes = [8, 16, 4], strides = [1, 1, 1]} : vector<12x20x4xf32> to vector<8x16x4xf32>
    %102 = vector.shape_cast %101 : vector<8x16x4xf32> to vector<128x4xf32>
    %103 = arith.truncf %102 : vector<128x4xf32> to vector<128x4xbf16>
    %c0_27 = arith.constant 0 : index
    %c96 = arith.constant 96 : index
    %104 = vector.load %arg6[%c0_27, %c96] : memref<128x100xbf16, #tpu.memory_space<vmem>>, vector<128x4xbf16>
    tpu.vector_store %arg6[%c0_27, %c96], %103 {strides = array<i32>} : memref<128x100xbf16, #tpu.memory_space<vmem>>, vector<128x4xbf16>,
    %c0_28 = arith.constant 0 : index
    %c0_29 = arith.constant 0 : index
    %105 = vector.load %arg6[%c0_28, %c0_29] : memref<128x100xbf16, #tpu.memory_space<vmem>>, vector<128x100xbf16>
    %c0_30 = arith.constant 0 : index
    %c0_31 = arith.constant 0 : index
    %106 = vector.load %arg3[%c0_30, %c0_31] : memref<100x8xbf16, #tpu.memory_space<vmem>>, vector<100x8xbf16>
    %cst = arith.constant dense<0.000000e+00> : vector<128x8xf32>
    %107 = tpu.matmul %105, %106, %cst {dimension_numbers = #tpu.dot_dimension_numbers<[1], [0], [0], [1], [0, 0, 1, 1], [], []>} : vector<128x100xbf16>, vector<100x8xbf16>, vector<128x8xf32> -> vector<128x8xf32>
    %c0_32 = arith.constant 0 : index
    %c0_33 = arith.constant 0 : index
    %108 = vector.load %arg4[%c0_32, %c0_33] : memref<1x8xf32, #tpu.memory_space<vmem>>, vector<1x8xf32>
    %109 = vector.shape_cast %108 : vector<1x8xf32> to vector<8xf32>
    %110 = vector.shape_cast %109 : vector<8xf32> to vector<1x8xf32>
    %111 = vector.broadcast %110 : vector<1x8xf32> to vector<128x8xf32>
    %112 = arith.addf %107, %111 : vector<128x8xf32>
    %cst_34 = arith.constant 0.000000e+00 : f32
    %113 = vector.broadcast %cst_34 : f32 to vector<128x8xf32>
    %114 = arith.maximumf %112, %113 : vector<128x8xf32>
    %115 = vector.shape_cast %114 : vector<128x8xf32> to vector<8x16x8xf32>
    %c0_35 = arith.constant 0 : index
    %c0_36 = arith.constant 0 : index
    %c0_37 = arith.constant 0 : index
    %c0_38 = arith.constant 0 : index
    %116 = vector.load %arg5[%c0_35, %c0_36, %c0_37, %c0_38] : memref<1x8x16x8xf32, #tpu.memory_space<vmem>>, vector<1x8x16x8xf32>
    %117 = vector.shape_cast %116 : vector<1x8x16x8xf32> to vector<8x16x8xf32>
    %118 = vector.shape_cast %115 : vector<8x16x8xf32> to vector<1x8x16x8xf32>
    tpu.vector_store %arg5[%c0_35, %c0_36, %c0_37, %c0_38], %118 {strides = array<i32>} : memref<1x8x16x8xf32, #tpu.memory_space<vmem>>, vector<1x8x16x8xf32>,
    return
  }
  func.func @transform_0(%arg0: i32, %arg1: i32) -> (i32, i32, i32, i32) {
    %c0_i32 = arith.constant 0 : i32
    %c0_i32_0 = arith.constant 0 : i32
    %c0_i32_1 = arith.constant 0 : i32
    %c0_i32_2 = arith.constant 0 : i32
    return %arg0, %c0_i32, %c0_i32_0, %c0_i32_1 : i32, i32, i32, i32
  }
  func.func @transform_1(%arg0: i32, %arg1: i32) -> (i32, i32) {
    %c0_i32 = arith.constant 0 : i32
    %c0_i32_0 = arith.constant 0 : i32
    %c0_i32_1 = arith.constant 0 : i32
    return %c0_i32, %c0_i32_0 : i32, i32
  }
  func.func @transform_2(%arg0: i32, %arg1: i32) -> (i32, i32) {
    %c0_i32 = arith.constant 0 : i32
    %c0_i32_0 = arith.constant 0 : i32
    %c0_i32_1 = arith.constant 0 : i32
    return %c0_i32, %c0_i32_0 : i32, i32
  }
  func.func @transform_3(%arg0: i32, %arg1: i32) -> (i32, i32, i32, i32) {
    %c0_i32 = arith.constant 0 : i32
    %c0_i32_0 = arith.constant 0 : i32
    %c0_i32_1 = arith.constant 0 : i32
    return %arg0, %arg1, %c0_i32, %c0_i32_0 : i32, i32, i32, i32
  }
}

module attributes {stable_mosaic.version = 11 : i64} {
  func.func @_msrb_stage2_kernel(%arg0: i32, %arg1: i32, %arg2: memref<1x20x20x8xf32, #tpu.memory_space<vmem>>, %arg3: memref<200x16xbf16, #tpu.memory_space<vmem>>, %arg4: memref<1x16xf32, #tpu.memory_space<vmem>>, %arg5: memref<16x4xbf16, #tpu.memory_space<vmem>>, %arg6: memref<1x4xf32, #tpu.memory_space<vmem>>, %arg7: memref<1x8x16x4xf32, #tpu.memory_space<vmem>>, %arg8: memref<1x8x16x4xf32, #tpu.memory_space<vmem>>, %arg9: memref<128x200xbf16, #tpu.memory_space<vmem>>) attributes {dimension_semantics = [#tpu.dimension_semantics<parallel>, #tpu.dimension_semantics<parallel>], iteration_bounds = array<i64: 2, 2>, scalar_prefetch = 0 : i64, scratch_operands = 1 : i64, tpu.core_type = #tpu.core_type<tc>, window_params = [{transform_indices = @transform_0, window_bounds = array<i64: 1, 20, 20, 8>}, {pipeline_mode = #tpu.pipeline_mode<synchronous>, transform_indices = @transform_1, window_bounds = array<i64: 200, 16>}, {pipeline_mode = #tpu.pipeline_mode<synchronous>, transform_indices = @transform_2, window_bounds = array<i64: 1, 16>}, {pipeline_mode = #tpu.pipeline_mode<synchronous>, transform_indices = @transform_3, window_bounds = array<i64: 16, 4>}, {pipeline_mode = #tpu.pipeline_mode<synchronous>, transform_indices = @transform_4, window_bounds = array<i64: 1, 4>}, {transform_indices = @transform_5, window_bounds = array<i64: 1, 8, 16, 4>}, {transform_indices = @transform_6, window_bounds = array<i64: 1, 8, 16, 4>}]} {
    %c8_i32 = arith.constant 8 : i32
    %0 = arith.muli %arg1, %c8_i32 : i32
    %1 = tpu.assume_multiple %0, 8 : i32
    %c0 = arith.constant 0 : index
    %2 = arith.index_cast %1 : i32 to index
    %c0_0 = arith.constant 0 : index
    %c0_1 = arith.constant 0 : index
    %3 = vector.load %arg2[%c0, %2, %c0_0, %c0_1] : memref<1x20x20x8xf32, #tpu.memory_space<vmem>>, vector<1x12x20x8xf32>
    %4 = vector.shape_cast %3 : vector<1x12x20x8xf32> to vector<12x20x8xf32>
    %5 = vector.extract_strided_slice %4 {offsets = [0, 0, 0], sizes = [8, 16, 8], strides = [1, 1, 1]} : vector<12x20x8xf32> to vector<8x16x8xf32>
    %6 = vector.shape_cast %5 : vector<8x16x8xf32> to vector<128x8xf32>
    %7 = arith.truncf %6 : vector<128x8xf32> to vector<128x8xbf16>
    %c0_2 = arith.constant 0 : index
    %c0_3 = arith.constant 0 : index
    %8 = vector.load %arg9[%c0_2, %c0_3] : memref<128x200xbf16, #tpu.memory_space<vmem>>, vector<128x8xbf16>
    tpu.vector_store %arg9[%c0_2, %c0_3], %7 {strides = array<i32>} : memref<128x200xbf16, #tpu.memory_space<vmem>>, vector<128x8xbf16>,
    %9 = vector.extract_strided_slice %4 {offsets = [0, 1, 0], sizes = [8, 16, 8], strides = [1, 1, 1]} : vector<12x20x8xf32> to vector<8x16x8xf32>
    %10 = vector.shape_cast %9 : vector<8x16x8xf32> to vector<128x8xf32>
    %11 = arith.truncf %10 : vector<128x8xf32> to vector<128x8xbf16>
    %c0_4 = arith.constant 0 : index
    %c8 = arith.constant 8 : index
    %12 = vector.load %arg9[%c0_4, %c8] : memref<128x200xbf16, #tpu.memory_space<vmem>>, vector<128x8xbf16>
    tpu.vector_store %arg9[%c0_4, %c8], %11 {strides = array<i32>} : memref<128x200xbf16, #tpu.memory_space<vmem>>, vector<128x8xbf16>,
    %13 = vector.extract_strided_slice %4 {offsets = [0, 2, 0], sizes = [8, 16, 8], strides = [1, 1, 1]} : vector<12x20x8xf32> to vector<8x16x8xf32>
    %14 = vector.shape_cast %13 : vector<8x16x8xf32> to vector<128x8xf32>
    %15 = arith.truncf %14 : vector<128x8xf32> to vector<128x8xbf16>
    %c0_5 = arith.constant 0 : index
    %c16 = arith.constant 16 : index
    %16 = vector.load %arg9[%c0_5, %c16] : memref<128x200xbf16, #tpu.memory_space<vmem>>, vector<128x8xbf16>
    tpu.vector_store %arg9[%c0_5, %c16], %15 {strides = array<i32>} : memref<128x200xbf16, #tpu.memory_space<vmem>>, vector<128x8xbf16>,
    %17 = vector.extract_strided_slice %4 {offsets = [0, 3, 0], sizes = [8, 16, 8], strides = [1, 1, 1]} : vector<12x20x8xf32> to vector<8x16x8xf32>
    %18 = vector.shape_cast %17 : vector<8x16x8xf32> to vector<128x8xf32>
    %19 = arith.truncf %18 : vector<128x8xf32> to vector<128x8xbf16>
    %c0_6 = arith.constant 0 : index
    %c24 = arith.constant 24 : index
    %20 = vector.load %arg9[%c0_6, %c24] : memref<128x200xbf16, #tpu.memory_space<vmem>>, vector<128x8xbf16>
    tpu.vector_store %arg9[%c0_6, %c24], %19 {strides = array<i32>} : memref<128x200xbf16, #tpu.memory_space<vmem>>, vector<128x8xbf16>,
    %21 = vector.extract_strided_slice %4 {offsets = [0, 4, 0], sizes = [8, 16, 8], strides = [1, 1, 1]} : vector<12x20x8xf32> to vector<8x16x8xf32>
    %22 = vector.shape_cast %21 : vector<8x16x8xf32> to vector<128x8xf32>
    %23 = arith.truncf %22 : vector<128x8xf32> to vector<128x8xbf16>
    %c0_7 = arith.constant 0 : index
    %c32 = arith.constant 32 : index
    %24 = vector.load %arg9[%c0_7, %c32] : memref<128x200xbf16, #tpu.memory_space<vmem>>, vector<128x8xbf16>
    tpu.vector_store %arg9[%c0_7, %c32], %23 {strides = array<i32>} : memref<128x200xbf16, #tpu.memory_space<vmem>>, vector<128x8xbf16>,
    %25 = vector.extract_strided_slice %4 {offsets = [1, 0, 0], sizes = [8, 16, 8], strides = [1, 1, 1]} : vector<12x20x8xf32> to vector<8x16x8xf32>
    %26 = vector.shape_cast %25 : vector<8x16x8xf32> to vector<128x8xf32>
    %27 = arith.truncf %26 : vector<128x8xf32> to vector<128x8xbf16>
    %c0_8 = arith.constant 0 : index
    %c40 = arith.constant 40 : index
    %28 = vector.load %arg9[%c0_8, %c40] : memref<128x200xbf16, #tpu.memory_space<vmem>>, vector<128x8xbf16>
    tpu.vector_store %arg9[%c0_8, %c40], %27 {strides = array<i32>} : memref<128x200xbf16, #tpu.memory_space<vmem>>, vector<128x8xbf16>,
    %29 = vector.extract_strided_slice %4 {offsets = [1, 1, 0], sizes = [8, 16, 8], strides = [1, 1, 1]} : vector<12x20x8xf32> to vector<8x16x8xf32>
    %30 = vector.shape_cast %29 : vector<8x16x8xf32> to vector<128x8xf32>
    %31 = arith.truncf %30 : vector<128x8xf32> to vector<128x8xbf16>
    %c0_9 = arith.constant 0 : index
    %c48 = arith.constant 48 : index
    %32 = vector.load %arg9[%c0_9, %c48] : memref<128x200xbf16, #tpu.memory_space<vmem>>, vector<128x8xbf16>
    tpu.vector_store %arg9[%c0_9, %c48], %31 {strides = array<i32>} : memref<128x200xbf16, #tpu.memory_space<vmem>>, vector<128x8xbf16>,
    %33 = vector.extract_strided_slice %4 {offsets = [1, 2, 0], sizes = [8, 16, 8], strides = [1, 1, 1]} : vector<12x20x8xf32> to vector<8x16x8xf32>
    %34 = vector.shape_cast %33 : vector<8x16x8xf32> to vector<128x8xf32>
    %35 = arith.truncf %34 : vector<128x8xf32> to vector<128x8xbf16>
    %c0_10 = arith.constant 0 : index
    %c56 = arith.constant 56 : index
    %36 = vector.load %arg9[%c0_10, %c56] : memref<128x200xbf16, #tpu.memory_space<vmem>>, vector<128x8xbf16>
    tpu.vector_store %arg9[%c0_10, %c56], %35 {strides = array<i32>} : memref<128x200xbf16, #tpu.memory_space<vmem>>, vector<128x8xbf16>,
    %37 = vector.extract_strided_slice %4 {offsets = [1, 3, 0], sizes = [8, 16, 8], strides = [1, 1, 1]} : vector<12x20x8xf32> to vector<8x16x8xf32>
    %38 = vector.shape_cast %37 : vector<8x16x8xf32> to vector<128x8xf32>
    %39 = arith.truncf %38 : vector<128x8xf32> to vector<128x8xbf16>
    %c0_11 = arith.constant 0 : index
    %c64 = arith.constant 64 : index
    %40 = vector.load %arg9[%c0_11, %c64] : memref<128x200xbf16, #tpu.memory_space<vmem>>, vector<128x8xbf16>
    tpu.vector_store %arg9[%c0_11, %c64], %39 {strides = array<i32>} : memref<128x200xbf16, #tpu.memory_space<vmem>>, vector<128x8xbf16>,
    %41 = vector.extract_strided_slice %4 {offsets = [1, 4, 0], sizes = [8, 16, 8], strides = [1, 1, 1]} : vector<12x20x8xf32> to vector<8x16x8xf32>
    %42 = vector.shape_cast %41 : vector<8x16x8xf32> to vector<128x8xf32>
    %43 = arith.truncf %42 : vector<128x8xf32> to vector<128x8xbf16>
    %c0_12 = arith.constant 0 : index
    %c72 = arith.constant 72 : index
    %44 = vector.load %arg9[%c0_12, %c72] : memref<128x200xbf16, #tpu.memory_space<vmem>>, vector<128x8xbf16>
    tpu.vector_store %arg9[%c0_12, %c72], %43 {strides = array<i32>} : memref<128x200xbf16, #tpu.memory_space<vmem>>, vector<128x8xbf16>,
    %45 = vector.extract_strided_slice %4 {offsets = [2, 0, 0], sizes = [8, 16, 8], strides = [1, 1, 1]} : vector<12x20x8xf32> to vector<8x16x8xf32>
    %46 = vector.shape_cast %45 : vector<8x16x8xf32> to vector<128x8xf32>
    %47 = arith.truncf %46 : vector<128x8xf32> to vector<128x8xbf16>
    %c0_13 = arith.constant 0 : index
    %c80 = arith.constant 80 : index
    %48 = vector.load %arg9[%c0_13, %c80] : memref<128x200xbf16, #tpu.memory_space<vmem>>, vector<128x8xbf16>
    tpu.vector_store %arg9[%c0_13, %c80], %47 {strides = array<i32>} : memref<128x200xbf16, #tpu.memory_space<vmem>>, vector<128x8xbf16>,
    %49 = vector.extract_strided_slice %4 {offsets = [2, 1, 0], sizes = [8, 16, 8], strides = [1, 1, 1]} : vector<12x20x8xf32> to vector<8x16x8xf32>
    %50 = vector.shape_cast %49 : vector<8x16x8xf32> to vector<128x8xf32>
    %51 = arith.truncf %50 : vector<128x8xf32> to vector<128x8xbf16>
    %c0_14 = arith.constant 0 : index
    %c88 = arith.constant 88 : index
    %52 = vector.load %arg9[%c0_14, %c88] : memref<128x200xbf16, #tpu.memory_space<vmem>>, vector<128x8xbf16>
    tpu.vector_store %arg9[%c0_14, %c88], %51 {strides = array<i32>} : memref<128x200xbf16, #tpu.memory_space<vmem>>, vector<128x8xbf16>,
    %53 = vector.extract_strided_slice %4 {offsets = [2, 2, 0], sizes = [8, 16, 8], strides = [1, 1, 1]} : vector<12x20x8xf32> to vector<8x16x8xf32>
    %54 = vector.shape_cast %53 : vector<8x16x8xf32> to vector<128x8xf32>
    %55 = arith.truncf %54 : vector<128x8xf32> to vector<128x8xbf16>
    %c0_15 = arith.constant 0 : index
    %c96 = arith.constant 96 : index
    %56 = vector.load %arg9[%c0_15, %c96] : memref<128x200xbf16, #tpu.memory_space<vmem>>, vector<128x8xbf16>
    tpu.vector_store %arg9[%c0_15, %c96], %55 {strides = array<i32>} : memref<128x200xbf16, #tpu.memory_space<vmem>>, vector<128x8xbf16>,
    %57 = vector.extract_strided_slice %4 {offsets = [2, 3, 0], sizes = [8, 16, 8], strides = [1, 1, 1]} : vector<12x20x8xf32> to vector<8x16x8xf32>
    %58 = vector.shape_cast %57 : vector<8x16x8xf32> to vector<128x8xf32>
    %59 = arith.truncf %58 : vector<128x8xf32> to vector<128x8xbf16>
    %c0_16 = arith.constant 0 : index
    %c104 = arith.constant 104 : index
    %60 = vector.load %arg9[%c0_16, %c104] : memref<128x200xbf16, #tpu.memory_space<vmem>>, vector<128x8xbf16>
    tpu.vector_store %arg9[%c0_16, %c104], %59 {strides = array<i32>} : memref<128x200xbf16, #tpu.memory_space<vmem>>, vector<128x8xbf16>,
    %61 = vector.extract_strided_slice %4 {offsets = [2, 4, 0], sizes = [8, 16, 8], strides = [1, 1, 1]} : vector<12x20x8xf32> to vector<8x16x8xf32>
    %62 = vector.shape_cast %61 : vector<8x16x8xf32> to vector<128x8xf32>
    %63 = arith.truncf %62 : vector<128x8xf32> to vector<128x8xbf16>
    %c0_17 = arith.constant 0 : index
    %c112 = arith.constant 112 : index
    %64 = vector.load %arg9[%c0_17, %c112] : memref<128x200xbf16, #tpu.memory_space<vmem>>, vector<128x8xbf16>
    tpu.vector_store %arg9[%c0_17, %c112], %63 {strides = array<i32>} : memref<128x200xbf16, #tpu.memory_space<vmem>>, vector<128x8xbf16>,
    %65 = vector.extract_strided_slice %4 {offsets = [3, 0, 0], sizes = [8, 16, 8], strides = [1, 1, 1]} : vector<12x20x8xf32> to vector<8x16x8xf32>
    %66 = vector.shape_cast %65 : vector<8x16x8xf32> to vector<128x8xf32>
    %67 = arith.truncf %66 : vector<128x8xf32> to vector<128x8xbf16>
    %c0_18 = arith.constant 0 : index
    %c120 = arith.constant 120 : index
    %68 = vector.load %arg9[%c0_18, %c120] : memref<128x200xbf16, #tpu.memory_space<vmem>>, vector<128x8xbf16>
    tpu.vector_store %arg9[%c0_18, %c120], %67 {strides = array<i32>} : memref<128x200xbf16, #tpu.memory_space<vmem>>, vector<128x8xbf16>,
    %69 = vector.extract_strided_slice %4 {offsets = [3, 1, 0], sizes = [8, 16, 8], strides = [1, 1, 1]} : vector<12x20x8xf32> to vector<8x16x8xf32>
    %70 = vector.shape_cast %69 : vector<8x16x8xf32> to vector<128x8xf32>
    %71 = arith.truncf %70 : vector<128x8xf32> to vector<128x8xbf16>
    %c0_19 = arith.constant 0 : index
    %c128 = arith.constant 128 : index
    %72 = vector.load %arg9[%c0_19, %c128] : memref<128x200xbf16, #tpu.memory_space<vmem>>, vector<128x8xbf16>
    tpu.vector_store %arg9[%c0_19, %c128], %71 {strides = array<i32>} : memref<128x200xbf16, #tpu.memory_space<vmem>>, vector<128x8xbf16>,
    %73 = vector.extract_strided_slice %4 {offsets = [3, 2, 0], sizes = [8, 16, 8], strides = [1, 1, 1]} : vector<12x20x8xf32> to vector<8x16x8xf32>
    %74 = vector.shape_cast %73 : vector<8x16x8xf32> to vector<128x8xf32>
    %75 = arith.truncf %74 : vector<128x8xf32> to vector<128x8xbf16>
    %c0_20 = arith.constant 0 : index
    %c136 = arith.constant 136 : index
    %76 = vector.load %arg9[%c0_20, %c136] : memref<128x200xbf16, #tpu.memory_space<vmem>>, vector<128x8xbf16>
    tpu.vector_store %arg9[%c0_20, %c136], %75 {strides = array<i32>} : memref<128x200xbf16, #tpu.memory_space<vmem>>, vector<128x8xbf16>,
    %77 = vector.extract_strided_slice %4 {offsets = [3, 3, 0], sizes = [8, 16, 8], strides = [1, 1, 1]} : vector<12x20x8xf32> to vector<8x16x8xf32>
    %78 = vector.shape_cast %77 : vector<8x16x8xf32> to vector<128x8xf32>
    %79 = arith.truncf %78 : vector<128x8xf32> to vector<128x8xbf16>
    %c0_21 = arith.constant 0 : index
    %c144 = arith.constant 144 : index
    %80 = vector.load %arg9[%c0_21, %c144] : memref<128x200xbf16, #tpu.memory_space<vmem>>, vector<128x8xbf16>
    tpu.vector_store %arg9[%c0_21, %c144], %79 {strides = array<i32>} : memref<128x200xbf16, #tpu.memory_space<vmem>>, vector<128x8xbf16>,
    %81 = vector.extract_strided_slice %4 {offsets = [3, 4, 0], sizes = [8, 16, 8], strides = [1, 1, 1]} : vector<12x20x8xf32> to vector<8x16x8xf32>
    %82 = vector.shape_cast %81 : vector<8x16x8xf32> to vector<128x8xf32>
    %83 = arith.truncf %82 : vector<128x8xf32> to vector<128x8xbf16>
    %c0_22 = arith.constant 0 : index
    %c152 = arith.constant 152 : index
    %84 = vector.load %arg9[%c0_22, %c152] : memref<128x200xbf16, #tpu.memory_space<vmem>>, vector<128x8xbf16>
    tpu.vector_store %arg9[%c0_22, %c152], %83 {strides = array<i32>} : memref<128x200xbf16, #tpu.memory_space<vmem>>, vector<128x8xbf16>,
    %85 = vector.extract_strided_slice %4 {offsets = [4, 0, 0], sizes = [8, 16, 8], strides = [1, 1, 1]} : vector<12x20x8xf32> to vector<8x16x8xf32>
    %86 = vector.shape_cast %85 : vector<8x16x8xf32> to vector<128x8xf32>
    %87 = arith.truncf %86 : vector<128x8xf32> to vector<128x8xbf16>
    %c0_23 = arith.constant 0 : index
    %c160 = arith.constant 160 : index
    %88 = vector.load %arg9[%c0_23, %c160] : memref<128x200xbf16, #tpu.memory_space<vmem>>, vector<128x8xbf16>
    tpu.vector_store %arg9[%c0_23, %c160], %87 {strides = array<i32>} : memref<128x200xbf16, #tpu.memory_space<vmem>>, vector<128x8xbf16>,
    %89 = vector.extract_strided_slice %4 {offsets = [4, 1, 0], sizes = [8, 16, 8], strides = [1, 1, 1]} : vector<12x20x8xf32> to vector<8x16x8xf32>
    %90 = vector.shape_cast %89 : vector<8x16x8xf32> to vector<128x8xf32>
    %91 = arith.truncf %90 : vector<128x8xf32> to vector<128x8xbf16>
    %c0_24 = arith.constant 0 : index
    %c168 = arith.constant 168 : index
    %92 = vector.load %arg9[%c0_24, %c168] : memref<128x200xbf16, #tpu.memory_space<vmem>>, vector<128x8xbf16>
    tpu.vector_store %arg9[%c0_24, %c168], %91 {strides = array<i32>} : memref<128x200xbf16, #tpu.memory_space<vmem>>, vector<128x8xbf16>,
    %93 = vector.extract_strided_slice %4 {offsets = [4, 2, 0], sizes = [8, 16, 8], strides = [1, 1, 1]} : vector<12x20x8xf32> to vector<8x16x8xf32>
    %94 = vector.shape_cast %93 : vector<8x16x8xf32> to vector<128x8xf32>
    %95 = arith.truncf %94 : vector<128x8xf32> to vector<128x8xbf16>
    %c0_25 = arith.constant 0 : index
    %c176 = arith.constant 176 : index
    %96 = vector.load %arg9[%c0_25, %c176] : memref<128x200xbf16, #tpu.memory_space<vmem>>, vector<128x8xbf16>
    tpu.vector_store %arg9[%c0_25, %c176], %95 {strides = array<i32>} : memref<128x200xbf16, #tpu.memory_space<vmem>>, vector<128x8xbf16>,
    %97 = vector.extract_strided_slice %4 {offsets = [4, 3, 0], sizes = [8, 16, 8], strides = [1, 1, 1]} : vector<12x20x8xf32> to vector<8x16x8xf32>
    %98 = vector.shape_cast %97 : vector<8x16x8xf32> to vector<128x8xf32>
    %99 = arith.truncf %98 : vector<128x8xf32> to vector<128x8xbf16>
    %c0_26 = arith.constant 0 : index
    %c184 = arith.constant 184 : index
    %100 = vector.load %arg9[%c0_26, %c184] : memref<128x200xbf16, #tpu.memory_space<vmem>>, vector<128x8xbf16>
    tpu.vector_store %arg9[%c0_26, %c184], %99 {strides = array<i32>} : memref<128x200xbf16, #tpu.memory_space<vmem>>, vector<128x8xbf16>,
    %101 = vector.extract_strided_slice %4 {offsets = [4, 4, 0], sizes = [8, 16, 8], strides = [1, 1, 1]} : vector<12x20x8xf32> to vector<8x16x8xf32>
    %102 = vector.shape_cast %101 : vector<8x16x8xf32> to vector<128x8xf32>
    %103 = arith.truncf %102 : vector<128x8xf32> to vector<128x8xbf16>
    %c0_27 = arith.constant 0 : index
    %c192 = arith.constant 192 : index
    %104 = vector.load %arg9[%c0_27, %c192] : memref<128x200xbf16, #tpu.memory_space<vmem>>, vector<128x8xbf16>
    tpu.vector_store %arg9[%c0_27, %c192], %103 {strides = array<i32>} : memref<128x200xbf16, #tpu.memory_space<vmem>>, vector<128x8xbf16>,
    %c0_28 = arith.constant 0 : index
    %c0_29 = arith.constant 0 : index
    %105 = vector.load %arg9[%c0_28, %c0_29] : memref<128x200xbf16, #tpu.memory_space<vmem>>, vector<128x200xbf16>
    %c0_30 = arith.constant 0 : index
    %c0_31 = arith.constant 0 : index
    %106 = vector.load %arg3[%c0_30, %c0_31] : memref<200x16xbf16, #tpu.memory_space<vmem>>, vector<200x16xbf16>
    %cst = arith.constant dense<0.000000e+00> : vector<128x16xf32>
    %107 = tpu.matmul %105, %106, %cst {dimension_numbers = #tpu.dot_dimension_numbers<[1], [0], [0], [1], [0, 0, 1, 1], [], []>} : vector<128x200xbf16>, vector<200x16xbf16>, vector<128x16xf32> -> vector<128x16xf32>
    %c0_32 = arith.constant 0 : index
    %c0_33 = arith.constant 0 : index
    %108 = vector.load %arg4[%c0_32, %c0_33] : memref<1x16xf32, #tpu.memory_space<vmem>>, vector<1x16xf32>
    %109 = vector.shape_cast %108 : vector<1x16xf32> to vector<16xf32>
    %110 = vector.shape_cast %109 : vector<16xf32> to vector<1x16xf32>
    %111 = vector.broadcast %110 : vector<1x16xf32> to vector<128x16xf32>
    %112 = arith.addf %107, %111 : vector<128x16xf32>
    %cst_34 = arith.constant 0.000000e+00 : f32
    %113 = vector.broadcast %cst_34 : f32 to vector<128x16xf32>
    %114 = arith.maximumf %112, %113 : vector<128x16xf32>
    %115 = arith.truncf %114 : vector<128x16xf32> to vector<128x16xbf16>
    %c0_35 = arith.constant 0 : index
    %c0_36 = arith.constant 0 : index
    %116 = vector.load %arg5[%c0_35, %c0_36] : memref<16x4xbf16, #tpu.memory_space<vmem>>, vector<16x4xbf16>
    %cst_37 = arith.constant dense<0.000000e+00> : vector<128x4xf32>
    %117 = tpu.matmul %115, %116, %cst_37 {dimension_numbers = #tpu.dot_dimension_numbers<[1], [0], [0], [1], [0, 0, 1, 1], [], []>} : vector<128x16xbf16>, vector<16x4xbf16>, vector<128x4xf32> -> vector<128x4xf32>
    %c0_38 = arith.constant 0 : index
    %c0_39 = arith.constant 0 : index
    %118 = vector.load %arg6[%c0_38, %c0_39] : memref<1x4xf32, #tpu.memory_space<vmem>>, vector<1x4xf32>
    %119 = vector.shape_cast %118 : vector<1x4xf32> to vector<4xf32>
    %120 = vector.shape_cast %119 : vector<4xf32> to vector<1x4xf32>
    %121 = vector.broadcast %120 : vector<1x4xf32> to vector<128x4xf32>
    %122 = arith.addf %117, %121 : vector<128x4xf32>
    %c0_40 = arith.constant 0 : index
    %c0_41 = arith.constant 0 : index
    %c0_42 = arith.constant 0 : index
    %c0_43 = arith.constant 0 : index
    %123 = vector.load %arg7[%c0_40, %c0_41, %c0_42, %c0_43] : memref<1x8x16x4xf32, #tpu.memory_space<vmem>>, vector<1x8x16x4xf32>
    %124 = vector.shape_cast %123 : vector<1x8x16x4xf32> to vector<8x16x4xf32>
    %125 = vector.shape_cast %124 : vector<8x16x4xf32> to vector<128x4xf32>
    %126 = arith.addf %122, %125 : vector<128x4xf32>
    %127 = vector.shape_cast %126 : vector<128x4xf32> to vector<8x16x4xf32>
    %c0_44 = arith.constant 0 : index
    %c0_45 = arith.constant 0 : index
    %c0_46 = arith.constant 0 : index
    %c0_47 = arith.constant 0 : index
    %128 = vector.load %arg8[%c0_44, %c0_45, %c0_46, %c0_47] : memref<1x8x16x4xf32, #tpu.memory_space<vmem>>, vector<1x8x16x4xf32>
    %129 = vector.shape_cast %128 : vector<1x8x16x4xf32> to vector<8x16x4xf32>
    %130 = vector.shape_cast %127 : vector<8x16x4xf32> to vector<1x8x16x4xf32>
    tpu.vector_store %arg8[%c0_44, %c0_45, %c0_46, %c0_47], %130 {strides = array<i32>} : memref<1x8x16x4xf32, #tpu.memory_space<vmem>>, vector<1x8x16x4xf32>,
    return
  }
  func.func @transform_0(%arg0: i32, %arg1: i32) -> (i32, i32, i32, i32) {
    %c0_i32 = arith.constant 0 : i32
    %c0_i32_0 = arith.constant 0 : i32
    %c0_i32_1 = arith.constant 0 : i32
    %c0_i32_2 = arith.constant 0 : i32
    return %arg0, %c0_i32, %c0_i32_0, %c0_i32_1 : i32, i32, i32, i32
  }
  func.func @transform_1(%arg0: i32, %arg1: i32) -> (i32, i32) {
    %c0_i32 = arith.constant 0 : i32
    %c0_i32_0 = arith.constant 0 : i32
    %c0_i32_1 = arith.constant 0 : i32
    return %c0_i32, %c0_i32_0 : i32, i32
  }
  func.func @transform_2(%arg0: i32, %arg1: i32) -> (i32, i32) {
    %c0_i32 = arith.constant 0 : i32
    %c0_i32_0 = arith.constant 0 : i32
    %c0_i32_1 = arith.constant 0 : i32
    return %c0_i32, %c0_i32_0 : i32, i32
  }
  func.func @transform_3(%arg0: i32, %arg1: i32) -> (i32, i32) {
    %c0_i32 = arith.constant 0 : i32
    %c0_i32_0 = arith.constant 0 : i32
    %c0_i32_1 = arith.constant 0 : i32
    return %c0_i32, %c0_i32_0 : i32, i32
  }
  func.func @transform_4(%arg0: i32, %arg1: i32) -> (i32, i32) {
    %c0_i32 = arith.constant 0 : i32
    %c0_i32_0 = arith.constant 0 : i32
    %c0_i32_1 = arith.constant 0 : i32
    return %c0_i32, %c0_i32_0 : i32, i32
  }
  func.func @transform_5(%arg0: i32, %arg1: i32) -> (i32, i32, i32, i32) {
    %c0_i32 = arith.constant 0 : i32
    %c0_i32_0 = arith.constant 0 : i32
    %c0_i32_1 = arith.constant 0 : i32
    return %arg0, %arg1, %c0_i32, %c0_i32_0 : i32, i32, i32, i32
  }
  func.func @transform_6(%arg0: i32, %arg1: i32) -> (i32, i32, i32, i32) {
    %c0_i32 = arith.constant 0 : i32
    %c0_i32_0 = arith.constant 0 : i32
    %c0_i32_1 = arith.constant 0 : i32
    return %arg0, %arg1, %c0_i32, %c0_i32_0 : i32, i32, i32, i32
  }
}

</mosaic_0001>

<llo_original>
// kernel: msrb_forward.2
$region0: #{msrb_forward.2}
  #allocation0 [shape = 'u32[]', space=smem, size = 0x4, offset = 0x4, fixed_abs, tag = 'smem constant byte address 0x4 - core index']
  #allocation1 [shape = 'u32[72,128]{1,0:T(1,128)}', space=vmem, size = 0x9000, scoped, tag = 'internal scratch']
  #allocation2 [shape = 'bf16[128,100]{1,0:T(8,128)(2,1)}', space=vmem, size = 0x8000, scoped, tag = 'scratch operand']
  %s0 = inlined_call_operand.vmem [shape: f32[2,20,20,4], index: 0, kind: input, shape index: {}]
  %s1 = inlined_call_operand.vmem [shape: bf16[100,8], index: 1, kind: input, shape index: {}]
  %s2 = inlined_call_operand.vmem [shape: f32[1,8], index: 2, kind: input, shape index: {}]
  %s3 = inlined_call_operand.vmem [shape: f32[2,16,16,8], index: 3, kind: output, shape index: {}]
  %s4 = sld [smem:[#allocation0]]
  $region45: #{msrb_forward.2} parent=0
    _
  %s6 = ssub.s32 1, %s4
  %s7 = scalar_select 0, %s6, %s4
  loop: start=0, step=1, limit=6
  $region2: #{msrb_forward.2} parent=0 // loop_pre_header
    _
  $region3: #{msrb_forward.2} parent=0 // loop_header
    %s9 = sphi 0, %s13
    %p10 = scmp.ge.s32.totalorder %s9, 6
    %s16 = sphi 0, %s28
    %s17 = sphi 0, %s24
    %s18 = sphi 0, %s16
    %s19 = sphi 0, %s17
    %s20 = sphi 0, %s18
    %s21 = sphi 0, %s19
    %s31 = sphi 0, %s33
    %s34 = sphi 0, %s31
    %s35 = sphi 0, %s34
    %s51 = sphi 0, %s35
    %s55 = sphi 0, %s55
    %s57 = sphi 0, %s55
    %s58 = sphi 0, %s57
    %s72 = sphi 0, %s58
    %s76 = sphi 0, %s76
    %s78 = sphi 0, %s76
    %s79 = sphi 0, %s78
    %s93 = sphi 0, %s79
    %s101 = sphi 0, %s103
    %s104 = sphi 0, %s101
    %s105 = sphi 0, %s104
    %s121 = sphi 0, %s105
  $region4: #{msrb_forward.2} parent=0 // loop_header_branch
    %12 = sbr.rel (%p10) target = $region8
  $region5: #{msrb_forward.2} parent=0 // loop_body
    %s14 = ssub.s32 %s9, 1
    %s15 = ssub.s32 %s9, 2
    %s22 = sadd.s32 1, %s17
    %p23 = scmp.ge.s32.totalorder %s22, 2
    %s24 = scalar_select %p23, 0, %s22
    %s25 = sadd.s32 1, %s16
    %s26 = scalar_select %p23, %s25, %s16
    %p27 = scmp.ge.s32.totalorder %s26, 2
    %s28 = scalar_select %p27, 0, %s26
    %s29 = ssub.s32 %s16, %s28
    %p30 = scmp.eq.s32.totalorder %s29, 0
    %s32 = sadd.s32 %s31, 1
    %s33 = scalar_select %p30, %s31, %s32
    %p36 = pneg %p30
    %p37 = scmp.eq.s32.totalorder %s9, 3
    %p38 = por %p36, %p37
    %p39 = scmp.ne.s32.totalorder %s31, %s34
    %p40 = scmp.eq.s32.totalorder %s9, 0
    %p41 = por %p39, %p40
    %p42 = scmp.ne.s32.totalorder %s31, %s34
    %p43 = scmp.eq.s32.totalorder %s14, 3
    %p44 = por %p42, %p43
    %p45 = scmp.ne.s32.totalorder %s34, %s35
    %p46 = scmp.eq.s32.totalorder %s14, 0
    %p47 = por %p45, %p46
    %p48 = scmp.ne.s32.totalorder %s34, %s35
    %p49 = scmp.eq.s32.totalorder %s15, 3
    %p50 = por %p48, %p49
    %p52 = scmp.ne.s32.totalorder %s35, %s51
    %p53 = scmp.eq.s32.totalorder %s15, 0
    %p54 = por %p52, %p53
    %s56 = sadd.s32 %s55, 1
    %p59 = scmp.eq.s32.totalorder %s9, 3
    %p60 = scmp.ne.s32.totalorder %s55, %s57
    %p61 = scmp.eq.s32.totalorder %s9, 0
    %p62 = por %p60, %p61
    %p63 = scmp.ne.s32.totalorder %s55, %s57
    %p64 = scmp.eq.s32.totalorder %s14, 3
    %p65 = por %p63, %p64
    %p66 = scmp.ne.s32.totalorder %s57, %s58
    %p67 = scmp.eq.s32.totalorder %s14, 0
    %p68 = por %p66, %p67
    %p69 = scmp.ne.s32.totalorder %s57, %s58
    %p70 = scmp.eq.s32.totalorder %s15, 3
    %p71 = por %p69, %p70
    %p73 = scmp.ne.s32.totalorder %s58, %s72
    %p74 = scmp.eq.s32.totalorder %s15, 0
    %p75 = por %p73, %p74
    %s77 = sadd.s32 %s76, 1
    %p80 = scmp.eq.s32.totalorder %s9, 3
    %p81 = scmp.ne.s32.totalorder %s76, %s78
    %p82 = scmp.eq.s32.totalorder %s9, 0
    %p83 = por %p81, %p82
    %p84 = scmp.ne.s32.totalorder %s76, %s78
    %p85 = scmp.eq.s32.totalorder %s14, 3
    %p86 = por %p84, %p85
    %p87 = scmp.ne.s32.totalorder %s78, %s79
    %p88 = scmp.eq.s32.totalorder %s14, 0
    %p89 = por %p87, %p88
    %p90 = scmp.ne.s32.totalorder %s78, %s79
    %p91 = scmp.eq.s32.totalorder %s15, 3
    %p92 = por %p90, %p91
    %p94 = scmp.ne.s32.totalorder %s79, %s93
    %p95 = scmp.eq.s32.totalorder %s15, 0
    %p96 = por %p94, %p95
    %s97 = ssub.s32 %s16, %s28
    %s98 = ssub.s32 %s17, %s24
    %s99 = sor.u32 %s97, %s98
    %p100 = scmp.eq.s32.totalorder %s99, 0
    %s102 = sadd.s32 %s101, 1
    %s103 = scalar_select %p100, %s101, %s102
    %p106 = pneg %p100
    %p107 = scmp.eq.s32.totalorder %s9, 3
    %p108 = por %p106, %p107
    %p109 = scmp.ne.s32.totalorder %s101, %s104
    %p110 = scmp.eq.s32.totalorder %s9, 0
    %p111 = por %p109, %p110
    %p112 = scmp.ne.s32.totalorder %s101, %s104
    %p113 = scmp.eq.s32.totalorder %s14, 3
    %p114 = por %p112, %p113
    %p115 = scmp.ne.s32.totalorder %s104, %s105
    %p116 = scmp.eq.s32.totalorder %s14, 0
    %p117 = por %p115, %p116
    %p118 = scmp.ne.s32.totalorder %s104, %s105
    %p119 = scmp.eq.s32.totalorder %s15, 3
    %p120 = por %p118, %p119
    %p122 = scmp.ne.s32.totalorder %s105, %s121
    %p123 = scmp.eq.s32.totalorder %s15, 0
    %p124 = por %p122, %p123
    %p125 = scmp.le.s32.totalorder 1, %s9
    %p126 = scmp.lt.s32.totalorder %s9, 5
    %p127 = pnand %p125, %p126
    %p128 = pneg %p127
    // Predicated region
    $region9: #{msrb_forward.2} parent=5 // pred_check
      _
    $region10: #{msrb_forward.2} parent=5 // pred_check_branch
      %130 = sbr.rel (%p127) target = $region12
    $region11: #{msrb_forward.2} parent=5 // pred_region
      %s131 = ssub.s32 %s9, 1
      // Predicated region
      $region13: #{msrb_forward.2} parent=11 // pred_check
        %p132 = pneg %p68
      $region14: #{msrb_forward.2} parent=11 // pred_check_branch
        %134 = sbr.rel (%p132) target = $region16
      $region15: #{msrb_forward.2} parent=11 // pred_region
        _
      $region16: #{msrb_forward.2} parent=11 // pred_fallthru
        _
      // Predicated region
      $region17: #{msrb_forward.2} parent=11 // pred_check
        %p135 = pneg %p89
      $region18: #{msrb_forward.2} parent=11 // pred_check_branch
        %137 = sbr.rel (%p135) target = $region20
      $region19: #{msrb_forward.2} parent=11 // pred_region
        _
      $region20: #{msrb_forward.2} parent=11 // pred_fallthru
        _
    $region12: #{msrb_forward.2} parent=5 // pred_fallthru
      _
    %p138 = scmp.lt.s32.totalorder %s9, 4
    // Predicated region
    $region21: #{msrb_forward.2} parent=5 // pred_check
      %p139 = pneg %p138
    $region22: #{msrb_forward.2} parent=5 // pred_check_branch
      %141 = sbr.rel (%p139) target = $region24
    $region23: #{msrb_forward.2} parent=5 // pred_region
      // Predicated region
      $region25: #{msrb_forward.2} parent=23 // pred_check
        %p142 = pneg %p41
      $region26: #{msrb_forward.2} parent=23 // pred_check_branch
        %144 = sbr.rel (%p142) target = $region28
      $region27: #{msrb_forward.2} parent=23 // pred_region
        %p145 = scmp.lt.s32.totalorder %s16, 1
        %s146 = scalar_select %p145, %s16, 1
        %s147 = smul.addr %s146, 60
        %s148 = smul.addr %s147, 8
        %s149 = scalar_lea.vmem %s0, %s148
      $region28: #{msrb_forward.2} parent=23 // pred_fallthru
        _
    $region24: #{msrb_forward.2} parent=5 // pred_fallthru
      _
    %p150 = scmp.le.s32.totalorder 1, %s9
    %p151 = scmp.lt.s32.totalorder %s9, 5
    %p152 = pnand %p150, %p151
    %p153 = pneg %p152
    // Predicated region
    $region29: #{msrb_forward.2} parent=5 // pred_check
      _
    $region30: #{msrb_forward.2} parent=5 // pred_check_branch
      %155 = sbr.rel (%p152) target = $region32
    $region31: #{msrb_forward.2} parent=5 // pred_region
      %s156 = ssub.s32 %s9, 1
      %p157 = scmp.lt.s32.totalorder %s18, 1
      %s158 = scalar_select %p157, %s18, 1
      %s159 = smul.addr %s158, 60
      %s160 = smul.addr %s159, 8
      %s161 = scalar_lea.vmem %s0, %s160
      %p162 = pneg %p47
      %p163 = pneg %p44
      %p164 = pneg %p68
      %p165 = pneg %p65
      %p166 = pneg %p89
      %p167 = pneg %p86
      %p168 = pneg %p117
      %p169 = pneg %p114
      %s170 = smul.u32 8, %s19
      %p171 = scmp.lt.s32.totalorder %s18, 1
      %s172 = scalar_select %p171, %s18, 1
      %p173 = scmp.lt.s32.totalorder %s170, 15
      %s174 = scalar_select %p173, %s170, 15
      %s175 = smul.addr %s174, 2
      %s176 = smul.addr %s172, 32
      %s177 = sadd.s32 %s175, %s176
      %s178 = smul.addr %s177, 8
      %s179 = scalar_lea.vmem %s3, %s178
      %p180 = scmp.lt.s32.totalorder %s18, 1
      %s181 = scalar_select %p180, %s18, 1
      %s182 = smul.addr %s181, 60
      %s183 = smul.addr %s182, 8
      %s184 = scalar_lea.vmem %s0, %s183
      %s185 = smul.u32 8, %s19
      %p186 = scmp.lt.s32.totalorder %s18, 1
      %s187 = scalar_select %p186, %s18, 1
      %p188 = scmp.lt.s32.totalorder %s185, 15
      %s189 = scalar_select %p188, %s185, 15
      %s190 = smul.addr %s189, 2
      %s191 = smul.addr %s187, 32
      %s192 = sadd.s32 %s190, %s191
      %s193 = smul.addr %s192, 8
      %s194 = scalar_lea.vmem %s3, %s193
      %s195 = smul.u32 8, %s19
      %s197 = smul.u32 %s19, 8
      %s198 = smul.u32 %s197, 24
      %s199 = scalar_lea.vmem %s184, %s198
      %v200 = vld [vmem:[%s199] sm:$0xff]
      %v201 = vld [vmem:[%s199 + $0x8] sm:$0xff]
      %v202 = vld [vmem:[%s199 + $0x10] sm:$0xf]
      %v203 = vld [vmem:[%s199 + $0x18] sm:$0xff]
      %v204 = vld [vmem:[%s199 + $0x20] sm:$0xff]
      %v205 = vld [vmem:[%s199 + $0x28] sm:$0xf]
      %v206 = vld [vmem:[%s199 + $0x30] sm:$0xff]
      %v207 = vld [vmem:[%s199 + $0x38] sm:$0xff]
      %v208 = vld [vmem:[%s199 + $0x40] sm:$0xf]
      %v209 = vld [vmem:[%s199 + $0x48] sm:$0xff]
      %v210 = vld [vmem:[%s199 + $0x50] sm:$0xff]
      %v211 = vld [vmem:[%s199 + $0x58] sm:$0xf]
      %v212 = vld [vmem:[%s199 + $0x60] sm:$0xff]
      %v213 = vld [vmem:[%s199 + $0x68] sm:$0xff]
      %v214 = vld [vmem:[%s199 + $0x70] sm:$0xf]
      %v215 = vld [vmem:[%s199 + $0x78] sm:$0xff]
      %v216 = vld [vmem:[%s199 + $0x80] sm:$0xff]
      %v217 = vld [vmem:[%s199 + $0x88] sm:$0xf]
      %v218 = vld [vmem:[%s199 + $0x90] sm:$0xff]
      %v219 = vld [vmem:[%s199 + $0x98] sm:$0xff]
      %v220 = vld [vmem:[%s199 + $0xa0] sm:$0xf]
      %v221 = vld [vmem:[%s199 + $0xa8] sm:$0xff]
      %v222 = vld [vmem:[%s199 + $0xb0] sm:$0xff]
      %v223 = vld [vmem:[%s199 + $0xb8] sm:$0xf]
      %v224 = vld [vmem:[%s199 + $0xc0] sm:$0xff]
      %v225 = vld [vmem:[%s199 + $0xc8] sm:$0xff]
      %v226 = vld [vmem:[%s199 + $0xd0] sm:$0xf]
      %v227 = vld [vmem:[%s199 + $0xd8] sm:$0xff]
      %v228 = vld [vmem:[%s199 + $0xe0] sm:$0xff]
      %v229 = vld [vmem:[%s199 + $0xe8] sm:$0xf]
      %v230 = vld [vmem:[%s199 + $0xf0] sm:$0xff]
      %v231 = vld [vmem:[%s199 + $0xf8] sm:$0xff]
      %v232 = vld [vmem:[%s199 + $0x100] sm:$0xf]
      %v233 = vld [vmem:[%s199 + $0x108] sm:$0xff]
      %v234 = vld [vmem:[%s199 + $0x110] sm:$0xff]
      %v235 = vld [vmem:[%s199 + $0x118] sm:$0xf]
      %v236 = vpack.c.bf16 %v200, %v200
      %v237 = vpack.c.bf16 %v201, %v201
      %v238 = vpack.c.bf16 %v203, %v203
      %v239 = vpack.c.bf16 %v204, %v204
      %v240 = vpack.c.bf16 %v206, %v206
      %v241 = vpack.c.bf16 %v207, %v207
      %v242 = vpack.c.bf16 %v209, %v209
      %v243 = vpack.c.bf16 %v210, %v210
      %v244 = vpack.c.bf16 %v212, %v212
      %v245 = vpack.c.bf16 %v213, %v213
      %v246 = vpack.c.bf16 %v215, %v215
      %v247 = vpack.c.bf16 %v216, %v216
      %v248 = vpack.c.bf16 %v218, %v218
      %v249 = vpack.c.bf16 %v219, %v219
      %v250 = vpack.c.bf16 %v221, %v221
      %v251 = vpack.c.bf16 %v222, %v222
      %vm252 = vcmask 27648
      %253 = vst.msk [vmem:[#allocation2] sm:$0xf] %vm252, %v236
      %254 = vst.msk [vmem:[#allocation2 + $0x4] sm:$0xf] %vm252, %v237
      %255 = vst.msk [vmem:[#allocation2 + $0x8] sm:$0xf] %vm252, %v238
      %256 = vst.msk [vmem:[#allocation2 + $0xc] sm:$0xf] %vm252, %v239
      %257 = vst.msk [vmem:[#allocation2 + $0x10] sm:$0xf] %vm252, %v240
      %258 = vst.msk [vmem:[#allocation2 + $0x14] sm:$0xf] %vm252, %v241
      %259 = vst.msk [vmem:[#allocation2 + $0x18] sm:$0xf] %vm252, %v242
      %260 = vst.msk [vmem:[#allocation2 + $0x1c] sm:$0xf] %vm252, %v243
      %261 = vst.msk [vmem:[#allocation2 + $0x20] sm:$0xf] %vm252, %v244
      %262 = vst.msk [vmem:[#allocation2 + $0x24] sm:$0xf] %vm252, %v245
      %263 = vst.msk [vmem:[#allocation2 + $0x28] sm:$0xf] %vm252, %v246
      %264 = vst.msk [vmem:[#allocation2 + $0x2c] sm:$0xf] %vm252, %v247
      %265 = vst.msk [vmem:[#allocation2 + $0x30] sm:$0xf] %vm252, %v248
      %266 = vst.msk [vmem:[#allocation2 + $0x34] sm:$0xf] %vm252, %v249
      %267 = vst.msk [vmem:[#allocation2 + $0x38] sm:$0xf] %vm252, %v250
      %268 = vst.msk [vmem:[#allocation2 + $0x3c] sm:$0xf] %vm252, %v251
      %vm293 = vcmask 1046528
      %v294 = vrot.slane %v200, 1
      %v295 = vrot.slane %v201, 1
      %v296 = vsel %vm293, %v294, %v295
      %v297 = vrot.slane %v202, 1
      %v298 = vsel %vm293, %v295, %v297
      %v299 = vrot.slane %v203, 1
      %v300 = vrot.slane %v204, 1
      %v301 = vsel %vm293, %v299, %v300
      %v302 = vrot.slane %v205, 1
      %v303 = vsel %vm293, %v300, %v302
      %v304 = vrot.slane %v206, 1
      %v305 = vrot.slane %v207, 1
      %v306 = vsel %vm293, %v304, %v305
      %v307 = vrot.slane %v208, 1
      %v308 = vsel %vm293, %v305, %v307
      %v309 = vrot.slane %v209, 1
      %v310 = vrot.slane %v210, 1
      %v311 = vsel %vm293, %v309, %v310
      %v312 = vrot.slane %v211, 1
      %v313 = vsel %vm293, %v310, %v312
      %v314 = vrot.slane %v212, 1
      %v315 = vrot.slane %v213, 1
      %v316 = vsel %vm293, %v314, %v315
      %v317 = vrot.slane %v214, 1
      %v318 = vsel %vm293, %v315, %v317
      %v319 = vrot.slane %v215, 1
      %v320 = vrot.slane %v216, 1
      %v321 = vsel %vm293, %v319, %v320
      %v322 = vrot.slane %v217, 1
      %v323 = vsel %vm293, %v320, %v322
      %v324 = vrot.slane %v218, 1
      %v325 = vrot.slane %v219, 1
      %v326 = vsel %vm293, %v324, %v325
      %v327 = vrot.slane %v220, 1
      %v328 = vsel %vm293, %v325, %v327
      %v329 = vrot.slane %v221, 1
      %v330 = vrot.slane %v222, 1
      %v331 = vsel %vm293, %v329, %v330
      %v332 = vrot.slane %v223, 1
      %v333 = vsel %vm293, %v330, %v332
      %v350 = vpack.c.bf16 %v296, %v296
      %v351 = vpack.c.bf16 %v298, %v298
      %v352 = vpack.c.bf16 %v301, %v301
      %v353 = vpack.c.bf16 %v303, %v303
      %v354 = vpack.c.bf16 %v306, %v306
      %v355 = vpack.c.bf16 %v308, %v308
      %v356 = vpack.c.bf16 %v311, %v311
      %v357 = vpack.c.bf16 %v313, %v313
      %v358 = vpack.c.bf16 %v316, %v316
      %v359 = vpack.c.bf16 %v318, %v318
      %v360 = vpack.c.bf16 %v321, %v321
      %v361 = vpack.c.bf16 %v323, %v323
      %v362 = vpack.c.bf16 %v326, %v326
      %v363 = vpack.c.bf16 %v328, %v328
      %v364 = vpack.c.bf16 %v331, %v331
      %v365 = vpack.c.bf16 %v333, %v333
      %382 = vrot.lane.b32.xlu0 %v350, 4
      %v383 = vpop.permute.xlu0 %382
      %384 = vrot.lane.b32.xlu0 %v351, 4
      %v385 = vpop.permute.xlu0 %384
      %386 = vrot.lane.b32.xlu0 %v352, 4
      %v387 = vpop.permute.xlu0 %386
      %388 = vrot.lane.b32.xlu0 %v353, 4
      %v389 = vpop.permute.xlu0 %388
      %390 = vrot.lane.b32.xlu0 %v354, 4
      %v391 = vpop.permute.xlu0 %390
      %392 = vrot.lane.b32.xlu0 %v355, 4
      %v393 = vpop.permute.xlu0 %392
      %394 = vrot.lane.b32.xlu0 %v356, 4
      %v395 = vpop.permute.xlu0 %394
      %396 = vrot.lane.b32.xlu0 %v357, 4
      %v397 = vpop.permute.xlu0 %396
      %398 = vrot.lane.b32.xlu0 %v358, 4
      %v399 = vpop.permute.xlu0 %398
      %400 = vrot.lane.b32.xlu0 %v359, 4
      %v401 = vpop.permute.xlu0 %400
      %402 = vrot.lane.b32.xlu0 %v360, 4
      %v403 = vpop.permute.xlu0 %402
      %404 = vrot.lane.b32.xlu0 %v361, 4
      %v405 = vpop.permute.xlu0 %404
      %406 = vrot.lane.b32.xlu0 %v362, 4
      %v407 = vpop.permute.xlu0 %406
      %408 = vrot.lane.b32.xlu0 %v363, 4
      %v409 = vpop.permute.xlu0 %408
      %410 = vrot.lane.b32.xlu0 %v364, 4
      %v411 = vpop.permute.xlu0 %410
      %412 = vrot.lane.b32.xlu0 %v365, 4
      %v413 = vpop.permute.xlu0 %412
      %vm430 = vcmask 60448
      %431 = vst.msk [vmem:[#allocation2] sm:$0xf] %vm430, %v383
      %432 = vst.msk [vmem:[#allocation2 + $0x4] sm:$0xf] %vm430, %v385
      %433 = vst.msk [vmem:[#allocation2 + $0x8] sm:$0xf] %vm430, %v387
      %434 = vst.msk [vmem:[#allocation2 + $0xc] sm:$0xf] %vm430, %v389
      %435 = vst.msk [vmem:[#allocation2 + $0x10] sm:$0xf] %vm430, %v391
      %436 = vst.msk [vmem:[#allocation2 + $0x14] sm:$0xf] %vm430, %v393
      %437 = vst.msk [vmem:[#allocation2 + $0x18] sm:$0xf] %vm430, %v395
      %438 = vst.msk [vmem:[#allocation2 + $0x1c] sm:$0xf] %vm430, %v397
      %439 = vst.msk [vmem:[#allocation2 + $0x20] sm:$0xf] %vm430, %v399
      %440 = vst.msk [vmem:[#allocation2 + $0x24] sm:$0xf] %vm430, %v401
      %441 = vst.msk [vmem:[#allocation2 + $0x28] sm:$0xf] %vm430, %v403
      %442 = vst.msk [vmem:[#allocation2 + $0x2c] sm:$0xf] %vm430, %v405
      %443 = vst.msk [vmem:[#allocation2 + $0x30] sm:$0xf] %vm430, %v407
      %444 = vst.msk [vmem:[#allocation2 + $0x34] sm:$0xf] %vm430, %v409
      %445 = vst.msk [vmem:[#allocation2 + $0x38] sm:$0xf] %vm430, %v411
      %446 = vst.msk [vmem:[#allocation2 + $0x3c] sm:$0xf] %vm430, %v413
      %vm447 = vcmask 1045504
      %v448 = vrot.slane %v200, 2
      %v449 = vrot.slane %v201, 2
      %v450 = vsel %vm447, %v448, %v449
      %v451 = vrot.slane %v202, 2
      %v452 = vsel %vm447, %v449, %v451
      %v453 = vrot.slane %v203, 2
      %v454 = vrot.slane %v204, 2
      %v455 = vsel %vm447, %v453, %v454
      %v456 = vrot.slane %v205, 2
      %v457 = vsel %vm447, %v454, %v456
      %v458 = vrot.slane %v206, 2
      %v459 = vrot.slane %v207, 2
      %v460 = vsel %vm447, %v458, %v459
      %v461 = vrot.slane %v208, 2
      %v462 = vsel %vm447, %v459, %v461
      %v463 = vrot.slane %v209, 2
      %v464 = vrot.slane %v210, 2
      %v465 = vsel %vm447, %v463, %v464
      %v466 = vrot.slane %v211, 2
      %v467 = vsel %vm447, %v464, %v466
      %v468 = vrot.slane %v212, 2
      %v469 = vrot.slane %v213, 2
      %v470 = vsel %vm447, %v468, %v469
      %v471 = vrot.slane %v214, 2
      %v472 = vsel %vm447, %v469, %v471
      %v473 = vrot.slane %v215, 2
      %v474 = vrot.slane %v216, 2
      %v475 = vsel %vm447, %v473, %v474
      %v476 = vrot.slane %v217, 2
      %v477 = vsel %vm447, %v474, %v476
      %v478 = vrot.slane %v218, 2
      %v479 = vrot.slane %v219, 2
      %v480 = vsel %vm447, %v478, %v479
      %v481 = vrot.slane %v220, 2
      %v482 = vsel %vm447, %v479, %v481
      %v483 = vrot.slane %v221, 2
      %v484 = vrot.slane %v222, 2
      %v485 = vsel %vm447, %v483, %v484
      %v486 = vrot.slane %v223, 2
      %v487 = vsel %vm447, %v484, %v486
      %v504 = vpack.c.bf16 %v450, %v450
      %v505 = vpack.c.bf16 %v452, %v452
      %v506 = vpack.c.bf16 %v455, %v455
      %v507 = vpack.c.bf16 %v457, %v457
      %v508 = vpack.c.bf16 %v460, %v460
      %v509 = vpack.c.bf16 %v462, %v462
      %v510 = vpack.c.bf16 %v465, %v465
      %v511 = vpack.c.bf16 %v467, %v467
      %v512 = vpack.c.bf16 %v470, %v470
      %v513 = vpack.c.bf16 %v472, %v472
      %v514 = vpack.c.bf16 %v475, %v475
      %v515 = vpack.c.bf16 %v477, %v477
      %v516 = vpack.c.bf16 %v480, %v480
      %v517 = vpack.c.bf16 %v482, %v482
      %v518 = vpack.c.bf16 %v485, %v485
      %v519 = vpack.c.bf16 %v487, %v487
      %536 = vrot.lane.b32.xlu0 %v504, 8
      %v537 = vpop.permute.xlu0 %536
      %538 = vrot.lane.b32.xlu0 %v505, 8
      %v539 = vpop.permute.xlu0 %538
      %540 = vrot.lane.b32.xlu0 %v506, 8
      %v541 = vpop.permute.xlu0 %540
      %542 = vrot.lane.b32.xlu0 %v507, 8
      %v543 = vpop.permute.xlu0 %542
      %544 = vrot.lane.b32.xlu0 %v508, 8
      %v545 = vpop.permute.xlu0 %544
      %546 = vrot.lane.b32.xlu0 %v509, 8
      %v547 = vpop.permute.xlu0 %546
      %548 = vrot.lane.b32.xlu0 %v510, 8
      %v549 = vpop.permute.xlu0 %548
      %550 = vrot.lane.b32.xlu0 %v511, 8
      %v551 = vpop.permute.xlu0 %550
      %552 = vrot.lane.b32.xlu0 %v512, 8
      %v553 = vpop.permute.xlu0 %552
      %554 = vrot.lane.b32.xlu0 %v513, 8
      %v555 = vpop.permute.xlu0 %554
      %556 = vrot.lane.b32.xlu0 %v514, 8
      %v557 = vpop.permute.xlu0 %556
      %558 = vrot.lane.b32.xlu0 %v515, 8
      %v559 = vpop.permute.xlu0 %558
      %560 = vrot.lane.b32.xlu0 %v516, 8
      %v561 = vpop.permute.xlu0 %560
      %562 = vrot.lane.b32.xlu0 %v517, 8
      %v563 = vpop.permute.xlu0 %562
      %564 = vrot.lane.b32.xlu0 %v518, 8
      %v565 = vpop.permute.xlu0 %564
      %566 = vrot.lane.b32.xlu0 %v519, 8
      %v567 = vpop.permute.xlu0 %566
      %vm584 = vcmask 93248
      %585 = vst.msk [vmem:[#allocation2] sm:$0xf] %vm584, %v537
      %586 = vst.msk [vmem:[#allocation2 + $0x4] sm:$0xf] %vm584, %v539
      %587 = vst.msk [vmem:[#allocation2 + $0x8] sm:$0xf] %vm584, %v541
      %588 = vst.msk [vmem:[#allocation2 + $0xc] sm:$0xf] %vm584, %v543
      %589 = vst.msk [vmem:[#allocation2 + $0x10] sm:$0xf] %vm584, %v545
      %590 = vst.msk [vmem:[#allocation2 + $0x14] sm:$0xf] %vm584, %v547
      %591 = vst.msk [vmem:[#allocation2 + $0x18] sm:$0xf] %vm584, %v549
      %592 = vst.msk [vmem:[#allocation2 + $0x1c] sm:$0xf] %vm584, %v551
      %593 = vst.msk [vmem:[#allocation2 + $0x20] sm:$0xf] %vm584, %v553
      %594 = vst.msk [vmem:[#allocation2 + $0x24] sm:$0xf] %vm584, %v555
      %595 = vst.msk [vmem:[#allocation2 + $0x28] sm:$0xf] %vm584, %v557
      %596 = vst.msk [vmem:[#allocation2 + $0x2c] sm:$0xf] %vm584, %v559
      %597 = vst.msk [vmem:[#allocation2 + $0x30] sm:$0xf] %vm584, %v561
      %598 = vst.msk [vmem:[#allocation2 + $0x34] sm:$0xf] %vm584, %v563
      %599 = vst.msk [vmem:[#allocation2 + $0x38] sm:$0xf] %vm584, %v565
      %600 = vst.msk [vmem:[#allocation2 + $0x3c] sm:$0xf] %vm584, %v567
      %vm601 = vcmask 1044480
      %v602 = vrot.slane %v200, 3
      %v603 = vrot.slane %v201, 3
      %v604 = vsel %vm601, %v602, %v603
      %v605 = vrot.slane %v202, 3
      %v606 = vsel %vm601, %v603, %v605
      %v607 = vrot.slane %v203, 3
      %v608 = vrot.slane %v204, 3
      %v609 = vsel %vm601, %v607, %v608
      %v610 = vrot.slane %v205, 3
      %v611 = vsel %vm601, %v608, %v610
      %v612 = vrot.slane %v206, 3
      %v613 = vrot.slane %v207, 3
      %v614 = vsel %vm601, %v612, %v613
      %v615 = vrot.slane %v208, 3
      %v616 = vsel %vm601, %v613, %v615
      %v617 = vrot.slane %v209, 3
      %v618 = vrot.slane %v210, 3
      %v619 = vsel %vm601, %v617, %v618
      %v620 = vrot.slane %v211, 3
      %v621 = vsel %vm601, %v618, %v620
      %v622 = vrot.slane %v212, 3
      %v623 = vrot.slane %v213, 3
      %v624 = vsel %vm601, %v622, %v623
      %v625 = vrot.slane %v214, 3
      %v626 = vsel %vm601, %v623, %v625
      %v627 = vrot.slane %v215, 3
      %v628 = vrot.slane %v216, 3
      %v629 = vsel %vm601, %v627, %v628
      %v630 = vrot.slane %v217, 3
      %v631 = vsel %vm601, %v628, %v630
      %v632 = vrot.slane %v218, 3
      %v633 = vrot.slane %v219, 3
      %v634 = vsel %vm601, %v632, %v633
      %v635 = vrot.slane %v220, 3
      %v636 = vsel %vm601, %v633, %v635
      %v637 = vrot.slane %v221, 3
      %v638 = vrot.slane %v222, 3
      %v639 = vsel %vm601, %v637, %v638
      %v640 = vrot.slane %v223, 3
      %v641 = vsel %vm601, %v638, %v640
      %v658 = vpack.c.bf16 %v604, %v604
      %v659 = vpack.c.bf16 %v606, %v606
      %v660 = vpack.c.bf16 %v609, %v609
      %v661 = vpack.c.bf16 %v611, %v611
      %v662 = vpack.c.bf16 %v614, %v614
      %v663 = vpack.c.bf16 %v616, %v616
      %v664 = vpack.c.bf16 %v619, %v619
      %v665 = vpack.c.bf16 %v621, %v621
      %v666 = vpack.c.bf16 %v624, %v624
      %v667 = vpack.c.bf16 %v626, %v626
      %v668 = vpack.c.bf16 %v629, %v629
      %v669 = vpack.c.bf16 %v631, %v631
      %v670 = vpack.c.bf16 %v634, %v634
      %v671 = vpack.c.bf16 %v636, %v636
      %v672 = vpack.c.bf16 %v639, %v639
      %v673 = vpack.c.bf16 %v641, %v641
      %690 = vrot.lane.b32.xlu0 %v658, 12
      %v691 = vpop.permute.xlu0 %690
      %692 = vrot.lane.b32.xlu0 %v659, 12
      %v693 = vpop.permute.xlu0 %692
      %694 = vrot.lane.b32.xlu0 %v660, 12
      %v695 = vpop.permute.xlu0 %694
      %696 = vrot.lane.b32.xlu0 %v661, 12
      %v697 = vpop.permute.xlu0 %696
      %698 = vrot.lane.b32.xlu0 %v662, 12
      %v699 = vpop.permute.xlu0 %698
      %700 = vrot.lane.b32.xlu0 %v663, 12
      %v701 = vpop.permute.xlu0 %700
      %702 = vrot.lane.b32.xlu0 %v664, 12
      %v703 = vpop.permute.xlu0 %702
      %704 = vrot.lane.b32.xlu0 %v665, 12
      %v705 = vpop.permute.xlu0 %704
      %706 = vrot.lane.b32.xlu0 %v666, 12
      %v707 = vpop.permute.xlu0 %706
      %708 = vrot.lane.b32.xlu0 %v667, 12
      %v709 = vpop.permute.xlu0 %708
      %710 = vrot.lane.b32.xlu0 %v668, 12
      %v711 = vpop.permute.xlu0 %710
      %712 = vrot.lane.b32.xlu0 %v669, 12
      %v713 = vpop.permute.xlu0 %712
      %714 = vrot.lane.b32.xlu0 %v670, 12
      %v715 = vpop.permute.xlu0 %714
      %716 = vrot.lane.b32.xlu0 %v671, 12
      %v717 = vpop.permute.xlu0 %716
      %718 = vrot.lane.b32.xlu0 %v672, 12
      %v719 = vpop.permute.xlu0 %718
      %720 = vrot.lane.b32.xlu0 %v673, 12
      %v721 = vpop.permute.xlu0 %720
      %vm738 = vcmask 126048
      %739 = vst.msk [vmem:[#allocation2] sm:$0xf] %vm738, %v691
      %740 = vst.msk [vmem:[#allocation2 + $0x4] sm:$0xf] %vm738, %v693
      %741 = vst.msk [vmem:[#allocation2 + $0x8] sm:$0xf] %vm738, %v695
      %742 = vst.msk [vmem:[#allocation2 + $0xc] sm:$0xf] %vm738, %v697
      %743 = vst.msk [vmem:[#allocation2 + $0x10] sm:$0xf] %vm738, %v699
      %744 = vst.msk [vmem:[#allocation2 + $0x14] sm:$0xf] %vm738, %v701
      %745 = vst.msk [vmem:[#allocation2 + $0x18] sm:$0xf] %vm738, %v703
      %746 = vst.msk [vmem:[#allocation2 + $0x1c] sm:$0xf] %vm738, %v705
      %747 = vst.msk [vmem:[#allocation2 + $0x20] sm:$0xf] %vm738, %v707
      %748 = vst.msk [vmem:[#allocation2 + $0x24] sm:$0xf] %vm738, %v709
      %749 = vst.msk [vmem:[#allocation2 + $0x28] sm:$0xf] %vm738, %v711
      %750 = vst.msk [vmem:[#allocation2 + $0x2c] sm:$0xf] %vm738, %v713
      %751 = vst.msk [vmem:[#allocation2 + $0x30] sm:$0xf] %vm738, %v715
      %752 = vst.msk [vmem:[#allocation2 + $0x34] sm:$0xf] %vm738, %v717
      %753 = vst.msk [vmem:[#allocation2 + $0x38] sm:$0xf] %vm738, %v719
      %754 = vst.msk [vmem:[#allocation2 + $0x3c] sm:$0xf] %vm738, %v721
      %vm755 = vcmask 1043456
      %v756 = vrot.slane %v200, 4
      %v757 = vrot.slane %v201, 4
      %v758 = vsel %vm755, %v756, %v757
      %v759 = vrot.slane %v202, 4
      %v760 = vsel %vm755, %v757, %v759
      %v761 = vrot.slane %v203, 4
      %v762 = vrot.slane %v204, 4
      %v763 = vsel %vm755, %v761, %v762
      %v764 = vrot.slane %v205, 4
      %v765 = vsel %vm755, %v762, %v764
      %v766 = vrot.slane %v206, 4
      %v767 = vrot.slane %v207, 4
      %v768 = vsel %vm755, %v766, %v767
      %v769 = vrot.slane %v208, 4
      %v770 = vsel %vm755, %v767, %v769
      %v771 = vrot.slane %v209, 4
      %v772 = vrot.slane %v210, 4
      %v773 = vsel %vm755, %v771, %v772
      %v774 = vrot.slane %v211, 4
      %v775 = vsel %vm755, %v772, %v774
      %v776 = vrot.slane %v212, 4
      %v777 = vrot.slane %v213, 4
      %v778 = vsel %vm755, %v776, %v777
      %v779 = vrot.slane %v214, 4
      %v780 = vsel %vm755, %v777, %v779
      %v781 = vrot.slane %v215, 4
      %v782 = vrot.slane %v216, 4
      %v783 = vsel %vm755, %v781, %v782
      %v784 = vrot.slane %v217, 4
      %v785 = vsel %vm755, %v782, %v784
      %v786 = vrot.slane %v218, 4
      %v787 = vrot.slane %v219, 4
      %v788 = vsel %vm755, %v786, %v787
      %v789 = vrot.slane %v220, 4
      %v790 = vsel %vm755, %v787, %v789
      %v791 = vrot.slane %v221, 4
      %v792 = vrot.slane %v222, 4
      %v793 = vsel %vm755, %v791, %v792
      %v794 = vrot.slane %v223, 4
      %v795 = vsel %vm755, %v792, %v794
      %v812 = vpack.c.bf16 %v758, %v758
      %v813 = vpack.c.bf16 %v760, %v760
      %v814 = vpack.c.bf16 %v763, %v763
      %v815 = vpack.c.bf16 %v765, %v765
      %v816 = vpack.c.bf16 %v768, %v768
      %v817 = vpack.c.bf16 %v770, %v770
      %v818 = vpack.c.bf16 %v773, %v773
      %v819 = vpack.c.bf16 %v775, %v775
      %v820 = vpack.c.bf16 %v778, %v778
      %v821 = vpack.c.bf16 %v780, %v780
      %v822 = vpack.c.bf16 %v783, %v783
      %v823 = vpack.c.bf16 %v785, %v785
      %v824 = vpack.c.bf16 %v788, %v788
      %v825 = vpack.c.bf16 %v790, %v790
      %v826 = vpack.c.bf16 %v793, %v793
      %v827 = vpack.c.bf16 %v795, %v795
      %844 = vrot.lane.b32.xlu0 %v812, 16
      %v845 = vpop.permute.xlu0 %844
      %846 = vrot.lane.b32.xlu0 %v813, 16
      %v847 = vpop.permute.xlu0 %846
      %848 = vrot.lane.b32.xlu0 %v814, 16
      %v849 = vpop.permute.xlu0 %848
      %850 = vrot.lane.b32.xlu0 %v815, 16
      %v851 = vpop.permute.xlu0 %850
      %852 = vrot.lane.b32.xlu0 %v816, 16
      %v853 = vpop.permute.xlu0 %852
      %854 = vrot.lane.b32.xlu0 %v817, 16
      %v855 = vpop.permute.xlu0 %854
      %856 = vrot.lane.b32.xlu0 %v818, 16
      %v857 = vpop.permute.xlu0 %856
      %858 = vrot.lane.b32.xlu0 %v819, 16
      %v859 = vpop.permute.xlu0 %858
      %860 = vrot.lane.b32.xlu0 %v820, 16
      %v861 = vpop.permute.xlu0 %860
      %862 = vrot.lane.b32.xlu0 %v821, 16
      %v863 = vpop.permute.xlu0 %862
      %864 = vrot.lane.b32.xlu0 %v822, 16
      %v865 = vpop.permute.xlu0 %864
      %866 = vrot.lane.b32.xlu0 %v823, 16
      %v867 = vpop.permute.xlu0 %866
      %868 = vrot.lane.b32.xlu0 %v824, 16
      %v869 = vpop.permute.xlu0 %868
      %870 = vrot.lane.b32.xlu0 %v825, 16
      %v871 = vpop.permute.xlu0 %870
      %872 = vrot.lane.b32.xlu0 %v826, 16
      %v873 = vpop.permute.xlu0 %872
      %874 = vrot.lane.b32.xlu0 %v827, 16
      %v875 = vpop.permute.xlu0 %874
      %vm892 = vcmask 158848
      %893 = vst.msk [vmem:[#allocation2] sm:$0xf] %vm892, %v845
      %894 = vst.msk [vmem:[#allocation2 + $0x4] sm:$0xf] %vm892, %v847
      %895 = vst.msk [vmem:[#allocation2 + $0x8] sm:$0xf] %vm892, %v849
      %896 = vst.msk [vmem:[#allocation2 + $0xc] sm:$0xf] %vm892, %v851
      %897 = vst.msk [vmem:[#allocation2 + $0x10] sm:$0xf] %vm892, %v853
      %898 = vst.msk [vmem:[#allocation2 + $0x14] sm:$0xf] %vm892, %v855
      %899 = vst.msk [vmem:[#allocation2 + $0x18] sm:$0xf] %vm892, %v857
      %900 = vst.msk [vmem:[#allocation2 + $0x1c] sm:$0xf] %vm892, %v859
      %901 = vst.msk [vmem:[#allocation2 + $0x20] sm:$0xf] %vm892, %v861
      %902 = vst.msk [vmem:[#allocation2 + $0x24] sm:$0xf] %vm892, %v863
      %903 = vst.msk [vmem:[#allocation2 + $0x28] sm:$0xf] %vm892, %v865
      %904 = vst.msk [vmem:[#allocation2 + $0x2c] sm:$0xf] %vm892, %v867
      %905 = vst.msk [vmem:[#allocation2 + $0x30] sm:$0xf] %vm892, %v869
      %906 = vst.msk [vmem:[#allocation2 + $0x34] sm:$0xf] %vm892, %v871
      %907 = vst.msk [vmem:[#allocation2 + $0x38] sm:$0xf] %vm892, %v873
      %908 = vst.msk [vmem:[#allocation2 + $0x3c] sm:$0xf] %vm892, %v875
      %v909 = vpack.c.bf16 %v224, %v224
      %v910 = vpack.c.bf16 %v225, %v225
      %927 = vrot.lane.b32.xlu0 %v238, 20
      %v928 = vpop.permute.xlu0 %927
      %929 = vrot.lane.b32.xlu0 %v239, 20
      %v930 = vpop.permute.xlu0 %929
      %931 = vrot.lane.b32.xlu0 %v240, 20
      %v932 = vpop.permute.xlu0 %931
      %933 = vrot.lane.b32.xlu0 %v241, 20
      %v934 = vpop.permute.xlu0 %933
      %935 = vrot.lane.b32.xlu0 %v242, 20
      %v936 = vpop.permute.xlu0 %935
      %937 = vrot.lane.b32.xlu0 %v243, 20
      %v938 = vpop.permute.xlu0 %937
      %939 = vrot.lane.b32.xlu0 %v244, 20
      %v940 = vpop.permute.xlu0 %939
      %941 = vrot.lane.b32.xlu0 %v245, 20
      %v942 = vpop.permute.xlu0 %941
      %943 = vrot.lane.b32.xlu0 %v246, 20
      %v944 = vpop.permute.xlu0 %943
      %945 = vrot.lane.b32.xlu0 %v247, 20
      %v946 = vpop.permute.xlu0 %945
      %947 = vrot.lane.b32.xlu0 %v248, 20
      %v948 = vpop.permute.xlu0 %947
      %949 = vrot.lane.b32.xlu0 %v249, 20
      %v950 = vpop.permute.xlu0 %949
      %951 = vrot.lane.b32.xlu0 %v250, 20
      %v952 = vpop.permute.xlu0 %951
      %953 = vrot.lane.b32.xlu0 %v251, 20
      %v954 = vpop.permute.xlu0 %953
      %955 = vrot.lane.b32.xlu0 %v909, 20
      %v956 = vpop.permute.xlu0 %955
      %957 = vrot.lane.b32.xlu0 %v910, 20
      %v958 = vpop.permute.xlu0 %957
      %vm975 = vcmask 191648
      %976 = vst.msk [vmem:[#allocation2] sm:$0xf] %vm975, %v928
      %977 = vst.msk [vmem:[#allocation2 + $0x4] sm:$0xf] %vm975, %v930
      %978 = vst.msk [vmem:[#allocation2 + $0x8] sm:$0xf] %vm975, %v932
      %979 = vst.msk [vmem:[#allocation2 + $0xc] sm:$0xf] %vm975, %v934
      %980 = vst.msk [vmem:[#allocation2 + $0x10] sm:$0xf] %vm975, %v936
      %981 = vst.msk [vmem:[#allocation2 + $0x14] sm:$0xf] %vm975, %v938
      %982 = vst.msk [vmem:[#allocation2 + $0x18] sm:$0xf] %vm975, %v940
      %983 = vst.msk [vmem:[#allocation2 + $0x1c] sm:$0xf] %vm975, %v942
      %984 = vst.msk [vmem:[#allocation2 + $0x20] sm:$0xf] %vm975, %v944
      %985 = vst.msk [vmem:[#allocation2 + $0x24] sm:$0xf] %vm975, %v946
      %986 = vst.msk [vmem:[#allocation2 + $0x28] sm:$0xf] %vm975, %v948
      %987 = vst.msk [vmem:[#allocation2 + $0x2c] sm:$0xf] %vm975, %v950
      %988 = vst.msk [vmem:[#allocation2 + $0x30] sm:$0xf] %vm975, %v952
      %989 = vst.msk [vmem:[#allocation2 + $0x34] sm:$0xf] %vm975, %v954
      %990 = vst.msk [vmem:[#allocation2 + $0x38] sm:$0xf] %vm975, %v956
      %991 = vst.msk [vmem:[#allocation2 + $0x3c] sm:$0xf] %vm975, %v958
      %v995 = vrot.slane %v224, 1
      %v996 = vrot.slane %v225, 1
      %v997 = vsel %vm293, %v995, %v996
      %v998 = vrot.slane %v226, 1
      %v999 = vsel %vm293, %v996, %v998
      %v1002 = vpack.c.bf16 %v997, %v997
      %v1003 = vpack.c.bf16 %v999, %v999
      %1006 = vrot.lane.b32.xlu0 %v352, 24
      %v1007 = vpop.permute.xlu0 %1006
      %1008 = vrot.lane.b32.xlu0 %v353, 24
      %v1009 = vpop.permute.xlu0 %1008
      %1010 = vrot.lane.b32.xlu0 %v354, 24
      %v1011 = vpop.permute.xlu0 %1010
      %1012 = vrot.lane.b32.xlu0 %v355, 24
      %v1013 = vpop.permute.xlu0 %1012
      %1014 = vrot.lane.b32.xlu0 %v356, 24
      %v1015 = vpop.permute.xlu0 %1014
      %1016 = vrot.lane.b32.xlu0 %v357, 24
      %v1017 = vpop.permute.xlu0 %1016
      %1018 = vrot.lane.b32.xlu0 %v358, 24
      %v1019 = vpop.permute.xlu0 %1018
      %1020 = vrot.lane.b32.xlu0 %v359, 24
      %v1021 = vpop.permute.xlu0 %1020
      %1022 = vrot.lane.b32.xlu0 %v360, 24
      %v1023 = vpop.permute.xlu0 %1022
      %1024 = vrot.lane.b32.xlu0 %v361, 24
      %v1025 = vpop.permute.xlu0 %1024
      %1026 = vrot.lane.b32.xlu0 %v362, 24
      %v1027 = vpop.permute.xlu0 %1026
      %1028 = vrot.lane.b32.xlu0 %v363, 24
      %v1029 = vpop.permute.xlu0 %1028
      %1030 = vrot.lane.b32.xlu0 %v364, 24
      %v1031 = vpop.permute.xlu0 %1030
      %1032 = vrot.lane.b32.xlu0 %v365, 24
      %v1033 = vpop.permute.xlu0 %1032
      %1034 = vrot.lane.b32.xlu0 %v1002, 24
      %v1035 = vpop.permute.xlu0 %1034
      %1036 = vrot.lane.b32.xlu0 %v1003, 24
      %v1037 = vpop.permute.xlu0 %1036
      %vm1054 = vcmask 224448
      %1055 = vst.msk [vmem:[#allocation2] sm:$0xf] %vm1054, %v1007
      %1056 = vst.msk [vmem:[#allocation2 + $0x4] sm:$0xf] %vm1054, %v1009
      %1057 = vst.msk [vmem:[#allocation2 + $0x8] sm:$0xf] %vm1054, %v1011
      %1058 = vst.msk [vmem:[#allocation2 + $0xc] sm:$0xf] %vm1054, %v1013
      %1059 = vst.msk [vmem:[#allocation2 + $0x10] sm:$0xf] %vm1054, %v1015
      %1060 = vst.msk [vmem:[#allocation2 + $0x14] sm:$0xf] %vm1054, %v1017
      %1061 = vst.msk [vmem:[#allocation2 + $0x18] sm:$0xf] %vm1054, %v1019
      %1062 = vst.msk [vmem:[#allocation2 + $0x1c] sm:$0xf] %vm1054, %v1021
      %1063 = vst.msk [vmem:[#allocation2 + $0x20] sm:$0xf] %vm1054, %v1023
      %1064 = vst.msk [vmem:[#allocation2 + $0x24] sm:$0xf] %vm1054, %v1025
      %1065 = vst.msk [vmem:[#allocation2 + $0x28] sm:$0xf] %vm1054, %v1027
      %1066 = vst.msk [vmem:[#allocation2 + $0x2c] sm:$0xf] %vm1054, %v1029
      %1067 = vst.msk [vmem:[#allocation2 + $0x30] sm:$0xf] %vm1054, %v1031
      %1068 = vst.msk [vmem:[#allocation2 + $0x34] sm:$0xf] %vm1054, %v1033
      %1069 = vst.msk [vmem:[#allocation2 + $0x38] sm:$0xf] %vm1054, %v1035
      %1070 = vst.msk [vmem:[#allocation2 + $0x3c] sm:$0xf] %vm1054, %v1037
      %v1071 = vrot.slane %v224, 2
      %v1072 = vrot.slane %v225, 2
      %v1073 = vsel %vm447, %v1071, %v1072
      %v1074 = vrot.slane %v226, 2
      %v1075 = vsel %vm447, %v1072, %v1074
      %v1078 = vpack.c.bf16 %v1073, %v1073
      %v1079 = vpack.c.bf16 %v1075, %v1075
      %1082 = vrot.lane.b32.xlu0 %v506, 28
      %v1083 = vpop.permute.xlu0 %1082
      %1084 = vrot.lane.b32.xlu0 %v507, 28
      %v1085 = vpop.permute.xlu0 %1084
      %1086 = vrot.lane.b32.xlu0 %v508, 28
      %v1087 = vpop.permute.xlu0 %1086
      %1088 = vrot.lane.b32.xlu0 %v509, 28
      %v1089 = vpop.permute.xlu0 %1088
      %1090 = vrot.lane.b32.xlu0 %v510, 28
      %v1091 = vpop.permute.xlu0 %1090
      %1092 = vrot.lane.b32.xlu0 %v511, 28
      %v1093 = vpop.permute.xlu0 %1092
      %1094 = vrot.lane.b32.xlu0 %v512, 28
      %v1095 = vpop.permute.xlu0 %1094
      %1096 = vrot.lane.b32.xlu0 %v513, 28
      %v1097 = vpop.permute.xlu0 %1096
      %1098 = vrot.lane.b32.xlu0 %v514, 28
      %v1099 = vpop.permute.xlu0 %1098
      %1100 = vrot.lane.b32.xlu0 %v515, 28
      %v1101 = vpop.permute.xlu0 %1100
      %1102 = vrot.lane.b32.xlu0 %v516, 28
      %v1103 = vpop.permute.xlu0 %1102
      %1104 = vrot.lane.b32.xlu0 %v517, 28
      %v1105 = vpop.permute.xlu0 %1104
      %1106 = vrot.lane.b32.xlu0 %v518, 28
      %v1107 = vpop.permute.xlu0 %1106
      %1108 = vrot.lane.b32.xlu0 %v519, 28
      %v1109 = vpop.permute.xlu0 %1108
      %1110 = vrot.lane.b32.xlu0 %v1078, 28
      %v1111 = vpop.permute.xlu0 %1110
      %1112 = vrot.lane.b32.xlu0 %v1079, 28
      %v1113 = vpop.permute.xlu0 %1112
      %vm1130 = vcmask 257248
      %1131 = vst.msk [vmem:[#allocation2] sm:$0xf] %vm1130, %v1083
      %1132 = vst.msk [vmem:[#allocation2 + $0x4] sm:$0xf] %vm1130, %v1085
      %1133 = vst.msk [vmem:[#allocation2 + $0x8] sm:$0xf] %vm1130, %v1087
      %1134 = vst.msk [vmem:[#allocation2 + $0xc] sm:$0xf] %vm1130, %v1089
      %1135 = vst.msk [vmem:[#allocation2 + $0x10] sm:$0xf] %vm1130, %v1091
      %1136 = vst.msk [vmem:[#allocation2 + $0x14] sm:$0xf] %vm1130, %v1093
      %1137 = vst.msk [vmem:[#allocation2 + $0x18] sm:$0xf] %vm1130, %v1095
      %1138 = vst.msk [vmem:[#allocation2 + $0x1c] sm:$0xf] %vm1130, %v1097
      %1139 = vst.msk [vmem:[#allocation2 + $0x20] sm:$0xf] %vm1130, %v1099
      %1140 = vst.msk [vmem:[#allocation2 + $0x24] sm:$0xf] %vm1130, %v1101
      %1141 = vst.msk [vmem:[#allocation2 + $0x28] sm:$0xf] %vm1130, %v1103
      %1142 = vst.msk [vmem:[#allocation2 + $0x2c] sm:$0xf] %vm1130, %v1105
      %1143 = vst.msk [vmem:[#allocation2 + $0x30] sm:$0xf] %vm1130, %v1107
      %1144 = vst.msk [vmem:[#allocation2 + $0x34] sm:$0xf] %vm1130, %v1109
      %1145 = vst.msk [vmem:[#allocation2 + $0x38] sm:$0xf] %vm1130, %v1111
      %1146 = vst.msk [vmem:[#allocation2 + $0x3c] sm:$0xf] %vm1130, %v1113
      %v1147 = vrot.slane %v224, 3
      %v1148 = vrot.slane %v225, 3
      %v1149 = vsel %vm601, %v1147, %v1148
      %v1150 = vrot.slane %v226, 3
      %v1151 = vsel %vm601, %v1148, %v1150
      %v1154 = vpack.c.bf16 %v1149, %v1149
      %v1155 = vpack.c.bf16 %v1151, %v1151
      %1158 = vrot.lane.b32.xlu0 %v660, 32
      %v1159 = vpop.permute.xlu0 %1158
      %1160 = vrot.lane.b32.xlu0 %v661, 32
      %v1161 = vpop.permute.xlu0 %1160
      %1162 = vrot.lane.b32.xlu0 %v662, 32
      %v1163 = vpop.permute.xlu0 %1162
      %1164 = vrot.lane.b32.xlu0 %v663, 32
      %v1165 = vpop.permute.xlu0 %1164
      %1166 = vrot.lane.b32.xlu0 %v664, 32
      %v1167 = vpop.permute.xlu0 %1166
      %1168 = vrot.lane.b32.xlu0 %v665, 32
      %v1169 = vpop.permute.xlu0 %1168
      %1170 = vrot.lane.b32.xlu0 %v666, 32
      %v1171 = vpop.permute.xlu0 %1170
      %1172 = vrot.lane.b32.xlu0 %v667, 32
      %v1173 = vpop.permute.xlu0 %1172
      %1174 = vrot.lane.b32.xlu0 %v668, 32
      %v1175 = vpop.permute.xlu0 %1174
      %1176 = vrot.lane.b32.xlu0 %v669, 32
      %v1177 = vpop.permute.xlu0 %1176
      %1178 = vrot.lane.b32.xlu0 %v670, 32
      %v1179 = vpop.permute.xlu0 %1178
      %1180 = vrot.lane.b32.xlu0 %v671, 32
      %v1181 = vpop.permute.xlu0 %1180
      %1182 = vrot.lane.b32.xlu0 %v672, 32
      %v1183 = vpop.permute.xlu0 %1182
      %1184 = vrot.lane.b32.xlu0 %v673, 32
      %v1185 = vpop.permute.xlu0 %1184
      %1186 = vrot.lane.b32.xlu0 %v1154, 32
      %v1187 = vpop.permute.xlu0 %1186
      %1188 = vrot.lane.b32.xlu0 %v1155, 32
      %v1189 = vpop.permute.xlu0 %1188
      %vm1206 = vcmask 290048
      %1207 = vst.msk [vmem:[#allocation2] sm:$0xf] %vm1206, %v1159
      %1208 = vst.msk [vmem:[#allocation2 + $0x4] sm:$0xf] %vm1206, %v1161
      %1209 = vst.msk [vmem:[#allocation2 + $0x8] sm:$0xf] %vm1206, %v1163
      %1210 = vst.msk [vmem:[#allocation2 + $0xc] sm:$0xf] %vm1206, %v1165
      %1211 = vst.msk [vmem:[#allocation2 + $0x10] sm:$0xf] %vm1206, %v1167
      %1212 = vst.msk [vmem:[#allocation2 + $0x14] sm:$0xf] %vm1206, %v1169
      %1213 = vst.msk [vmem:[#allocation2 + $0x18] sm:$0xf] %vm1206, %v1171
      %1214 = vst.msk [vmem:[#allocation2 + $0x1c] sm:$0xf] %vm1206, %v1173
      %1215 = vst.msk [vmem:[#allocation2 + $0x20] sm:$0xf] %vm1206, %v1175
      %1216 = vst.msk [vmem:[#allocation2 + $0x24] sm:$0xf] %vm1206, %v1177
      %1217 = vst.msk [vmem:[#allocation2 + $0x28] sm:$0xf] %vm1206, %v1179
      %1218 = vst.msk [vmem:[#allocation2 + $0x2c] sm:$0xf] %vm1206, %v1181
      %1219 = vst.msk [vmem:[#allocation2 + $0x30] sm:$0xf] %vm1206, %v1183
      %1220 = vst.msk [vmem:[#allocation2 + $0x34] sm:$0xf] %vm1206, %v1185
      %1221 = vst.msk [vmem:[#allocation2 + $0x38] sm:$0xf] %vm1206, %v1187
      %1222 = vst.msk [vmem:[#allocation2 + $0x3c] sm:$0xf] %vm1206, %v1189
      %v1223 = vrot.slane %v224, 4
      %v1224 = vrot.slane %v225, 4
      %v1225 = vsel %vm755, %v1223, %v1224
      %v1226 = vrot.slane %v226, 4
      %v1227 = vsel %vm755, %v1224, %v1226
      %v1230 = vpack.c.bf16 %v1225, %v1225
      %v1231 = vpack.c.bf16 %v1227, %v1227
      %1234 = vrot.lane.b32.xlu0 %v814, 36
      %v1235 = vpop.permute.xlu0 %1234
      %1236 = vrot.lane.b32.xlu0 %v815, 36
      %v1237 = vpop.permute.xlu0 %1236
      %1238 = vrot.lane.b32.xlu0 %v816, 36
      %v1239 = vpop.permute.xlu0 %1238
      %1240 = vrot.lane.b32.xlu0 %v817, 36
      %v1241 = vpop.permute.xlu0 %1240
      %1242 = vrot.lane.b32.xlu0 %v818, 36
      %v1243 = vpop.permute.xlu0 %1242
      %1244 = vrot.lane.b32.xlu0 %v819, 36
      %v1245 = vpop.permute.xlu0 %1244
      %1246 = vrot.lane.b32.xlu0 %v820, 36
      %v1247 = vpop.permute.xlu0 %1246
      %1248 = vrot.lane.b32.xlu0 %v821, 36
      %v1249 = vpop.permute.xlu0 %1248
      %1250 = vrot.lane.b32.xlu0 %v822, 36
      %v1251 = vpop.permute.xlu0 %1250
      %1252 = vrot.lane.b32.xlu0 %v823, 36
      %v1253 = vpop.permute.xlu0 %1252
      %1254 = vrot.lane.b32.xlu0 %v824, 36
      %v1255 = vpop.permute.xlu0 %1254
      %1256 = vrot.lane.b32.xlu0 %v825, 36
      %v1257 = vpop.permute.xlu0 %1256
      %1258 = vrot.lane.b32.xlu0 %v826, 36
      %v1259 = vpop.permute.xlu0 %1258
      %1260 = vrot.lane.b32.xlu0 %v827, 36
      %v1261 = vpop.permute.xlu0 %1260
      %1262 = vrot.lane.b32.xlu0 %v1230, 36
      %v1263 = vpop.permute.xlu0 %1262
      %1264 = vrot.lane.b32.xlu0 %v1231, 36
      %v1265 = vpop.permute.xlu0 %1264
      %vm1282 = vcmask 322848
      %1283 = vst.msk [vmem:[#allocation2] sm:$0xf] %vm1282, %v1235
      %1284 = vst.msk [vmem:[#allocation2 + $0x4] sm:$0xf] %vm1282, %v1237
      %1285 = vst.msk [vmem:[#allocation2 + $0x8] sm:$0xf] %vm1282, %v1239
      %1286 = vst.msk [vmem:[#allocation2 + $0xc] sm:$0xf] %vm1282, %v1241
      %1287 = vst.msk [vmem:[#allocation2 + $0x10] sm:$0xf] %vm1282, %v1243
      %1288 = vst.msk [vmem:[#allocation2 + $0x14] sm:$0xf] %vm1282, %v1245
      %1289 = vst.msk [vmem:[#allocation2 + $0x18] sm:$0xf] %vm1282, %v1247
      %1290 = vst.msk [vmem:[#allocation2 + $0x1c] sm:$0xf] %vm1282, %v1249
      %1291 = vst.msk [vmem:[#allocation2 + $0x20] sm:$0xf] %vm1282, %v1251
      %1292 = vst.msk [vmem:[#allocation2 + $0x24] sm:$0xf] %vm1282, %v1253
      %1293 = vst.msk [vmem:[#allocation2 + $0x28] sm:$0xf] %vm1282, %v1255
      %1294 = vst.msk [vmem:[#allocation2 + $0x2c] sm:$0xf] %vm1282, %v1257
      %1295 = vst.msk [vmem:[#allocation2 + $0x30] sm:$0xf] %vm1282, %v1259
      %1296 = vst.msk [vmem:[#allocation2 + $0x34] sm:$0xf] %vm1282, %v1261
      %1297 = vst.msk [vmem:[#allocation2 + $0x38] sm:$0xf] %vm1282, %v1263
      %1298 = vst.msk [vmem:[#allocation2 + $0x3c] sm:$0xf] %vm1282, %v1265
      %v1299 = vpack.c.bf16 %v227, %v227
      %v1300 = vpack.c.bf16 %v228, %v228
      %1303 = vrot.lane.b32.xlu0 %v240, 40
      %v1304 = vpop.permute.xlu0 %1303
      %1305 = vrot.lane.b32.xlu0 %v241, 40
      %v1306 = vpop.permute.xlu0 %1305
      %1307 = vrot.lane.b32.xlu0 %v242, 40
      %v1308 = vpop.permute.xlu0 %1307
      %1309 = vrot.lane.b32.xlu0 %v243, 40
      %v1310 = vpop.permute.xlu0 %1309
      %1311 = vrot.lane.b32.xlu0 %v244, 40
      %v1312 = vpop.permute.xlu0 %1311
      %1313 = vrot.lane.b32.xlu0 %v245, 40
      %v1314 = vpop.permute.xlu0 %1313
      %1315 = vrot.lane.b32.xlu0 %v246, 40
      %v1316 = vpop.permute.xlu0 %1315
      %1317 = vrot.lane.b32.xlu0 %v247, 40
      %v1318 = vpop.permute.xlu0 %1317
      %1319 = vrot.lane.b32.xlu0 %v248, 40
      %v1320 = vpop.permute.xlu0 %1319
      %1321 = vrot.lane.b32.xlu0 %v249, 40
      %v1322 = vpop.permute.xlu0 %1321
      %1323 = vrot.lane.b32.xlu0 %v250, 40
      %v1324 = vpop.permute.xlu0 %1323
      %1325 = vrot.lane.b32.xlu0 %v251, 40
      %v1326 = vpop.permute.xlu0 %1325
      %1327 = vrot.lane.b32.xlu0 %v909, 40
      %v1328 = vpop.permute.xlu0 %1327
      %1329 = vrot.lane.b32.xlu0 %v910, 40
      %v1330 = vpop.permute.xlu0 %1329
      %1331 = vrot.lane.b32.xlu0 %v1299, 40
      %v1332 = vpop.permute.xlu0 %1331
      %1333 = vrot.lane.b32.xlu0 %v1300, 40
      %v1334 = vpop.permute.xlu0 %1333
      %vm1351 = vcmask 355648
      %1352 = vst.msk [vmem:[#allocation2] sm:$0xf] %vm1351, %v1304
      %1353 = vst.msk [vmem:[#allocation2 + $0x4] sm:$0xf] %vm1351, %v1306
      %1354 = vst.msk [vmem:[#allocation2 + $0x8] sm:$0xf] %vm1351, %v1308
      %1355 = vst.msk [vmem:[#allocation2 + $0xc] sm:$0xf] %vm1351, %v1310
      %1356 = vst.msk [vmem:[#allocation2 + $0x10] sm:$0xf] %vm1351, %v1312
      %1357 = vst.msk [vmem:[#allocation2 + $0x14] sm:$0xf] %vm1351, %v1314
      %1358 = vst.msk [vmem:[#allocation2 + $0x18] sm:$0xf] %vm1351, %v1316
      %1359 = vst.msk [vmem:[#allocation2 + $0x1c] sm:$0xf] %vm1351, %v1318
      %1360 = vst.msk [vmem:[#allocation2 + $0x20] sm:$0xf] %vm1351, %v1320
      %1361 = vst.msk [vmem:[#allocation2 + $0x24] sm:$0xf] %vm1351, %v1322
      %1362 = vst.msk [vmem:[#allocation2 + $0x28] sm:$0xf] %vm1351, %v1324
      %1363 = vst.msk [vmem:[#allocation2 + $0x2c] sm:$0xf] %vm1351, %v1326
      %1364 = vst.msk [vmem:[#allocation2 + $0x30] sm:$0xf] %vm1351, %v1328
      %1365 = vst.msk [vmem:[#allocation2 + $0x34] sm:$0xf] %vm1351, %v1330
      %1366 = vst.msk [vmem:[#allocation2 + $0x38] sm:$0xf] %vm1351, %v1332
      %1367 = vst.msk [vmem:[#allocation2 + $0x3c] sm:$0xf] %vm1351, %v1334
      %v1371 = vrot.slane %v227, 1
      %v1372 = vrot.slane %v228, 1
      %v1373 = vsel %vm293, %v1371, %v1372
      %v1374 = vrot.slane %v229, 1
      %v1375 = vsel %vm293, %v1372, %v1374
      %v1378 = vpack.c.bf16 %v1373, %v1373
      %v1379 = vpack.c.bf16 %v1375, %v1375
      %1382 = vrot.lane.b32.xlu0 %v354, 44
      %v1383 = vpop.permute.xlu0 %1382
      %1384 = vrot.lane.b32.xlu0 %v355, 44
      %v1385 = vpop.permute.xlu0 %1384
      %1386 = vrot.lane.b32.xlu0 %v356, 44
      %v1387 = vpop.permute.xlu0 %1386
      %1388 = vrot.lane.b32.xlu0 %v357, 44
      %v1389 = vpop.permute.xlu0 %1388
      %1390 = vrot.lane.b32.xlu0 %v358, 44
      %v1391 = vpop.permute.xlu0 %1390
      %1392 = vrot.lane.b32.xlu0 %v359, 44
      %v1393 = vpop.permute.xlu0 %1392
      %1394 = vrot.lane.b32.xlu0 %v360, 44
      %v1395 = vpop.permute.xlu0 %1394
      %1396 = vrot.lane.b32.xlu0 %v361, 44
      %v1397 = vpop.permute.xlu0 %1396
      %1398 = vrot.lane.b32.xlu0 %v362, 44
      %v1399 = vpop.permute.xlu0 %1398
      %1400 = vrot.lane.b32.xlu0 %v363, 44
      %v1401 = vpop.permute.xlu0 %1400
      %1402 = vrot.lane.b32.xlu0 %v364, 44
      %v1403 = vpop.permute.xlu0 %1402
      %1404 = vrot.lane.b32.xlu0 %v365, 44
      %v1405 = vpop.permute.xlu0 %1404
      %1406 = vrot.lane.b32.xlu0 %v1002, 44
      %v1407 = vpop.permute.xlu0 %1406
      %1408 = vrot.lane.b32.xlu0 %v1003, 44
      %v1409 = vpop.permute.xlu0 %1408
      %1410 = vrot.lane.b32.xlu0 %v1378, 44
      %v1411 = vpop.permute.xlu0 %1410
      %1412 = vrot.lane.b32.xlu0 %v1379, 44
      %v1413 = vpop.permute.xlu0 %1412
      %vm1430 = vcmask 388448
      %1431 = vst.msk [vmem:[#allocation2] sm:$0xf] %vm1430, %v1383
      %1432 = vst.msk [vmem:[#allocation2 + $0x4] sm:$0xf] %vm1430, %v1385
      %1433 = vst.msk [vmem:[#allocation2 + $0x8] sm:$0xf] %vm1430, %v1387
      %1434 = vst.msk [vmem:[#allocation2 + $0xc] sm:$0xf] %vm1430, %v1389
      %1435 = vst.msk [vmem:[#allocation2 + $0x10] sm:$0xf] %vm1430, %v1391
      %1436 = vst.msk [vmem:[#allocation2 + $0x14] sm:$0xf] %vm1430, %v1393
      %1437 = vst.msk [vmem:[#allocation2 + $0x18] sm:$0xf] %vm1430, %v1395
      %1438 = vst.msk [vmem:[#allocation2 + $0x1c] sm:$0xf] %vm1430, %v1397
      %1439 = vst.msk [vmem:[#allocation2 + $0x20] sm:$0xf] %vm1430, %v1399
      %1440 = vst.msk [vmem:[#allocation2 + $0x24] sm:$0xf] %vm1430, %v1401
      %1441 = vst.msk [vmem:[#allocation2 + $0x28] sm:$0xf] %vm1430, %v1403
      %1442 = vst.msk [vmem:[#allocation2 + $0x2c] sm:$0xf] %vm1430, %v1405
      %1443 = vst.msk [vmem:[#allocation2 + $0x30] sm:$0xf] %vm1430, %v1407
      %1444 = vst.msk [vmem:[#allocation2 + $0x34] sm:$0xf] %vm1430, %v1409
      %1445 = vst.msk [vmem:[#allocation2 + $0x38] sm:$0xf] %vm1430, %v1411
      %1446 = vst.msk [vmem:[#allocation2 + $0x3c] sm:$0xf] %vm1430, %v1413
      %v1447 = vrot.slane %v227, 2
      %v1448 = vrot.slane %v228, 2
      %v1449 = vsel %vm447, %v1447, %v1448
      %v1450 = vrot.slane %v229, 2
      %v1451 = vsel %vm447, %v1448, %v1450
      %v1454 = vpack.c.bf16 %v1449, %v1449
      %v1455 = vpack.c.bf16 %v1451, %v1451
      %1458 = vrot.lane.b32.xlu0 %v508, 48
      %v1459 = vpop.permute.xlu0 %1458
      %1460 = vrot.lane.b32.xlu0 %v509, 48
      %v1461 = vpop.permute.xlu0 %1460
      %1462 = vrot.lane.b32.xlu0 %v510, 48
      %v1463 = vpop.permute.xlu0 %1462
      %1464 = vrot.lane.b32.xlu0 %v511, 48
      %v1465 = vpop.permute.xlu0 %1464
      %1466 = vrot.lane.b32.xlu0 %v512, 48
      %v1467 = vpop.permute.xlu0 %1466
      %1468 = vrot.lane.b32.xlu0 %v513, 48
      %v1469 = vpop.permute.xlu0 %1468
      %1470 = vrot.lane.b32.xlu0 %v514, 48
      %v1471 = vpop.permute.xlu0 %1470
      %1472 = vrot.lane.b32.xlu0 %v515, 48
      %v1473 = vpop.permute.xlu0 %1472
      %1474 = vrot.lane.b32.xlu0 %v516, 48
      %v1475 = vpop.permute.xlu0 %1474
      %1476 = vrot.lane.b32.xlu0 %v517, 48
      %v1477 = vpop.permute.xlu0 %1476
      %1478 = vrot.lane.b32.xlu0 %v518, 48
      %v1479 = vpop.permute.xlu0 %1478
      %1480 = vrot.lane.b32.xlu0 %v519, 48
      %v1481 = vpop.permute.xlu0 %1480
      %1482 = vrot.lane.b32.xlu0 %v1078, 48
      %v1483 = vpop.permute.xlu0 %1482
      %1484 = vrot.lane.b32.xlu0 %v1079, 48
      %v1485 = vpop.permute.xlu0 %1484
      %1486 = vrot.lane.b32.xlu0 %v1454, 48
      %v1487 = vpop.permute.xlu0 %1486
      %1488 = vrot.lane.b32.xlu0 %v1455, 48
      %v1489 = vpop.permute.xlu0 %1488
      %vm1506 = vcmask 421248
      %1507 = vst.msk [vmem:[#allocation2] sm:$0xf] %vm1506, %v1459
      %1508 = vst.msk [vmem:[#allocation2 + $0x4] sm:$0xf] %vm1506, %v1461
      %1509 = vst.msk [vmem:[#allocation2 + $0x8] sm:$0xf] %vm1506, %v1463
      %1510 = vst.msk [vmem:[#allocation2 + $0xc] sm:$0xf] %vm1506, %v1465
      %1511 = vst.msk [vmem:[#allocation2 + $0x10] sm:$0xf] %vm1506, %v1467
      %1512 = vst.msk [vmem:[#allocation2 + $0x14] sm:$0xf] %vm1506, %v1469
      %1513 = vst.msk [vmem:[#allocation2 + $0x18] sm:$0xf] %vm1506, %v1471
      %1514 = vst.msk [vmem:[#allocation2 + $0x1c] sm:$0xf] %vm1506, %v1473
      %1515 = vst.msk [vmem:[#allocation2 + $0x20] sm:$0xf] %vm1506, %v1475
      %1516 = vst.msk [vmem:[#allocation2 + $0x24] sm:$0xf] %vm1506, %v1477
      %1517 = vst.msk [vmem:[#allocation2 + $0x28] sm:$0xf] %vm1506, %v1479
      %1518 = vst.msk [vmem:[#allocation2 + $0x2c] sm:$0xf] %vm1506, %v1481
      %1519 = vst.msk [vmem:[#allocation2 + $0x30] sm:$0xf] %vm1506, %v1483
      %1520 = vst.msk [vmem:[#allocation2 + $0x34] sm:$0xf] %vm1506, %v1485
      %1521 = vst.msk [vmem:[#allocation2 + $0x38] sm:$0xf] %vm1506, %v1487
      %1522 = vst.msk [vmem:[#allocation2 + $0x3c] sm:$0xf] %vm1506, %v1489
      %v1523 = vrot.slane %v227, 3
      %v1524 = vrot.slane %v228, 3
      %v1525 = vsel %vm601, %v1523, %v1524
      %v1526 = vrot.slane %v229, 3
      %v1527 = vsel %vm601, %v1524, %v1526
      %v1530 = vpack.c.bf16 %v1525, %v1525
      %v1531 = vpack.c.bf16 %v1527, %v1527
      %1534 = vrot.lane.b32.xlu0 %v662, 52
      %v1535 = vpop.permute.xlu0 %1534
      %1536 = vrot.lane.b32.xlu0 %v663, 52
      %v1537 = vpop.permute.xlu0 %1536
      %1538 = vrot.lane.b32.xlu0 %v664, 52
      %v1539 = vpop.permute.xlu0 %1538
      %1540 = vrot.lane.b32.xlu0 %v665, 52
      %v1541 = vpop.permute.xlu0 %1540
      %1542 = vrot.lane.b32.xlu0 %v666, 52
      %v1543 = vpop.permute.xlu0 %1542
      %1544 = vrot.lane.b32.xlu0 %v667, 52
      %v1545 = vpop.permute.xlu0 %1544
      %1546 = vrot.lane.b32.xlu0 %v668, 52
      %v1547 = vpop.permute.xlu0 %1546
      %1548 = vrot.lane.b32.xlu0 %v669, 52
      %v1549 = vpop.permute.xlu0 %1548
      %1550 = vrot.lane.b32.xlu0 %v670, 52
      %v1551 = vpop.permute.xlu0 %1550
      %1552 = vrot.lane.b32.xlu0 %v671, 52
      %v1553 = vpop.permute.xlu0 %1552
      %1554 = vrot.lane.b32.xlu0 %v672, 52
      %v1555 = vpop.permute.xlu0 %1554
      %1556 = vrot.lane.b32.xlu0 %v673, 52
      %v1557 = vpop.permute.xlu0 %1556
      %1558 = vrot.lane.b32.xlu0 %v1154, 52
      %v1559 = vpop.permute.xlu0 %1558
      %1560 = vrot.lane.b32.xlu0 %v1155, 52
      %v1561 = vpop.permute.xlu0 %1560
      %1562 = vrot.lane.b32.xlu0 %v1530, 52
      %v1563 = vpop.permute.xlu0 %1562
      %1564 = vrot.lane.b32.xlu0 %v1531, 52
      %v1565 = vpop.permute.xlu0 %1564
      %vm1582 = vcmask 454048
      %1583 = vst.msk [vmem:[#allocation2] sm:$0xf] %vm1582, %v1535
      %1584 = vst.msk [vmem:[#allocation2 + $0x4] sm:$0xf] %vm1582, %v1537
      %1585 = vst.msk [vmem:[#allocation2 + $0x8] sm:$0xf] %vm1582, %v1539
      %1586 = vst.msk [vmem:[#allocation2 + $0xc] sm:$0xf] %vm1582, %v1541
      %1587 = vst.msk [vmem:[#allocation2 + $0x10] sm:$0xf] %vm1582, %v1543
      %1588 = vst.msk [vmem:[#allocation2 + $0x14] sm:$0xf] %vm1582, %v1545
      %1589 = vst.msk [vmem:[#allocation2 + $0x18] sm:$0xf] %vm1582, %v1547
      %1590 = vst.msk [vmem:[#allocation2 + $0x1c] sm:$0xf] %vm1582, %v1549
      %1591 = vst.msk [vmem:[#allocation2 + $0x20] sm:$0xf] %vm1582, %v1551
      %1592 = vst.msk [vmem:[#allocation2 + $0x24] sm:$0xf] %vm1582, %v1553
      %1593 = vst.msk [vmem:[#allocation2 + $0x28] sm:$0xf] %vm1582, %v1555
      %1594 = vst.msk [vmem:[#allocation2 + $0x2c] sm:$0xf] %vm1582, %v1557
      %1595 = vst.msk [vmem:[#allocation2 + $0x30] sm:$0xf] %vm1582, %v1559
      %1596 = vst.msk [vmem:[#allocation2 + $0x34] sm:$0xf] %vm1582, %v1561
      %1597 = vst.msk [vmem:[#allocation2 + $0x38] sm:$0xf] %vm1582, %v1563
      %1598 = vst.msk [vmem:[#allocation2 + $0x3c] sm:$0xf] %vm1582, %v1565
      %v1599 = vrot.slane %v227, 4
      %v1600 = vrot.slane %v228, 4
      %v1601 = vsel %vm755, %v1599, %v1600
      %v1602 = vrot.slane %v229, 4
      %v1603 = vsel %vm755, %v1600, %v1602
      %v1606 = vpack.c.bf16 %v1601, %v1601
      %v1607 = vpack.c.bf16 %v1603, %v1603
      %1610 = vrot.lane.b32.xlu0 %v816, 56
      %v1611 = vpop.permute.xlu0 %1610
      %1612 = vrot.lane.b32.xlu0 %v817, 56
      %v1613 = vpop.permute.xlu0 %1612
      %1614 = vrot.lane.b32.xlu0 %v818, 56
      %v1615 = vpop.permute.xlu0 %1614
      %1616 = vrot.lane.b32.xlu0 %v819, 56
      %v1617 = vpop.permute.xlu0 %1616
      %1618 = vrot.lane.b32.xlu0 %v820, 56
      %v1619 = vpop.permute.xlu0 %1618
      %1620 = vrot.lane.b32.xlu0 %v821, 56
      %v1621 = vpop.permute.xlu0 %1620
      %1622 = vrot.lane.b32.xlu0 %v822, 56
      %v1623 = vpop.permute.xlu0 %1622
      %1624 = vrot.lane.b32.xlu0 %v823, 56
      %v1625 = vpop.permute.xlu0 %1624
      %1626 = vrot.lane.b32.xlu0 %v824, 56
      %v1627 = vpop.permute.xlu0 %1626
      %1628 = vrot.lane.b32.xlu0 %v825, 56
      %v1629 = vpop.permute.xlu0 %1628
      %1630 = vrot.lane.b32.xlu0 %v826, 56
      %v1631 = vpop.permute.xlu0 %1630
      %1632 = vrot.lane.b32.xlu0 %v827, 56
      %v1633 = vpop.permute.xlu0 %1632
      %1634 = vrot.lane.b32.xlu0 %v1230, 56
      %v1635 = vpop.permute.xlu0 %1634
      %1636 = vrot.lane.b32.xlu0 %v1231, 56
      %v1637 = vpop.permute.xlu0 %1636
      %1638 = vrot.lane.b32.xlu0 %v1606, 56
      %v1639 = vpop.permute.xlu0 %1638
      %1640 = vrot.lane.b32.xlu0 %v1607, 56
      %v1641 = vpop.permute.xlu0 %1640
      %vm1658 = vcmask 486848
      %1659 = vst.msk [vmem:[#allocation2] sm:$0xf] %vm1658, %v1611
      %1660 = vst.msk [vmem:[#allocation2 + $0x4] sm:$0xf] %vm1658, %v1613
      %1661 = vst.msk [vmem:[#allocation2 + $0x8] sm:$0xf] %vm1658, %v1615
      %1662 = vst.msk [vmem:[#allocation2 + $0xc] sm:$0xf] %vm1658, %v1617
      %1663 = vst.msk [vmem:[#allocation2 + $0x10] sm:$0xf] %vm1658, %v1619
      %1664 = vst.msk [vmem:[#allocation2 + $0x14] sm:$0xf] %vm1658, %v1621
      %1665 = vst.msk [vmem:[#allocation2 + $0x18] sm:$0xf] %vm1658, %v1623
      %1666 = vst.msk [vmem:[#allocation2 + $0x1c] sm:$0xf] %vm1658, %v1625
      %1667 = vst.msk [vmem:[#allocation2 + $0x20] sm:$0xf] %vm1658, %v1627
      %1668 = vst.msk [vmem:[#allocation2 + $0x24] sm:$0xf] %vm1658, %v1629
      %1669 = vst.msk [vmem:[#allocation2 + $0x28] sm:$0xf] %vm1658, %v1631
      %1670 = vst.msk [vmem:[#allocation2 + $0x2c] sm:$0xf] %vm1658, %v1633
      %1671 = vst.msk [vmem:[#allocation2 + $0x30] sm:$0xf] %vm1658, %v1635
      %1672 = vst.msk [vmem:[#allocation2 + $0x34] sm:$0xf] %vm1658, %v1637
      %1673 = vst.msk [vmem:[#allocation2 + $0x38] sm:$0xf] %vm1658, %v1639
      %1674 = vst.msk [vmem:[#allocation2 + $0x3c] sm:$0xf] %vm1658, %v1641
      %v1675 = vpack.c.bf16 %v230, %v230
      %v1676 = vpack.c.bf16 %v231, %v231
      %1679 = vrot.lane.b32.xlu0 %v242, 60
      %v1680 = vpop.permute.xlu0 %1679
      %1681 = vrot.lane.b32.xlu0 %v243, 60
      %v1682 = vpop.permute.xlu0 %1681
      %1683 = vrot.lane.b32.xlu0 %v244, 60
      %v1684 = vpop.permute.xlu0 %1683
      %1685 = vrot.lane.b32.xlu0 %v245, 60
      %v1686 = vpop.permute.xlu0 %1685
      %1687 = vrot.lane.b32.xlu0 %v246, 60
      %v1688 = vpop.permute.xlu0 %1687
      %1689 = vrot.lane.b32.xlu0 %v247, 60
      %v1690 = vpop.permute.xlu0 %1689
      %1691 = vrot.lane.b32.xlu0 %v248, 60
      %v1692 = vpop.permute.xlu0 %1691
      %1693 = vrot.lane.b32.xlu0 %v249, 60
      %v1694 = vpop.permute.xlu0 %1693
      %1695 = vrot.lane.b32.xlu0 %v250, 60
      %v1696 = vpop.permute.xlu0 %1695
      %1697 = vrot.lane.b32.xlu0 %v251, 60
      %v1698 = vpop.permute.xlu0 %1697
      %1699 = vrot.lane.b32.xlu0 %v909, 60
      %v1700 = vpop.permute.xlu0 %1699
      %1701 = vrot.lane.b32.xlu0 %v910, 60
      %v1702 = vpop.permute.xlu0 %1701
      %1703 = vrot.lane.b32.xlu0 %v1299, 60
      %v1704 = vpop.permute.xlu0 %1703
      %1705 = vrot.lane.b32.xlu0 %v1300, 60
      %v1706 = vpop.permute.xlu0 %1705
      %1707 = vrot.lane.b32.xlu0 %v1675, 60
      %v1708 = vpop.permute.xlu0 %1707
      %1709 = vrot.lane.b32.xlu0 %v1676, 60
      %v1710 = vpop.permute.xlu0 %1709
      %vm1727 = vcmask 519648
      %1728 = vst.msk [vmem:[#allocation2] sm:$0xf] %vm1727, %v1680
      %1729 = vst.msk [vmem:[#allocation2 + $0x4] sm:$0xf] %vm1727, %v1682
      %1730 = vst.msk [vmem:[#allocation2 + $0x8] sm:$0xf] %vm1727, %v1684
      %1731 = vst.msk [vmem:[#allocation2 + $0xc] sm:$0xf] %vm1727, %v1686
      %1732 = vst.msk [vmem:[#allocation2 + $0x10] sm:$0xf] %vm1727, %v1688
      %1733 = vst.msk [vmem:[#allocation2 + $0x14] sm:$0xf] %vm1727, %v1690
      %1734 = vst.msk [vmem:[#allocation2 + $0x18] sm:$0xf] %vm1727, %v1692
      %1735 = vst.msk [vmem:[#allocation2 + $0x1c] sm:$0xf] %vm1727, %v1694
      %1736 = vst.msk [vmem:[#allocation2 + $0x20] sm:$0xf] %vm1727, %v1696
      %1737 = vst.msk [vmem:[#allocation2 + $0x24] sm:$0xf] %vm1727, %v1698
      %1738 = vst.msk [vmem:[#allocation2 + $0x28] sm:$0xf] %vm1727, %v1700
      %1739 = vst.msk [vmem:[#allocation2 + $0x2c] sm:$0xf] %vm1727, %v1702
      %1740 = vst.msk [vmem:[#allocation2 + $0x30] sm:$0xf] %vm1727, %v1704
      %1741 = vst.msk [vmem:[#allocation2 + $0x34] sm:$0xf] %vm1727, %v1706
      %1742 = vst.msk [vmem:[#allocation2 + $0x38] sm:$0xf] %vm1727, %v1708
      %1743 = vst.msk [vmem:[#allocation2 + $0x3c] sm:$0xf] %vm1727, %v1710
      %v1747 = vrot.slane %v230, 1
      %v1748 = vrot.slane %v231, 1
      %v1749 = vsel %vm293, %v1747, %v1748
      %v1750 = vrot.slane %v232, 1
      %v1751 = vsel %vm293, %v1748, %v1750
      %v1754 = vpack.c.bf16 %v1749, %v1749
      %v1755 = vpack.c.bf16 %v1751, %v1751
      %1758 = vrot.lane.b32.xlu0 %v356, 64
      %v1759 = vpop.permute.xlu0 %1758
      %1760 = vrot.lane.b32.xlu0 %v357, 64
      %v1761 = vpop.permute.xlu0 %1760
      %1762 = vrot.lane.b32.xlu0 %v358, 64
      %v1763 = vpop.permute.xlu0 %1762
      %1764 = vrot.lane.b32.xlu0 %v359, 64
      %v1765 = vpop.permute.xlu0 %1764
      %1766 = vrot.lane.b32.xlu0 %v360, 64
      %v1767 = vpop.permute.xlu0 %1766
      %1768 = vrot.lane.b32.xlu0 %v361, 64
      %v1769 = vpop.permute.xlu0 %1768
      %1770 = vrot.lane.b32.xlu0 %v362, 64
      %v1771 = vpop.permute.xlu0 %1770
      %1772 = vrot.lane.b32.xlu0 %v363, 64
      %v1773 = vpop.permute.xlu0 %1772
      %1774 = vrot.lane.b32.xlu0 %v364, 64
      %v1775 = vpop.permute.xlu0 %1774
      %1776 = vrot.lane.b32.xlu0 %v365, 64
      %v1777 = vpop.permute.xlu0 %1776
      %1778 = vrot.lane.b32.xlu0 %v1002, 64
      %v1779 = vpop.permute.xlu0 %1778
      %1780 = vrot.lane.b32.xlu0 %v1003, 64
      %v1781 = vpop.permute.xlu0 %1780
      %1782 = vrot.lane.b32.xlu0 %v1378, 64
      %v1783 = vpop.permute.xlu0 %1782
      %1784 = vrot.lane.b32.xlu0 %v1379, 64
      %v1785 = vpop.permute.xlu0 %1784
      %1786 = vrot.lane.b32.xlu0 %v1754, 64
      %v1787 = vpop.permute.xlu0 %1786
      %1788 = vrot.lane.b32.xlu0 %v1755, 64
      %v1789 = vpop.permute.xlu0 %1788
      %vm1806 = vcmask 552448
      %1807 = vst.msk [vmem:[#allocation2] sm:$0xf] %vm1806, %v1759
      %1808 = vst.msk [vmem:[#allocation2 + $0x4] sm:$0xf] %vm1806, %v1761
      %1809 = vst.msk [vmem:[#allocation2 + $0x8] sm:$0xf] %vm1806, %v1763
      %1810 = vst.msk [vmem:[#allocation2 + $0xc] sm:$0xf] %vm1806, %v1765
      %1811 = vst.msk [vmem:[#allocation2 + $0x10] sm:$0xf] %vm1806, %v1767
      %1812 = vst.msk [vmem:[#allocation2 + $0x14] sm:$0xf] %vm1806, %v1769
      %1813 = vst.msk [vmem:[#allocation2 + $0x18] sm:$0xf] %vm1806, %v1771
      %1814 = vst.msk [vmem:[#allocation2 + $0x1c] sm:$0xf] %vm1806, %v1773
      %1815 = vst.msk [vmem:[#allocation2 + $0x20] sm:$0xf] %vm1806, %v1775
      %1816 = vst.msk [vmem:[#allocation2 + $0x24] sm:$0xf] %vm1806, %v1777
      %1817 = vst.msk [vmem:[#allocation2 + $0x28] sm:$0xf] %vm1806, %v1779
      %1818 = vst.msk [vmem:[#allocation2 + $0x2c] sm:$0xf] %vm1806, %v1781
      %1819 = vst.msk [vmem:[#allocation2 + $0x30] sm:$0xf] %vm1806, %v1783
      %1820 = vst.msk [vmem:[#allocation2 + $0x34] sm:$0xf] %vm1806, %v1785
      %1821 = vst.msk [vmem:[#allocation2 + $0x38] sm:$0xf] %vm1806, %v1787
      %1822 = vst.msk [vmem:[#allocation2 + $0x3c] sm:$0xf] %vm1806, %v1789
      %v1823 = vrot.slane %v230, 2
      %v1824 = vrot.slane %v231, 2
      %v1825 = vsel %vm447, %v1823, %v1824
      %v1826 = vrot.slane %v232, 2
      %v1827 = vsel %vm447, %v1824, %v1826
      %v1830 = vpack.c.bf16 %v1825, %v1825
      %v1831 = vpack.c.bf16 %v1827, %v1827
      %1834 = vrot.lane.b32.xlu0 %v510, 68
      %v1835 = vpop.permute.xlu0 %1834
      %1836 = vrot.lane.b32.xlu0 %v511, 68
      %v1837 = vpop.permute.xlu0 %1836
      %1838 = vrot.lane.b32.xlu0 %v512, 68
      %v1839 = vpop.permute.xlu0 %1838
      %1840 = vrot.lane.b32.xlu0 %v513, 68
      %v1841 = vpop.permute.xlu0 %1840
      %1842 = vrot.lane.b32.xlu0 %v514, 68
      %v1843 = vpop.permute.xlu0 %1842
      %1844 = vrot.lane.b32.xlu0 %v515, 68
      %v1845 = vpop.permute.xlu0 %1844
      %1846 = vrot.lane.b32.xlu0 %v516, 68
      %v1847 = vpop.permute.xlu0 %1846
      %1848 = vrot.lane.b32.xlu0 %v517, 68
      %v1849 = vpop.permute.xlu0 %1848
      %1850 = vrot.lane.b32.xlu0 %v518, 68
      %v1851 = vpop.permute.xlu0 %1850
      %1852 = vrot.lane.b32.xlu0 %v519, 68
      %v1853 = vpop.permute.xlu0 %1852
      %1854 = vrot.lane.b32.xlu0 %v1078, 68
      %v1855 = vpop.permute.xlu0 %1854
      %1856 = vrot.lane.b32.xlu0 %v1079, 68
      %v1857 = vpop.permute.xlu0 %1856
      %1858 = vrot.lane.b32.xlu0 %v1454, 68
      %v1859 = vpop.permute.xlu0 %1858
      %1860 = vrot.lane.b32.xlu0 %v1455, 68
      %v1861 = vpop.permute.xlu0 %1860
      %1862 = vrot.lane.b32.xlu0 %v1830, 68
      %v1863 = vpop.permute.xlu0 %1862
      %1864 = vrot.lane.b32.xlu0 %v1831, 68
      %v1865 = vpop.permute.xlu0 %1864
      %vm1882 = vcmask 585248
      %1883 = vst.msk [vmem:[#allocation2] sm:$0xf] %vm1882, %v1835
      %1884 = vst.msk [vmem:[#allocation2 + $0x4] sm:$0xf] %vm1882, %v1837
      %1885 = vst.msk [vmem:[#allocation2 + $0x8] sm:$0xf] %vm1882, %v1839
      %1886 = vst.msk [vmem:[#allocation2 + $0xc] sm:$0xf] %vm1882, %v1841
      %1887 = vst.msk [vmem:[#allocation2 + $0x10] sm:$0xf] %vm1882, %v1843
      %1888 = vst.msk [vmem:[#allocation2 + $0x14] sm:$0xf] %vm1882, %v1845
      %1889 = vst.msk [vmem:[#allocation2 + $0x18] sm:$0xf] %vm1882, %v1847
      %1890 = vst.msk [vmem:[#allocation2 + $0x1c] sm:$0xf] %vm1882, %v1849
      %1891 = vst.msk [vmem:[#allocation2 + $0x20] sm:$0xf] %vm1882, %v1851
      %1892 = vst.msk [vmem:[#allocation2 + $0x24] sm:$0xf] %vm1882, %v1853
      %1893 = vst.msk [vmem:[#allocation2 + $0x28] sm:$0xf] %vm1882, %v1855
      %1894 = vst.msk [vmem:[#allocation2 + $0x2c] sm:$0xf] %vm1882, %v1857
      %1895 = vst.msk [vmem:[#allocation2 + $0x30] sm:$0xf] %vm1882, %v1859
      %1896 = vst.msk [vmem:[#allocation2 + $0x34] sm:$0xf] %vm1882, %v1861
      %1897 = vst.msk [vmem:[#allocation2 + $0x38] sm:$0xf] %vm1882, %v1863
      %1898 = vst.msk [vmem:[#allocation2 + $0x3c] sm:$0xf] %vm1882, %v1865
      %v1899 = vrot.slane %v230, 3
      %v1900 = vrot.slane %v231, 3
      %v1901 = vsel %vm601, %v1899, %v1900
      %v1902 = vrot.slane %v232, 3
      %v1903 = vsel %vm601, %v1900, %v1902
      %v1906 = vpack.c.bf16 %v1901, %v1901
      %v1907 = vpack.c.bf16 %v1903, %v1903
      %1910 = vrot.lane.b32.xlu0 %v664, 72
      %v1911 = vpop.permute.xlu0 %1910
      %1912 = vrot.lane.b32.xlu0 %v665, 72
      %v1913 = vpop.permute.xlu0 %1912
      %1914 = vrot.lane.b32.xlu0 %v666, 72
      %v1915 = vpop.permute.xlu0 %1914
      %1916 = vrot.lane.b32.xlu0 %v667, 72
      %v1917 = vpop.permute.xlu0 %1916
      %1918 = vrot.lane.b32.xlu0 %v668, 72
      %v1919 = vpop.permute.xlu0 %1918
      %1920 = vrot.lane.b32.xlu0 %v669, 72
      %v1921 = vpop.permute.xlu0 %1920
      %1922 = vrot.lane.b32.xlu0 %v670, 72
      %v1923 = vpop.permute.xlu0 %1922
      %1924 = vrot.lane.b32.xlu0 %v671, 72
      %v1925 = vpop.permute.xlu0 %1924
      %1926 = vrot.lane.b32.xlu0 %v672, 72
      %v1927 = vpop.permute.xlu0 %1926
      %1928 = vrot.lane.b32.xlu0 %v673, 72
      %v1929 = vpop.permute.xlu0 %1928
      %1930 = vrot.lane.b32.xlu0 %v1154, 72
      %v1931 = vpop.permute.xlu0 %1930
      %1932 = vrot.lane.b32.xlu0 %v1155, 72
      %v1933 = vpop.permute.xlu0 %1932
      %1934 = vrot.lane.b32.xlu0 %v1530, 72
      %v1935 = vpop.permute.xlu0 %1934
      %1936 = vrot.lane.b32.xlu0 %v1531, 72
      %v1937 = vpop.permute.xlu0 %1936
      %1938 = vrot.lane.b32.xlu0 %v1906, 72
      %v1939 = vpop.permute.xlu0 %1938
      %1940 = vrot.lane.b32.xlu0 %v1907, 72
      %v1941 = vpop.permute.xlu0 %1940
      %vm1958 = vcmask 618048
      %1959 = vst.msk [vmem:[#allocation2] sm:$0xf] %vm1958, %v1911
      %1960 = vst.msk [vmem:[#allocation2 + $0x4] sm:$0xf] %vm1958, %v1913
      %1961 = vst.msk [vmem:[#allocation2 + $0x8] sm:$0xf] %vm1958, %v1915
      %1962 = vst.msk [vmem:[#allocation2 + $0xc] sm:$0xf] %vm1958, %v1917
      %1963 = vst.msk [vmem:[#allocation2 + $0x10] sm:$0xf] %vm1958, %v1919
      %1964 = vst.msk [vmem:[#allocation2 + $0x14] sm:$0xf] %vm1958, %v1921
      %1965 = vst.msk [vmem:[#allocation2 + $0x18] sm:$0xf] %vm1958, %v1923
      %1966 = vst.msk [vmem:[#allocation2 + $0x1c] sm:$0xf] %vm1958, %v1925
      %1967 = vst.msk [vmem:[#allocation2 + $0x20] sm:$0xf] %vm1958, %v1927
      %1968 = vst.msk [vmem:[#allocation2 + $0x24] sm:$0xf] %vm1958, %v1929
      %1969 = vst.msk [vmem:[#allocation2 + $0x28] sm:$0xf] %vm1958, %v1931
      %1970 = vst.msk [vmem:[#allocation2 + $0x2c] sm:$0xf] %vm1958, %v1933
      %1971 = vst.msk [vmem:[#allocation2 + $0x30] sm:$0xf] %vm1958, %v1935
      %1972 = vst.msk [vmem:[#allocation2 + $0x34] sm:$0xf] %vm1958, %v1937
      %1973 = vst.msk [vmem:[#allocation2 + $0x38] sm:$0xf] %vm1958, %v1939
      %1974 = vst.msk [vmem:[#allocation2 + $0x3c] sm:$0xf] %vm1958, %v1941
      %v1975 = vrot.slane %v230, 4
      %v1976 = vrot.slane %v231, 4
      %v1977 = vsel %vm755, %v1975, %v1976
      %v1978 = vrot.slane %v232, 4
      %v1979 = vsel %vm755, %v1976, %v1978
      %v1982 = vpack.c.bf16 %v1977, %v1977
      %v1983 = vpack.c.bf16 %v1979, %v1979
      %1986 = vrot.lane.b32.xlu0 %v818, 76
      %v1987 = vpop.permute.xlu0 %1986
      %1988 = vrot.lane.b32.xlu0 %v819, 76
      %v1989 = vpop.permute.xlu0 %1988
      %1990 = vrot.lane.b32.xlu0 %v820, 76
      %v1991 = vpop.permute.xlu0 %1990
      %1992 = vrot.lane.b32.xlu0 %v821, 76
      %v1993 = vpop.permute.xlu0 %1992
      %1994 = vrot.lane.b32.xlu0 %v822, 76
      %v1995 = vpop.permute.xlu0 %1994
      %1996 = vrot.lane.b32.xlu0 %v823, 76
      %v1997 = vpop.permute.xlu0 %1996
      %1998 = vrot.lane.b32.xlu0 %v824, 76
      %v1999 = vpop.permute.xlu0 %1998
      %2000 = vrot.lane.b32.xlu0 %v825, 76
      %v2001 = vpop.permute.xlu0 %2000
      %2002 = vrot.lane.b32.xlu0 %v826, 76
      %v2003 = vpop.permute.xlu0 %2002
      %2004 = vrot.lane.b32.xlu0 %v827, 76
      %v2005 = vpop.permute.xlu0 %2004
      %2006 = vrot.lane.b32.xlu0 %v1230, 76
      %v2007 = vpop.permute.xlu0 %2006
      %2008 = vrot.lane.b32.xlu0 %v1231, 76
      %v2009 = vpop.permute.xlu0 %2008
      %2010 = vrot.lane.b32.xlu0 %v1606, 76
      %v2011 = vpop.permute.xlu0 %2010
      %2012 = vrot.lane.b32.xlu0 %v1607, 76
      %v2013 = vpop.permute.xlu0 %2012
      %2014 = vrot.lane.b32.xlu0 %v1982, 76
      %v2015 = vpop.permute.xlu0 %2014
      %2016 = vrot.lane.b32.xlu0 %v1983, 76
      %v2017 = vpop.permute.xlu0 %2016
      %vm2034 = vcmask 650848
      %2035 = vst.msk [vmem:[#allocation2] sm:$0xf] %vm2034, %v1987
      %2036 = vst.msk [vmem:[#allocation2 + $0x4] sm:$0xf] %vm2034, %v1989
      %2037 = vst.msk [vmem:[#allocation2 + $0x8] sm:$0xf] %vm2034, %v1991
      %2038 = vst.msk [vmem:[#allocation2 + $0xc] sm:$0xf] %vm2034, %v1993
      %2039 = vst.msk [vmem:[#allocation2 + $0x10] sm:$0xf] %vm2034, %v1995
      %2040 = vst.msk [vmem:[#allocation2 + $0x14] sm:$0xf] %vm2034, %v1997
      %2041 = vst.msk [vmem:[#allocation2 + $0x18] sm:$0xf] %vm2034, %v1999
      %2042 = vst.msk [vmem:[#allocation2 + $0x1c] sm:$0xf] %vm2034, %v2001
      %2043 = vst.msk [vmem:[#allocation2 + $0x20] sm:$0xf] %vm2034, %v2003
      %2044 = vst.msk [vmem:[#allocation2 + $0x24] sm:$0xf] %vm2034, %v2005
      %2045 = vst.msk [vmem:[#allocation2 + $0x28] sm:$0xf] %vm2034, %v2007
      %2046 = vst.msk [vmem:[#allocation2 + $0x2c] sm:$0xf] %vm2034, %v2009
      %2047 = vst.msk [vmem:[#allocation2 + $0x30] sm:$0xf] %vm2034, %v2011
      %2048 = vst.msk [vmem:[#allocation2 + $0x34] sm:$0xf] %vm2034, %v2013
      %2049 = vst.msk [vmem:[#allocation2 + $0x38] sm:$0xf] %vm2034, %v2015
      %2050 = vst.msk [vmem:[#allocation2 + $0x3c] sm:$0xf] %vm2034, %v2017
      %v2051 = vpack.c.bf16 %v233, %v233
      %v2052 = vpack.c.bf16 %v234, %v234
      %2055 = vrot.lane.b32.xlu0 %v244, 80
      %v2056 = vpop.permute.xlu0 %2055
      %2057 = vrot.lane.b32.xlu0 %v245, 80
      %v2058 = vpop.permute.xlu0 %2057
      %2059 = vrot.lane.b32.xlu0 %v246, 80
      %v2060 = vpop.permute.xlu0 %2059
      %2061 = vrot.lane.b32.xlu0 %v247, 80
      %v2062 = vpop.permute.xlu0 %2061
      %2063 = vrot.lane.b32.xlu0 %v248, 80
      %v2064 = vpop.permute.xlu0 %2063
      %2065 = vrot.lane.b32.xlu0 %v249, 80
      %v2066 = vpop.permute.xlu0 %2065
      %2067 = vrot.lane.b32.xlu0 %v250, 80
      %v2068 = vpop.permute.xlu0 %2067
      %2069 = vrot.lane.b32.xlu0 %v251, 80
      %v2070 = vpop.permute.xlu0 %2069
      %2071 = vrot.lane.b32.xlu0 %v909, 80
      %v2072 = vpop.permute.xlu0 %2071
      %2073 = vrot.lane.b32.xlu0 %v910, 80
      %v2074 = vpop.permute.xlu0 %2073
      %2075 = vrot.lane.b32.xlu0 %v1299, 80
      %v2076 = vpop.permute.xlu0 %2075
      %2077 = vrot.lane.b32.xlu0 %v1300, 80
      %v2078 = vpop.permute.xlu0 %2077
      %2079 = vrot.lane.b32.xlu0 %v1675, 80
      %v2080 = vpop.permute.xlu0 %2079
      %2081 = vrot.lane.b32.xlu0 %v1676, 80
      %v2082 = vpop.permute.xlu0 %2081
      %2083 = vrot.lane.b32.xlu0 %v2051, 80
      %v2084 = vpop.permute.xlu0 %2083
      %2085 = vrot.lane.b32.xlu0 %v2052, 80
      %v2086 = vpop.permute.xlu0 %2085
      %vm2103 = vcmask 683648
      %2104 = vst.msk [vmem:[#allocation2] sm:$0xf] %vm2103, %v2056
      %2105 = vst.msk [vmem:[#allocation2 + $0x4] sm:$0xf] %vm2103, %v2058
      %2106 = vst.msk [vmem:[#allocation2 + $0x8] sm:$0xf] %vm2103, %v2060
      %2107 = vst.msk [vmem:[#allocation2 + $0xc] sm:$0xf] %vm2103, %v2062
      %2108 = vst.msk [vmem:[#allocation2 + $0x10] sm:$0xf] %vm2103, %v2064
      %2109 = vst.msk [vmem:[#allocation2 + $0x14] sm:$0xf] %vm2103, %v2066
      %2110 = vst.msk [vmem:[#allocation2 + $0x18] sm:$0xf] %vm2103, %v2068
      %2111 = vst.msk [vmem:[#allocation2 + $0x1c] sm:$0xf] %vm2103, %v2070
      %2112 = vst.msk [vmem:[#allocation2 + $0x20] sm:$0xf] %vm2103, %v2072
      %2113 = vst.msk [vmem:[#allocation2 + $0x24] sm:$0xf] %vm2103, %v2074
      %2114 = vst.msk [vmem:[#allocation2 + $0x28] sm:$0xf] %vm2103, %v2076
      %2115 = vst.msk [vmem:[#allocation2 + $0x2c] sm:$0xf] %vm2103, %v2078
      %2116 = vst.msk [vmem:[#allocation2 + $0x30] sm:$0xf] %vm2103, %v2080
      %2117 = vst.msk [vmem:[#allocation2 + $0x34] sm:$0xf] %vm2103, %v2082
      %2118 = vst.msk [vmem:[#allocation2 + $0x38] sm:$0xf] %vm2103, %v2084
      %2119 = vst.msk [vmem:[#allocation2 + $0x3c] sm:$0xf] %vm2103, %v2086
      %v2123 = vrot.slane %v233, 1
      %v2124 = vrot.slane %v234, 1
      %v2125 = vsel %vm293, %v2123, %v2124
      %v2126 = vrot.slane %v235, 1
      %v2127 = vsel %vm293, %v2124, %v2126
      %v2130 = vpack.c.bf16 %v2125, %v2125
      %v2131 = vpack.c.bf16 %v2127, %v2127
      %2134 = vrot.lane.b32.xlu0 %v358, 84
      %v2135 = vpop.permute.xlu0 %2134
      %2136 = vrot.lane.b32.xlu0 %v359, 84
      %v2137 = vpop.permute.xlu0 %2136
      %2138 = vrot.lane.b32.xlu0 %v360, 84
      %v2139 = vpop.permute.xlu0 %2138
      %2140 = vrot.lane.b32.xlu0 %v361, 84
      %v2141 = vpop.permute.xlu0 %2140
      %2142 = vrot.lane.b32.xlu0 %v362, 84
      %v2143 = vpop.permute.xlu0 %2142
      %2144 = vrot.lane.b32.xlu0 %v363, 84
      %v2145 = vpop.permute.xlu0 %2144
      %2146 = vrot.lane.b32.xlu0 %v364, 84
      %v2147 = vpop.permute.xlu0 %2146
      %2148 = vrot.lane.b32.xlu0 %v365, 84
      %v2149 = vpop.permute.xlu0 %2148
      %2150 = vrot.lane.b32.xlu0 %v1002, 84
      %v2151 = vpop.permute.xlu0 %2150
      %2152 = vrot.lane.b32.xlu0 %v1003, 84
      %v2153 = vpop.permute.xlu0 %2152
      %2154 = vrot.lane.b32.xlu0 %v1378, 84
      %v2155 = vpop.permute.xlu0 %2154
      %2156 = vrot.lane.b32.xlu0 %v1379, 84
      %v2157 = vpop.permute.xlu0 %2156
      %2158 = vrot.lane.b32.xlu0 %v1754, 84
      %v2159 = vpop.permute.xlu0 %2158
      %2160 = vrot.lane.b32.xlu0 %v1755, 84
      %v2161 = vpop.permute.xlu0 %2160
      %2162 = vrot.lane.b32.xlu0 %v2130, 84
      %v2163 = vpop.permute.xlu0 %2162
      %2164 = vrot.lane.b32.xlu0 %v2131, 84
      %v2165 = vpop.permute.xlu0 %2164
      %vm2182 = vcmask 716448
      %2183 = vst.msk [vmem:[#allocation2] sm:$0xf] %vm2182, %v2135
      %2184 = vst.msk [vmem:[#allocation2 + $0x4] sm:$0xf] %vm2182, %v2137
      %2185 = vst.msk [vmem:[#allocation2 + $0x8] sm:$0xf] %vm2182, %v2139
      %2186 = vst.msk [vmem:[#allocation2 + $0xc] sm:$0xf] %vm2182, %v2141
      %2187 = vst.msk [vmem:[#allocation2 + $0x10] sm:$0xf] %vm2182, %v2143
      %2188 = vst.msk [vmem:[#allocation2 + $0x14] sm:$0xf] %vm2182, %v2145
      %2189 = vst.msk [vmem:[#allocation2 + $0x18] sm:$0xf] %vm2182, %v2147
      %2190 = vst.msk [vmem:[#allocation2 + $0x1c] sm:$0xf] %vm2182, %v2149
      %2191 = vst.msk [vmem:[#allocation2 + $0x20] sm:$0xf] %vm2182, %v2151
      %2192 = vst.msk [vmem:[#allocation2 + $0x24] sm:$0xf] %vm2182, %v2153
      %2193 = vst.msk [vmem:[#allocation2 + $0x28] sm:$0xf] %vm2182, %v2155
      %2194 = vst.msk [vmem:[#allocation2 + $0x2c] sm:$0xf] %vm2182, %v2157
      %2195 = vst.msk [vmem:[#allocation2 + $0x30] sm:$0xf] %vm2182, %v2159
      %2196 = vst.msk [vmem:[#allocation2 + $0x34] sm:$0xf] %vm2182, %v2161
      %2197 = vst.msk [vmem:[#allocation2 + $0x38] sm:$0xf] %vm2182, %v2163
      %2198 = vst.msk [vmem:[#allocation2 + $0x3c] sm:$0xf] %vm2182, %v2165
      %v2199 = vrot.slane %v233, 2
      %v2200 = vrot.slane %v234, 2
      %v2201 = vsel %vm447, %v2199, %v2200
      %v2202 = vrot.slane %v235, 2
      %v2203 = vsel %vm447, %v2200, %v2202
      %v2206 = vpack.c.bf16 %v2201, %v2201
      %v2207 = vpack.c.bf16 %v2203, %v2203
      %2210 = vrot.lane.b32.xlu0 %v512, 88
      %v2211 = vpop.permute.xlu0 %2210
      %2212 = vrot.lane.b32.xlu0 %v513, 88
      %v2213 = vpop.permute.xlu0 %2212
      %2214 = vrot.lane.b32.xlu0 %v514, 88
      %v2215 = vpop.permute.xlu0 %2214
      %2216 = vrot.lane.b32.xlu0 %v515, 88
      %v2217 = vpop.permute.xlu0 %2216
      %2218 = vrot.lane.b32.xlu0 %v516, 88
      %v2219 = vpop.permute.xlu0 %2218
      %2220 = vrot.lane.b32.xlu0 %v517, 88
      %v2221 = vpop.permute.xlu0 %2220
      %2222 = vrot.lane.b32.xlu0 %v518, 88
      %v2223 = vpop.permute.xlu0 %2222
      %2224 = vrot.lane.b32.xlu0 %v519, 88
      %v2225 = vpop.permute.xlu0 %2224
      %2226 = vrot.lane.b32.xlu0 %v1078, 88
      %v2227 = vpop.permute.xlu0 %2226
      %2228 = vrot.lane.b32.xlu0 %v1079, 88
      %v2229 = vpop.permute.xlu0 %2228
      %2230 = vrot.lane.b32.xlu0 %v1454, 88
      %v2231 = vpop.permute.xlu0 %2230
      %2232 = vrot.lane.b32.xlu0 %v1455, 88
      %v2233 = vpop.permute.xlu0 %2232
      %2234 = vrot.lane.b32.xlu0 %v1830, 88
      %v2235 = vpop.permute.xlu0 %2234
      %2236 = vrot.lane.b32.xlu0 %v1831, 88
      %v2237 = vpop.permute.xlu0 %2236
      %2238 = vrot.lane.b32.xlu0 %v2206, 88
      %v2239 = vpop.permute.xlu0 %2238
      %2240 = vrot.lane.b32.xlu0 %v2207, 88
      %v2241 = vpop.permute.xlu0 %2240
      %vm2258 = vcmask 749248
      %2259 = vst.msk [vmem:[#allocation2] sm:$0xf] %vm2258, %v2211
      %2260 = vst.msk [vmem:[#allocation2 + $0x4] sm:$0xf] %vm2258, %v2213
      %2261 = vst.msk [vmem:[#allocation2 + $0x8] sm:$0xf] %vm2258, %v2215
      %2262 = vst.msk [vmem:[#allocation2 + $0xc] sm:$0xf] %vm2258, %v2217
      %2263 = vst.msk [vmem:[#allocation2 + $0x10] sm:$0xf] %vm2258, %v2219
      %2264 = vst.msk [vmem:[#allocation2 + $0x14] sm:$0xf] %vm2258, %v2221
      %2265 = vst.msk [vmem:[#allocation2 + $0x18] sm:$0xf] %vm2258, %v2223
      %2266 = vst.msk [vmem:[#allocation2 + $0x1c] sm:$0xf] %vm2258, %v2225
      %2267 = vst.msk [vmem:[#allocation2 + $0x20] sm:$0xf] %vm2258, %v2227
      %2268 = vst.msk [vmem:[#allocation2 + $0x24] sm:$0xf] %vm2258, %v2229
      %2269 = vst.msk [vmem:[#allocation2 + $0x28] sm:$0xf] %vm2258, %v2231
      %2270 = vst.msk [vmem:[#allocation2 + $0x2c] sm:$0xf] %vm2258, %v2233
      %2271 = vst.msk [vmem:[#allocation2 + $0x30] sm:$0xf] %vm2258, %v2235
      %2272 = vst.msk [vmem:[#allocation2 + $0x34] sm:$0xf] %vm2258, %v2237
      %2273 = vst.msk [vmem:[#allocation2 + $0x38] sm:$0xf] %vm2258, %v2239
      %2274 = vst.msk [vmem:[#allocation2 + $0x3c] sm:$0xf] %vm2258, %v2241
      %v2275 = vrot.slane %v233, 3
      %v2276 = vrot.slane %v234, 3
      %v2277 = vsel %vm601, %v2275, %v2276
      %v2278 = vrot.slane %v235, 3
      %v2279 = vsel %vm601, %v2276, %v2278
      %v2282 = vpack.c.bf16 %v2277, %v2277
      %v2283 = vpack.c.bf16 %v2279, %v2279
      %2286 = vrot.lane.b32.xlu0 %v666, 92
      %v2287 = vpop.permute.xlu0 %2286
      %2288 = vrot.lane.b32.xlu0 %v667, 92
      %v2289 = vpop.permute.xlu0 %2288
      %2290 = vrot.lane.b32.xlu0 %v668, 92
      %v2291 = vpop.permute.xlu0 %2290
      %2292 = vrot.lane.b32.xlu0 %v669, 92
      %v2293 = vpop.permute.xlu0 %2292
      %2294 = vrot.lane.b32.xlu0 %v670, 92
      %v2295 = vpop.permute.xlu0 %2294
      %2296 = vrot.lane.b32.xlu0 %v671, 92
      %v2297 = vpop.permute.xlu0 %2296
      %2298 = vrot.lane.b32.xlu0 %v672, 92
      %v2299 = vpop.permute.xlu0 %2298
      %2300 = vrot.lane.b32.xlu0 %v673, 92
      %v2301 = vpop.permute.xlu0 %2300
      %2302 = vrot.lane.b32.xlu0 %v1154, 92
      %v2303 = vpop.permute.xlu0 %2302
      %2304 = vrot.lane.b32.xlu0 %v1155, 92
      %v2305 = vpop.permute.xlu0 %2304
      %2306 = vrot.lane.b32.xlu0 %v1530, 92
      %v2307 = vpop.permute.xlu0 %2306
      %2308 = vrot.lane.b32.xlu0 %v1531, 92
      %v2309 = vpop.permute.xlu0 %2308
      %2310 = vrot.lane.b32.xlu0 %v1906, 92
      %v2311 = vpop.permute.xlu0 %2310
      %2312 = vrot.lane.b32.xlu0 %v1907, 92
      %v2313 = vpop.permute.xlu0 %2312
      %2314 = vrot.lane.b32.xlu0 %v2282, 92
      %v2315 = vpop.permute.xlu0 %2314
      %2316 = vrot.lane.b32.xlu0 %v2283, 92
      %v2317 = vpop.permute.xlu0 %2316
      %vm2334 = vcmask 782048
      %2335 = vst.msk [vmem:[#allocation2] sm:$0xf] %vm2334, %v2287
      %2336 = vst.msk [vmem:[#allocation2 + $0x4] sm:$0xf] %vm2334, %v2289
      %2337 = vst.msk [vmem:[#allocation2 + $0x8] sm:$0xf] %vm2334, %v2291
      %2338 = vst.msk [vmem:[#allocation2 + $0xc] sm:$0xf] %vm2334, %v2293
      %2339 = vst.msk [vmem:[#allocation2 + $0x10] sm:$0xf] %vm2334, %v2295
      %2340 = vst.msk [vmem:[#allocation2 + $0x14] sm:$0xf] %vm2334, %v2297
      %2341 = vst.msk [vmem:[#allocation2 + $0x18] sm:$0xf] %vm2334, %v2299
      %2342 = vst.msk [vmem:[#allocation2 + $0x1c] sm:$0xf] %vm2334, %v2301
      %2343 = vst.msk [vmem:[#allocation2 + $0x20] sm:$0xf] %vm2334, %v2303
      %2344 = vst.msk [vmem:[#allocation2 + $0x24] sm:$0xf] %vm2334, %v2305
      %2345 = vst.msk [vmem:[#allocation2 + $0x28] sm:$0xf] %vm2334, %v2307
      %2346 = vst.msk [vmem:[#allocation2 + $0x2c] sm:$0xf] %vm2334, %v2309
      %2347 = vst.msk [vmem:[#allocation2 + $0x30] sm:$0xf] %vm2334, %v2311
      %2348 = vst.msk [vmem:[#allocation2 + $0x34] sm:$0xf] %vm2334, %v2313
      %2349 = vst.msk [vmem:[#allocation2 + $0x38] sm:$0xf] %vm2334, %v2315
      %2350 = vst.msk [vmem:[#allocation2 + $0x3c] sm:$0xf] %vm2334, %v2317
      %v2351 = vrot.slane %v233, 4
      %v2352 = vrot.slane %v234, 4
      %v2353 = vsel %vm755, %v2351, %v2352
      %v2354 = vrot.slane %v235, 4
      %v2355 = vsel %vm755, %v2352, %v2354
      %v2358 = vpack.c.bf16 %v2353, %v2353
      %v2359 = vpack.c.bf16 %v2355, %v2355
      %2362 = vrot.lane.b32.xlu0 %v820, 96
      %v2363 = vpop.permute.xlu0 %2362
      %2364 = vrot.lane.b32.xlu0 %v821, 96
      %v2365 = vpop.permute.xlu0 %2364
      %2366 = vrot.lane.b32.xlu0 %v822, 96
      %v2367 = vpop.permute.xlu0 %2366
      %2368 = vrot.lane.b32.xlu0 %v823, 96
      %v2369 = vpop.permute.xlu0 %2368
      %2370 = vrot.lane.b32.xlu0 %v824, 96
      %v2371 = vpop.permute.xlu0 %2370
      %2372 = vrot.lane.b32.xlu0 %v825, 96
      %v2373 = vpop.permute.xlu0 %2372
      %2374 = vrot.lane.b32.xlu0 %v826, 96
      %v2375 = vpop.permute.xlu0 %2374
      %2376 = vrot.lane.b32.xlu0 %v827, 96
      %v2377 = vpop.permute.xlu0 %2376
      %2378 = vrot.lane.b32.xlu0 %v1230, 96
      %v2379 = vpop.permute.xlu0 %2378
      %2380 = vrot.lane.b32.xlu0 %v1231, 96
      %v2381 = vpop.permute.xlu0 %2380
      %2382 = vrot.lane.b32.xlu0 %v1606, 96
      %v2383 = vpop.permute.xlu0 %2382
      %2384 = vrot.lane.b32.xlu0 %v1607, 96
      %v2385 = vpop.permute.xlu0 %2384
      %2386 = vrot.lane.b32.xlu0 %v1982, 96
      %v2387 = vpop.permute.xlu0 %2386
      %2388 = vrot.lane.b32.xlu0 %v1983, 96
      %v2389 = vpop.permute.xlu0 %2388
      %2390 = vrot.lane.b32.xlu0 %v2358, 96
      %v2391 = vpop.permute.xlu0 %2390
      %2392 = vrot.lane.b32.xlu0 %v2359, 96
      %v2393 = vpop.permute.xlu0 %2392
      %vm2410 = vcmask 814848
      %2411 = vst.msk [vmem:[#allocation2] sm:$0xf] %vm2410, %v2363
      %2412 = vst.msk [vmem:[#allocation2 + $0x4] sm:$0xf] %vm2410, %v2365
      %2413 = vst.msk [vmem:[#allocation2 + $0x8] sm:$0xf] %vm2410, %v2367
      %2414 = vst.msk [vmem:[#allocation2 + $0xc] sm:$0xf] %vm2410, %v2369
      %2415 = vst.msk [vmem:[#allocation2 + $0x10] sm:$0xf] %vm2410, %v2371
      %2416 = vst.msk [vmem:[#allocation2 + $0x14] sm:$0xf] %vm2410, %v2373
      %2417 = vst.msk [vmem:[#allocation2 + $0x18] sm:$0xf] %vm2410, %v2375
      %2418 = vst.msk [vmem:[#allocation2 + $0x1c] sm:$0xf] %vm2410, %v2377
      %2419 = vst.msk [vmem:[#allocation2 + $0x20] sm:$0xf] %vm2410, %v2379
      %2420 = vst.msk [vmem:[#allocation2 + $0x24] sm:$0xf] %vm2410, %v2381
      %2421 = vst.msk [vmem:[#allocation2 + $0x28] sm:$0xf] %vm2410, %v2383
      %2422 = vst.msk [vmem:[#allocation2 + $0x2c] sm:$0xf] %vm2410, %v2385
      %2423 = vst.msk [vmem:[#allocation2 + $0x30] sm:$0xf] %vm2410, %v2387
      %2424 = vst.msk [vmem:[#allocation2 + $0x34] sm:$0xf] %vm2410, %v2389
      %2425 = vst.msk [vmem:[#allocation2 + $0x38] sm:$0xf] %vm2410, %v2391
      %2426 = vst.msk [vmem:[#allocation2 + $0x3c] sm:$0xf] %vm2410, %v2393
      %v2427 = vld [vmem:[#allocation2] sm:$0xf]
      %v2428 = vld [vmem:[#allocation2 + $0x4] sm:$0xf]
      %v2429 = vld [vmem:[#allocation2 + $0x8] sm:$0xf]
      %v2430 = vld [vmem:[#allocation2 + $0xc] sm:$0xf]
      %v2431 = vld [vmem:[#allocation2 + $0x10] sm:$0xf]
      %v2432 = vld [vmem:[#allocation2 + $0x14] sm:$0xf]
      %v2433 = vld [vmem:[#allocation2 + $0x18] sm:$0xf]
      %v2434 = vld [vmem:[#allocation2 + $0x1c] sm:$0xf]
      %v2435 = vld [vmem:[#allocation2 + $0x20] sm:$0xf]
      %v2436 = vld [vmem:[#allocation2 + $0x24] sm:$0xf]
      %v2437 = vld [vmem:[#allocation2 + $0x28] sm:$0xf]
      %v2438 = vld [vmem:[#allocation2 + $0x2c] sm:$0xf]
      %v2439 = vld [vmem:[#allocation2 + $0x30] sm:$0xf]
      %v2440 = vld [vmem:[#allocation2 + $0x34] sm:$0xf]
      %v2441 = vld [vmem:[#allocation2 + $0x38] sm:$0xf]
      %v2442 = vld [vmem:[#allocation2 + $0x3c] sm:$0xf]
      %v2443 = vld [vmem:[%s1] sm:$0xf]
      %v2444 = vld [vmem:[%s1 + $0x4] sm:$0xf]
      %v2445 = vld [vmem:[%s1 + $0x8] sm:$0xf]
      %v2446 = vld [vmem:[%s1 + $0xc] sm:$0xf]
      %v2447 = vld [vmem:[%s1 + $0x10] sm:$0xf]
      %v2448 = vld [vmem:[%s1 + $0x14] sm:$0xf]
      %v2449 = vld [vmem:[%s1 + $0x18] sm:$0xf]
      %v2450 = vld [vmem:[%s1 + $0x1c] sm:$0xf]
      %v2451 = vld [vmem:[%s1 + $0x20] sm:$0xf]
      %v2452 = vld [vmem:[%s1 + $0x24] sm:$0xf]
      %v2453 = vld [vmem:[%s1 + $0x28] sm:$0xf]
      %v2454 = vld [vmem:[%s1 + $0x2c] sm:$0xf]
      %v2455 = vld [vmem:[%s1 + $0x30] sm:$0x3]
      %v2456 = vld [vmem:[%s2] sm:$0x1]
      %v2458 = vperm.slane %v2456, 0
      %v2476 = vunpack.c.l.b16 %v2427
      %v2477 = vunpack.c.l.b16 %v2428
      %v2478 = vunpack.c.l.b16 %v2429
      %v2479 = vunpack.c.l.b16 %v2430
      %v2480 = vunpack.c.l.b16 %v2431
      %v2481 = vunpack.c.l.b16 %v2432
      %v2482 = vunpack.c.l.b16 %v2433
      %v2483 = vunpack.c.l.b16 %v2434
      %v2484 = vunpack.c.l.b16 %v2435
      %v2485 = vunpack.c.l.b16 %v2436
      %v2486 = vunpack.c.l.b16 %v2437
      %v2487 = vunpack.c.l.b16 %v2438
      %v2488 = vunpack.c.l.b16 %v2439
      %v2489 = vunpack.c.l.b16 %v2440
      %v2490 = vunpack.c.l.b16 %v2441
      %v2491 = vunpack.c.l.b16 %v2442
      %v2492 = vpack.c.b16 %v2477, %v2476
      %v2493 = vpack.c.b16 %v2479, %v2478
      %v2494 = vpack.c.b16 %v2481, %v2480
      %v2495 = vpack.c.b16 %v2483, %v2482
      %v2496 = vpack.c.b16 %v2485, %v2484
      %v2497 = vpack.c.b16 %v2487, %v2486
      %v2498 = vpack.c.b16 %v2489, %v2488
      %v2499 = vpack.c.b16 %v2491, %v2490
      %v2513 = vunpack.c.l.b16 %v2443
      %v2514 = vunpack.c.l.b16 %v2444
      %v2515 = vunpack.c.l.b16 %v2445
      %v2516 = vunpack.c.l.b16 %v2446
      %v2517 = vunpack.c.l.b16 %v2447
      %v2518 = vunpack.c.l.b16 %v2448
      %v2519 = vunpack.c.l.b16 %v2449
      %v2520 = vunpack.c.l.b16 %v2450
      %v2521 = vunpack.c.l.b16 %v2451
      %v2522 = vunpack.c.l.b16 %v2452
      %v2523 = vunpack.c.l.b16 %v2453
      %v2524 = vunpack.c.l.b16 %v2454
      %v2525 = vunpack.c.l.b16 %v2455
      %v2526 = vpack.c.b16 %v2514, %v2513
      %v2527 = vpack.c.b16 %v2516, %v2515
      %v2528 = vpack.c.b16 %v2518, %v2517
      %v2529 = vpack.c.b16 %v2520, %v2519
      %v2530 = vpack.c.b16 %v2522, %v2521
      %v2531 = vpack.c.b16 %v2524, %v2523
      %v2532 = vpack.c.b16 %v2525, %v2525
      %vm2539 = vcmask 818176
      %v2541 = vsel %vm2539, %v2492, 0
      %v2544 = vsel %vm2539, %v2493, 0
      %v2547 = vsel %vm2539, %v2494, 0
      %v2550 = vsel %vm2539, %v2495, 0
      %v2553 = vsel %vm2539, %v2496, 0
      %v2556 = vsel %vm2539, %v2497, 0
      %v2559 = vsel %vm2539, %v2498, 0
      %v2562 = vsel %vm2539, %v2499, 0
      %vm2564 = vcmask 1041408
      %v2566 = vsel %vm2564, %v2532, 0
      %2568 = vmatpush.bf16.msra.mxu0 0
      %2569 = vmatpush.bf16.msra.mxu0 %v2566
      %2570 = vmatpush.bf16.msra.mxu0 %v2531
      %2571 = vmatpush.bf16.msra.mxu0 %v2530
      %2572 = vmatpush.bf16.msra.mxu0 %v2529
      %2573 = vmatpush.bf16.msra.mxu0 %v2528
      %2574 = vmatpush.bf16.msra.mxu0 %v2527
      %2575 = vmatpush.bf16.msra.mxu0 %v2526
      %2576 = vmatmul.bf16.gmra.mxu0 %v2541
      %v2577 = vpop.f32.mrf.mxu0
      %v2578 = vadd.f32 %v2458, %v2577
      %v2579 = vpop.f32.mrf.mxu0
      %v2580 = vadd.f32 %v2458, %v2579
      %2581 = vmatmul.bf16.gmra.mxu0 %v2544
      %v2582 = vpop.f32.mrf.mxu0
      %v2583 = vadd.f32 %v2458, %v2582
      %v2584 = vpop.f32.mrf.mxu0
      %v2585 = vadd.f32 %v2458, %v2584
      %2586 = vmatmul.bf16.gmra.mxu0 %v2547
      %v2587 = vpop.f32.mrf.mxu0
      %v2588 = vadd.f32 %v2458, %v2587
      %v2589 = vpop.f32.mrf.mxu0
      %v2590 = vadd.f32 %v2458, %v2589
      %2591 = vmatmul.bf16.gmra.mxu0 %v2550
      %v2592 = vpop.f32.mrf.mxu0
      %v2593 = vadd.f32 %v2458, %v2592
      %v2594 = vpop.f32.mrf.mxu0
      %v2595 = vadd.f32 %v2458, %v2594
      %2596 = vmatmul.bf16.gmra.mxu0 %v2553
      %v2597 = vpop.f32.mrf.mxu0
      %v2598 = vadd.f32 %v2458, %v2597
      %v2599 = vpop.f32.mrf.mxu0
      %v2600 = vadd.f32 %v2458, %v2599
      %2601 = vmatmul.bf16.gmra.mxu0 %v2556
      %v2602 = vpop.f32.mrf.mxu0
      %v2603 = vadd.f32 %v2458, %v2602
      %v2604 = vpop.f32.mrf.mxu0
      %v2605 = vadd.f32 %v2458, %v2604
      %2606 = vmatmul.bf16.gmra.mxu0 %v2559
      %v2607 = vpop.f32.mrf.mxu0
      %v2608 = vadd.f32 %v2458, %v2607
      %v2609 = vpop.f32.mrf.mxu0
      %v2610 = vadd.f32 %v2458, %v2609
      %2611 = vmatmul.bf16.gmra.mxu0 %v2562
      %v2612 = vpop.f32.mrf.mxu0
      %v2613 = vadd.f32 %v2458, %v2612
      %v2614 = vpop.f32.mrf.mxu0
      %v2615 = vadd.f32 %v2458, %v2614
      %2616 = vdwg.mxu0
      %v2617 = vmax.f32 %v2578, 0.0
      %v2618 = vmax.f32 %v2580, 0.0
      %v2619 = vmax.f32 %v2583, 0.0
      %v2620 = vmax.f32 %v2585, 0.0
      %v2621 = vmax.f32 %v2588, 0.0
      %v2622 = vmax.f32 %v2590, 0.0
      %v2623 = vmax.f32 %v2593, 0.0
      %v2624 = vmax.f32 %v2595, 0.0
      %v2625 = vmax.f32 %v2598, 0.0
      %v2626 = vmax.f32 %v2600, 0.0
      %v2627 = vmax.f32 %v2603, 0.0
      %v2628 = vmax.f32 %v2605, 0.0
      %v2629 = vmax.f32 %v2608, 0.0
      %v2630 = vmax.f32 %v2610, 0.0
      %v2631 = vmax.f32 %v2613, 0.0
      %v2632 = vmax.f32 %v2615, 0.0
      %vm2633 = vcmask 64512
      %2634 = vst.msk [vmem:[%s194] sm:$0xff] %vm2633, %v2617
      %2635 = vst.msk [vmem:[%s194 + $0x8] sm:$0xff] %vm2633, %v2618
      %2636 = vst.msk [vmem:[%s194 + $0x10] sm:$0xff] %vm2633, %v2619
      %2637 = vst.msk [vmem:[%s194 + $0x18] sm:$0xff] %vm2633, %v2620
      %2638 = vst.msk [vmem:[%s194 + $0x20] sm:$0xff] %vm2633, %v2621
      %2639 = vst.msk [vmem:[%s194 + $0x28] sm:$0xff] %vm2633, %v2622
      %2640 = vst.msk [vmem:[%s194 + $0x30] sm:$0xff] %vm2633, %v2623
      %2641 = vst.msk [vmem:[%s194 + $0x38] sm:$0xff] %vm2633, %v2624
      %2642 = vst.msk [vmem:[%s194 + $0x40] sm:$0xff] %vm2633, %v2625
      %2643 = vst.msk [vmem:[%s194 + $0x48] sm:$0xff] %vm2633, %v2626
      %2644 = vst.msk [vmem:[%s194 + $0x50] sm:$0xff] %vm2633, %v2627
      %2645 = vst.msk [vmem:[%s194 + $0x58] sm:$0xff] %vm2633, %v2628
      %2646 = vst.msk [vmem:[%s194 + $0x60] sm:$0xff] %vm2633, %v2629
      %2647 = vst.msk [vmem:[%s194 + $0x68] sm:$0xff] %vm2633, %v2630
      %2648 = vst.msk [vmem:[%s194 + $0x70] sm:$0xff] %vm2633, %v2631
      %2649 = vst.msk [vmem:[%s194 + $0x78] sm:$0xff] %vm2633, %v2632
      %s2650 = smul.u32 8, %s19
      %p2651 = scmp.lt.s32.totalorder %s18, 1
      %s2652 = scalar_select %p2651, %s18, 1
      %p2653 = scmp.lt.s32.totalorder %s2650, 15
      %s2654 = scalar_select %p2653, %s2650, 15
      %s2655 = smul.addr %s2654, 2
      %s2656 = smul.addr %s2652, 32
      %s2657 = sadd.s32 %s2655, %s2656
      %s2658 = smul.addr %s2657, 8
      %s2659 = scalar_lea.vmem %s3, %s2658
      // Predicated region
      $region33: #{msrb_forward.2} parent=31 // pred_check
        %p2660 = pneg %p114
      $region34: #{msrb_forward.2} parent=31 // pred_check_branch
        %2662 = sbr.rel (%p2660) target = $region36
      $region35: #{msrb_forward.2} parent=31 // pred_region
        %s2663 = smul.u32 8, %s19
      $region36: #{msrb_forward.2} parent=31 // pred_fallthru
        _
    $region32: #{msrb_forward.2} parent=5 // pred_fallthru
      _
    %p2664 = scmp.le.s32.totalorder 2, %s9
    // Predicated region
    $region37: #{msrb_forward.2} parent=5 // pred_check
      %p2665 = pneg %p2664
    $region38: #{msrb_forward.2} parent=5 // pred_check_branch
      %2667 = sbr.rel (%p2665) target = $region40
    $region39: #{msrb_forward.2} parent=5 // pred_region
      %s2668 = ssub.s32 %s9, 2
      // Predicated region
      $region41: #{msrb_forward.2} parent=39 // pred_check
        %p2669 = pneg %p120
      $region42: #{msrb_forward.2} parent=39 // pred_check_branch
        %2671 = sbr.rel (%p2669) target = $region44
      $region43: #{msrb_forward.2} parent=39 // pred_region
        %s2672 = smul.u32 8, %s21
        %p2673 = scmp.lt.s32.totalorder %s20, 1
        %s2674 = scalar_select %p2673, %s20, 1
        %p2675 = scmp.lt.s32.totalorder %s2672, 15
        %s2676 = scalar_select %p2675, %s2672, 15
        %s2677 = smul.addr %s2676, 2
        %s2678 = smul.addr %s2674, 32
        %s2679 = sadd.s32 %s2677, %s2678
        %s2680 = smul.addr %s2679, 8
        %s2681 = scalar_lea.vmem %s3, %s2680
      $region44: #{msrb_forward.2} parent=39 // pred_fallthru
        _
    $region40: #{msrb_forward.2} parent=5 // pred_fallthru
      _
  $region6: #{msrb_forward.2} parent=0 // loop_footer
    %s13 = sadd.s32 1, %s9
  $region7: #{msrb_forward.2} parent=0 // loop_footer_branch
    %8 = sbr.rel target = $region3
  $region8: #{msrb_forward.2} parent=0 // loop_exit
    _

// kernel: msrb_forward.3
$region0: #{msrb_forward.3}
  #allocation0 [shape = 'u32[]', space=smem, size = 0x4, offset = 0x4, fixed_abs, tag = 'smem constant byte address 0x4 - core index']
  #allocation1 [shape = 'u32[72,128]{1,0:T(1,128)}', space=vmem, size = 0x9000, scoped, tag = 'internal scratch']
  #allocation2 [shape = 'bf16[128,200]{1,0:T(8,128)(2,1)}', space=vmem, size = 0x10000, scoped, tag = 'scratch operand']
  %s0 = inlined_call_operand.vmem [shape: f32[2,20,20,8], index: 0, kind: input, shape index: {}]
  %s1 = inlined_call_operand.vmem [shape: bf16[200,16], index: 1, kind: input, shape index: {}]
  %s2 = inlined_call_operand.vmem [shape: f32[1,16], index: 2, kind: input, shape index: {}]
  %s3 = inlined_call_operand.vmem [shape: bf16[16,4], index: 3, kind: input, shape index: {}]
  %s4 = inlined_call_operand.vmem [shape: f32[1,4], index: 4, kind: input, shape index: {}]
  %s5 = inlined_call_operand.vmem [shape: f32[2,16,16,4], index: 5, kind: input, shape index: {}]
  %s6 = inlined_call_operand.vmem [shape: f32[2,16,16,4], index: 6, kind: output, shape index: {}]
  %s7 = sld [smem:[#allocation0]]
  $region57: #{msrb_forward.3} parent=0
    _
  %s9 = ssub.s32 1, %s7
  %s10 = scalar_select 0, %s9, %s7
  loop: start=0, step=1, limit=6
  $region2: #{msrb_forward.3} parent=0 // loop_pre_header
    _
  $region3: #{msrb_forward.3} parent=0 // loop_header
    %s12 = sphi 0, %s16
    %p13 = scmp.ge.s32.totalorder %s12, 6
    %s19 = sphi 0, %s31
    %s20 = sphi 0, %s27
    %s21 = sphi 0, %s19
    %s22 = sphi 0, %s20
    %s23 = sphi 0, %s21
    %s24 = sphi 0, %s22
    %s34 = sphi 0, %s36
    %s37 = sphi 0, %s34
    %s38 = sphi 0, %s37
    %s54 = sphi 0, %s38
    %s58 = sphi 0, %s58
    %s60 = sphi 0, %s58
    %s61 = sphi 0, %s60
    %s75 = sphi 0, %s61
    %s79 = sphi 0, %s79
    %s81 = sphi 0, %s79
    %s82 = sphi 0, %s81
    %s96 = sphi 0, %s82
    %s100 = sphi 0, %s100
    %s102 = sphi 0, %s100
    %s103 = sphi 0, %s102
    %s117 = sphi 0, %s103
    %s121 = sphi 0, %s121
    %s123 = sphi 0, %s121
    %s124 = sphi 0, %s123
    %s138 = sphi 0, %s124
    %s146 = sphi 0, %s148
    %s149 = sphi 0, %s146
    %s150 = sphi 0, %s149
    %s166 = sphi 0, %s150
    %s174 = sphi 0, %s176
    %s177 = sphi 0, %s174
    %s178 = sphi 0, %s177
    %s194 = sphi 0, %s178
  $region4: #{msrb_forward.3} parent=0 // loop_header_branch
    %15 = sbr.rel (%p13) target = $region8
  $region5: #{msrb_forward.3} parent=0 // loop_body
    %s17 = ssub.s32 %s12, 1
    %s18 = ssub.s32 %s12, 2
    %s25 = sadd.s32 1, %s20
    %p26 = scmp.ge.s32.totalorder %s25, 2
    %s27 = scalar_select %p26, 0, %s25
    %s28 = sadd.s32 1, %s19
    %s29 = scalar_select %p26, %s28, %s19
    %p30 = scmp.ge.s32.totalorder %s29, 2
    %s31 = scalar_select %p30, 0, %s29
    %s32 = ssub.s32 %s19, %s31
    %p33 = scmp.eq.s32.totalorder %s32, 0
    %s35 = sadd.s32 %s34, 1
    %s36 = scalar_select %p33, %s34, %s35
    %p39 = pneg %p33
    %p40 = scmp.eq.s32.totalorder %s12, 3
    %p41 = por %p39, %p40
    %p42 = scmp.ne.s32.totalorder %s34, %s37
    %p43 = scmp.eq.s32.totalorder %s12, 0
    %p44 = por %p42, %p43
    %p45 = scmp.ne.s32.totalorder %s34, %s37
    %p46 = scmp.eq.s32.totalorder %s17, 3
    %p47 = por %p45, %p46
    %p48 = scmp.ne.s32.totalorder %s37, %s38
    %p49 = scmp.eq.s32.totalorder %s17, 0
    %p50 = por %p48, %p49
    %p51 = scmp.ne.s32.totalorder %s37, %s38
    %p52 = scmp.eq.s32.totalorder %s18, 3
    %p53 = por %p51, %p52
    %p55 = scmp.ne.s32.totalorder %s38, %s54
    %p56 = scmp.eq.s32.totalorder %s18, 0
    %p57 = por %p55, %p56
    %s59 = sadd.s32 %s58, 1
    %p62 = scmp.eq.s32.totalorder %s12, 3
    %p63 = scmp.ne.s32.totalorder %s58, %s60
    %p64 = scmp.eq.s32.totalorder %s12, 0
    %p65 = por %p63, %p64
    %p66 = scmp.ne.s32.totalorder %s58, %s60
    %p67 = scmp.eq.s32.totalorder %s17, 3
    %p68 = por %p66, %p67
    %p69 = scmp.ne.s32.totalorder %s60, %s61
    %p70 = scmp.eq.s32.totalorder %s17, 0
    %p71 = por %p69, %p70
    %p72 = scmp.ne.s32.totalorder %s60, %s61
    %p73 = scmp.eq.s32.totalorder %s18, 3
    %p74 = por %p72, %p73
    %p76 = scmp.ne.s32.totalorder %s61, %s75
    %p77 = scmp.eq.s32.totalorder %s18, 0
    %p78 = por %p76, %p77
    %s80 = sadd.s32 %s79, 1
    %p83 = scmp.eq.s32.totalorder %s12, 3
    %p84 = scmp.ne.s32.totalorder %s79, %s81
    %p85 = scmp.eq.s32.totalorder %s12, 0
    %p86 = por %p84, %p85
    %p87 = scmp.ne.s32.totalorder %s79, %s81
    %p88 = scmp.eq.s32.totalorder %s17, 3
    %p89 = por %p87, %p88
    %p90 = scmp.ne.s32.totalorder %s81, %s82
    %p91 = scmp.eq.s32.totalorder %s17, 0
    %p92 = por %p90, %p91
    %p93 = scmp.ne.s32.totalorder %s81, %s82
    %p94 = scmp.eq.s32.totalorder %s18, 3
    %p95 = por %p93, %p94
    %p97 = scmp.ne.s32.totalorder %s82, %s96
    %p98 = scmp.eq.s32.totalorder %s18, 0
    %p99 = por %p97, %p98
    %s101 = sadd.s32 %s100, 1
    %p104 = scmp.eq.s32.totalorder %s12, 3
    %p105 = scmp.ne.s32.totalorder %s100, %s102
    %p106 = scmp.eq.s32.totalorder %s12, 0
    %p107 = por %p105, %p106
    %p108 = scmp.ne.s32.totalorder %s100, %s102
    %p109 = scmp.eq.s32.totalorder %s17, 3
    %p110 = por %p108, %p109
    %p111 = scmp.ne.s32.totalorder %s102, %s103
    %p112 = scmp.eq.s32.totalorder %s17, 0
    %p113 = por %p111, %p112
    %p114 = scmp.ne.s32.totalorder %s102, %s103
    %p115 = scmp.eq.s32.totalorder %s18, 3
    %p116 = por %p114, %p115
    %p118 = scmp.ne.s32.totalorder %s103, %s117
    %p119 = scmp.eq.s32.totalorder %s18, 0
    %p120 = por %p118, %p119
    %s122 = sadd.s32 %s121, 1
    %p125 = scmp.eq.s32.totalorder %s12, 3
    %p126 = scmp.ne.s32.totalorder %s121, %s123
    %p127 = scmp.eq.s32.totalorder %s12, 0
    %p128 = por %p126, %p127
    %p129 = scmp.ne.s32.totalorder %s121, %s123
    %p130 = scmp.eq.s32.totalorder %s17, 3
    %p131 = por %p129, %p130
    %p132 = scmp.ne.s32.totalorder %s123, %s124
    %p133 = scmp.eq.s32.totalorder %s17, 0
    %p134 = por %p132, %p133
    %p135 = scmp.ne.s32.totalorder %s123, %s124
    %p136 = scmp.eq.s32.totalorder %s18, 3
    %p137 = por %p135, %p136
    %p139 = scmp.ne.s32.totalorder %s124, %s138
    %p140 = scmp.eq.s32.totalorder %s18, 0
    %p141 = por %p139, %p140
    %s142 = ssub.s32 %s19, %s31
    %s143 = ssub.s32 %s20, %s27
    %s144 = sor.u32 %s142, %s143
    %p145 = scmp.eq.s32.totalorder %s144, 0
    %s147 = sadd.s32 %s146, 1
    %s148 = scalar_select %p145, %s146, %s147
    %p151 = pneg %p145
    %p152 = scmp.eq.s32.totalorder %s12, 3
    %p153 = por %p151, %p152
    %p154 = scmp.ne.s32.totalorder %s146, %s149
    %p155 = scmp.eq.s32.totalorder %s12, 0
    %p156 = por %p154, %p155
    %p157 = scmp.ne.s32.totalorder %s146, %s149
    %p158 = scmp.eq.s32.totalorder %s17, 3
    %p159 = por %p157, %p158
    %p160 = scmp.ne.s32.totalorder %s149, %s150
    %p161 = scmp.eq.s32.totalorder %s17, 0
    %p162 = por %p160, %p161
    %p163 = scmp.ne.s32.totalorder %s149, %s150
    %p164 = scmp.eq.s32.totalorder %s18, 3
    %p165 = por %p163, %p164
    %p167 = scmp.ne.s32.totalorder %s150, %s166
    %p168 = scmp.eq.s32.totalorder %s18, 0
    %p169 = por %p167, %p168
    %s170 = ssub.s32 %s19, %s31
    %s171 = ssub.s32 %s20, %s27
    %s172 = sor.u32 %s170, %s171
    %p173 = scmp.eq.s32.totalorder %s172, 0
    %s175 = sadd.s32 %s174, 1
    %s176 = scalar_select %p173, %s174, %s175
    %p179 = pneg %p173
    %p180 = scmp.eq.s32.totalorder %s12, 3
    %p181 = por %p179, %p180
    %p182 = scmp.ne.s32.totalorder %s174, %s177
    %p183 = scmp.eq.s32.totalorder %s12, 0
    %p184 = por %p182, %p183
    %p185 = scmp.ne.s32.totalorder %s174, %s177
    %p186 = scmp.eq.s32.totalorder %s17, 3
    %p187 = por %p185, %p186
    %p188 = scmp.ne.s32.totalorder %s177, %s178
    %p189 = scmp.eq.s32.totalorder %s17, 0
    %p190 = por %p188, %p189
    %p191 = scmp.ne.s32.totalorder %s177, %s178
    %p192 = scmp.eq.s32.totalorder %s18, 3
    %p193 = por %p191, %p192
    %p195 = scmp.ne.s32.totalorder %s178, %s194
    %p196 = scmp.eq.s32.totalorder %s18, 0
    %p197 = por %p195, %p196
    %p198 = scmp.le.s32.totalorder 1, %s12
    %p199 = scmp.lt.s32.totalorder %s12, 5
    %p200 = pnand %p198, %p199
    %p201 = pneg %p200
    // Predicated region
    $region9: #{msrb_forward.3} parent=5 // pred_check
      _
    $region10: #{msrb_forward.3} parent=5 // pred_check_branch
      %203 = sbr.rel (%p200) target = $region12
    $region11: #{msrb_forward.3} parent=5 // pred_region
      %s204 = ssub.s32 %s12, 1
      // Predicated region
      $region13: #{msrb_forward.3} parent=11 // pred_check
        %p205 = pneg %p71
      $region14: #{msrb_forward.3} parent=11 // pred_check_branch
        %207 = sbr.rel (%p205) target = $region16
      $region15: #{msrb_forward.3} parent=11 // pred_region
        _
      $region16: #{msrb_forward.3} parent=11 // pred_fallthru
        _
      // Predicated region
      $region17: #{msrb_forward.3} parent=11 // pred_check
        %p208 = pneg %p92
      $region18: #{msrb_forward.3} parent=11 // pred_check_branch
        %210 = sbr.rel (%p208) target = $region20
      $region19: #{msrb_forward.3} parent=11 // pred_region
        _
      $region20: #{msrb_forward.3} parent=11 // pred_fallthru
        _
      // Predicated region
      $region21: #{msrb_forward.3} parent=11 // pred_check
        %p211 = pneg %p113
      $region22: #{msrb_forward.3} parent=11 // pred_check_branch
        %213 = sbr.rel (%p211) target = $region24
      $region23: #{msrb_forward.3} parent=11 // pred_region
        _
      $region24: #{msrb_forward.3} parent=11 // pred_fallthru
        _
      // Predicated region
      $region25: #{msrb_forward.3} parent=11 // pred_check
        %p214 = pneg %p134
      $region26: #{msrb_forward.3} parent=11 // pred_check_branch
        %216 = sbr.rel (%p214) target = $region28
      $region27: #{msrb_forward.3} parent=11 // pred_region
        _
      $region28: #{msrb_forward.3} parent=11 // pred_fallthru
        _
    $region12: #{msrb_forward.3} parent=5 // pred_fallthru
      _
    %p217 = scmp.lt.s32.totalorder %s12, 4
    // Predicated region
    $region29: #{msrb_forward.3} parent=5 // pred_check
      %p218 = pneg %p217
    $region30: #{msrb_forward.3} parent=5 // pred_check_branch
      %220 = sbr.rel (%p218) target = $region32
    $region31: #{msrb_forward.3} parent=5 // pred_region
      // Predicated region
      $region33: #{msrb_forward.3} parent=31 // pred_check
        %p221 = pneg %p44
      $region34: #{msrb_forward.3} parent=31 // pred_check_branch
        %223 = sbr.rel (%p221) target = $region36
      $region35: #{msrb_forward.3} parent=31 // pred_region
        %p224 = scmp.lt.s32.totalorder %s19, 1
        %s225 = scalar_select %p224, %s19, 1
        %s226 = smul.addr %s225, 60
        %s227 = smul.addr %s226, 8
        %s228 = scalar_lea.vmem %s0, %s227
      $region36: #{msrb_forward.3} parent=31 // pred_fallthru
        _
      // Predicated region
      $region37: #{msrb_forward.3} parent=31 // pred_check
        %p229 = pneg %p156
      $region38: #{msrb_forward.3} parent=31 // pred_check_branch
        %231 = sbr.rel (%p229) target = $region40
      $region39: #{msrb_forward.3} parent=31 // pred_region
        %s232 = smul.u32 8, %s20
        %p233 = scmp.lt.s32.totalorder %s19, 1
        %s234 = scalar_select %p233, %s19, 1
        %p235 = scmp.lt.s32.totalorder %s232, 15
        %s236 = scalar_select %p235, %s232, 15
        %s237 = smul.addr %s236, 2
        %s238 = smul.addr %s234, 32
        %s239 = sadd.s32 %s237, %s238
        %s240 = smul.addr %s239, 8
        %s241 = scalar_lea.vmem %s5, %s240
        %s242 = smul.u32 8, %s20
      $region40: #{msrb_forward.3} parent=31 // pred_fallthru
        _
    $region32: #{msrb_forward.3} parent=5 // pred_fallthru
      _
    %p243 = scmp.le.s32.totalorder 1, %s12
    %p244 = scmp.lt.s32.totalorder %s12, 5
    %p245 = pnand %p243, %p244
    %p246 = pneg %p245
    // Predicated region
    $region41: #{msrb_forward.3} parent=5 // pred_check
      _
    $region42: #{msrb_forward.3} parent=5 // pred_check_branch
      %248 = sbr.rel (%p245) target = $region44
    $region43: #{msrb_forward.3} parent=5 // pred_region
      %s249 = ssub.s32 %s12, 1
      %p250 = scmp.lt.s32.totalorder %s21, 1
      %s251 = scalar_select %p250, %s21, 1
      %s252 = smul.addr %s251, 60
      %s253 = smul.addr %s252, 8
      %s254 = scalar_lea.vmem %s0, %s253
      %p255 = pneg %p50
      %p256 = pneg %p47
      %p257 = pneg %p71
      %p258 = pneg %p68
      %p259 = pneg %p92
      %p260 = pneg %p89
      %p261 = pneg %p113
      %p262 = pneg %p110
      %p263 = pneg %p134
      %p264 = pneg %p131
      %s265 = smul.u32 8, %s22
      %p266 = scmp.lt.s32.totalorder %s21, 1
      %s267 = scalar_select %p266, %s21, 1
      %p268 = scmp.lt.s32.totalorder %s265, 15
      %s269 = scalar_select %p268, %s265, 15
      %s270 = smul.addr %s269, 2
      %s271 = smul.addr %s267, 32
      %s272 = sadd.s32 %s270, %s271
      %s273 = smul.addr %s272, 8
      %s274 = scalar_lea.vmem %s5, %s273
      %p275 = pneg %p162
      %p276 = pneg %p159
      %p277 = pneg %p190
      %p278 = pneg %p187
      %s279 = smul.u32 8, %s22
      %p280 = scmp.lt.s32.totalorder %s21, 1
      %s281 = scalar_select %p280, %s21, 1
      %p282 = scmp.lt.s32.totalorder %s279, 15
      %s283 = scalar_select %p282, %s279, 15
      %s284 = smul.addr %s283, 2
      %s285 = smul.addr %s281, 32
      %s286 = sadd.s32 %s284, %s285
      %s287 = smul.addr %s286, 8
      %s288 = scalar_lea.vmem %s6, %s287
      %p289 = scmp.lt.s32.totalorder %s21, 1
      %s290 = scalar_select %p289, %s21, 1
      %s291 = smul.addr %s290, 60
      %s292 = smul.addr %s291, 8
      %s293 = scalar_lea.vmem %s0, %s292
      %s294 = smul.u32 8, %s22
      %p295 = scmp.lt.s32.totalorder %s21, 1
      %s296 = scalar_select %p295, %s21, 1
      %p297 = scmp.lt.s32.totalorder %s294, 15
      %s298 = scalar_select %p297, %s294, 15
      %s299 = smul.addr %s298, 2
      %s300 = smul.addr %s296, 32
      %s301 = sadd.s32 %s299, %s300
      %s302 = smul.addr %s301, 8
      %s303 = scalar_lea.vmem %s5, %s302
      %s304 = smul.u32 8, %s22
      %s305 = smul.u32 8, %s22
      %p306 = scmp.lt.s32.totalorder %s21, 1
      %s307 = scalar_select %p306, %s21, 1
      %p308 = scmp.lt.s32.totalorder %s305, 15
      %s309 = scalar_select %p308, %s305, 15
      %s310 = smul.addr %s309, 2
      %s311 = smul.addr %s307, 32
      %s312 = sadd.s32 %s310, %s311
      %s313 = smul.addr %s312, 8
      %s314 = scalar_lea.vmem %s6, %s313
      %s315 = smul.u32 8, %s22
      %s317 = smul.u32 %s22, 8
      %s318 = smul.u32 %s317, 24
      %s319 = scalar_lea.vmem %s293, %s318
      %v320 = vld [vmem:[%s319] sm:$0xff]
      %v321 = vld [vmem:[%s319 + $0x8] sm:$0xff]
      %v322 = vld [vmem:[%s319 + $0x10] sm:$0xf]
      %v323 = vld [vmem:[%s319 + $0x18] sm:$0xff]
      %v324 = vld [vmem:[%s319 + $0x20] sm:$0xff]
      %v325 = vld [vmem:[%s319 + $0x28] sm:$0xf]
      %v326 = vld [vmem:[%s319 + $0x30] sm:$0xff]
      %v327 = vld [vmem:[%s319 + $0x38] sm:$0xff]
      %v328 = vld [vmem:[%s319 + $0x40] sm:$0xf]
      %v329 = vld [vmem:[%s319 + $0x48] sm:$0xff]
      %v330 = vld [vmem:[%s319 + $0x50] sm:$0xff]
      %v331 = vld [vmem:[%s319 + $0x58] sm:$0xf]
      %v332 = vld [vmem:[%s319 + $0x60] sm:$0xff]
      %v333 = vld [vmem:[%s319 + $0x68] sm:$0xff]
      %v334 = vld [vmem:[%s319 + $0x70] sm:$0xf]
      %v335 = vld [vmem:[%s319 + $0x78] sm:$0xff]
      %v336 = vld [vmem:[%s319 + $0x80] sm:$0xff]
      %v337 = vld [vmem:[%s319 + $0x88] sm:$0xf]
      %v338 = vld [vmem:[%s319 + $0x90] sm:$0xff]
      %v339 = vld [vmem:[%s319 + $0x98] sm:$0xff]
      %v340 = vld [vmem:[%s319 + $0xa0] sm:$0xf]
      %v341 = vld [vmem:[%s319 + $0xa8] sm:$0xff]
      %v342 = vld [vmem:[%s319 + $0xb0] sm:$0xff]
      %v343 = vld [vmem:[%s319 + $0xb8] sm:$0xf]
      %v344 = vld [vmem:[%s319 + $0xc0] sm:$0xff]
      %v345 = vld [vmem:[%s319 + $0xc8] sm:$0xff]
      %v346 = vld [vmem:[%s319 + $0xd0] sm:$0xf]
      %v347 = vld [vmem:[%s319 + $0xd8] sm:$0xff]
      %v348 = vld [vmem:[%s319 + $0xe0] sm:$0xff]
      %v349 = vld [vmem:[%s319 + $0xe8] sm:$0xf]
      %v350 = vld [vmem:[%s319 + $0xf0] sm:$0xff]
      %v351 = vld [vmem:[%s319 + $0xf8] sm:$0xff]
      %v352 = vld [vmem:[%s319 + $0x100] sm:$0xf]
      %v353 = vld [vmem:[%s319 + $0x108] sm:$0xff]
      %v354 = vld [vmem:[%s319 + $0x110] sm:$0xff]
      %v355 = vld [vmem:[%s319 + $0x118] sm:$0xf]
      %v356 = vpack.c.bf16 %v320, %v320
      %v357 = vpack.c.bf16 %v321, %v321
      %v358 = vpack.c.bf16 %v323, %v323
      %v359 = vpack.c.bf16 %v324, %v324
      %v360 = vpack.c.bf16 %v326, %v326
      %v361 = vpack.c.bf16 %v327, %v327
      %v362 = vpack.c.bf16 %v329, %v329
      %v363 = vpack.c.bf16 %v330, %v330
      %v364 = vpack.c.bf16 %v332, %v332
      %v365 = vpack.c.bf16 %v333, %v333
      %v366 = vpack.c.bf16 %v335, %v335
      %v367 = vpack.c.bf16 %v336, %v336
      %v368 = vpack.c.bf16 %v338, %v338
      %v369 = vpack.c.bf16 %v339, %v339
      %v370 = vpack.c.bf16 %v341, %v341
      %v371 = vpack.c.bf16 %v342, %v342
      %vm372 = vcmask 60416
      %373 = vst.msk [vmem:[#allocation2] sm:$0xf] %vm372, %v356
      %374 = vst.msk [vmem:[#allocation2 + $0x8] sm:$0xf] %vm372, %v357
      %375 = vst.msk [vmem:[#allocation2 + $0x10] sm:$0xf] %vm372, %v358
      %376 = vst.msk [vmem:[#allocation2 + $0x18] sm:$0xf] %vm372, %v359
      %377 = vst.msk [vmem:[#allocation2 + $0x20] sm:$0xf] %vm372, %v360
      %378 = vst.msk [vmem:[#allocation2 + $0x28] sm:$0xf] %vm372, %v361
      %379 = vst.msk [vmem:[#allocation2 + $0x30] sm:$0xf] %vm372, %v362
      %380 = vst.msk [vmem:[#allocation2 + $0x38] sm:$0xf] %vm372, %v363
      %381 = vst.msk [vmem:[#allocation2 + $0x40] sm:$0xf] %vm372, %v364
      %382 = vst.msk [vmem:[#allocation2 + $0x48] sm:$0xf] %vm372, %v365
      %383 = vst.msk [vmem:[#allocation2 + $0x50] sm:$0xf] %vm372, %v366
      %384 = vst.msk [vmem:[#allocation2 + $0x58] sm:$0xf] %vm372, %v367
      %385 = vst.msk [vmem:[#allocation2 + $0x60] sm:$0xf] %vm372, %v368
      %386 = vst.msk [vmem:[#allocation2 + $0x68] sm:$0xf] %vm372, %v369
      %387 = vst.msk [vmem:[#allocation2 + $0x70] sm:$0xf] %vm372, %v370
      %388 = vst.msk [vmem:[#allocation2 + $0x78] sm:$0xf] %vm372, %v371
      %vm413 = vcmask 1046528
      %v414 = vrot.slane %v320, 1
      %v415 = vrot.slane %v321, 1
      %v416 = vsel %vm413, %v414, %v415
      %v417 = vrot.slane %v322, 1
      %v418 = vsel %vm413, %v415, %v417
      %v419 = vrot.slane %v323, 1
      %v420 = vrot.slane %v324, 1
      %v421 = vsel %vm413, %v419, %v420
      %v422 = vrot.slane %v325, 1
      %v423 = vsel %vm413, %v420, %v422
      %v424 = vrot.slane %v326, 1
      %v425 = vrot.slane %v327, 1
      %v426 = vsel %vm413, %v424, %v425
      %v427 = vrot.slane %v328, 1
      %v428 = vsel %vm413, %v425, %v427
      %v429 = vrot.slane %v329, 1
      %v430 = vrot.slane %v330, 1
      %v431 = vsel %vm413, %v429, %v430
      %v432 = vrot.slane %v331, 1
      %v433 = vsel %vm413, %v430, %v432
      %v434 = vrot.slane %v332, 1
      %v435 = vrot.slane %v333, 1
      %v436 = vsel %vm413, %v434, %v435
      %v437 = vrot.slane %v334, 1
      %v438 = vsel %vm413, %v435, %v437
      %v439 = vrot.slane %v335, 1
      %v440 = vrot.slane %v336, 1
      %v441 = vsel %vm413, %v439, %v440
      %v442 = vrot.slane %v337, 1
      %v443 = vsel %vm413, %v440, %v442
      %v444 = vrot.slane %v338, 1
      %v445 = vrot.slane %v339, 1
      %v446 = vsel %vm413, %v444, %v445
      %v447 = vrot.slane %v340, 1
      %v448 = vsel %vm413, %v445, %v447
      %v449 = vrot.slane %v341, 1
      %v450 = vrot.slane %v342, 1
      %v451 = vsel %vm413, %v449, %v450
      %v452 = vrot.slane %v343, 1
      %v453 = vsel %vm413, %v450, %v452
      %v470 = vpack.c.bf16 %v416, %v416
      %v471 = vpack.c.bf16 %v418, %v418
      %v472 = vpack.c.bf16 %v421, %v421
      %v473 = vpack.c.bf16 %v423, %v423
      %v474 = vpack.c.bf16 %v426, %v426
      %v475 = vpack.c.bf16 %v428, %v428
      %v476 = vpack.c.bf16 %v431, %v431
      %v477 = vpack.c.bf16 %v433, %v433
      %v478 = vpack.c.bf16 %v436, %v436
      %v479 = vpack.c.bf16 %v438, %v438
      %v480 = vpack.c.bf16 %v441, %v441
      %v481 = vpack.c.bf16 %v443, %v443
      %v482 = vpack.c.bf16 %v446, %v446
      %v483 = vpack.c.bf16 %v448, %v448
      %v484 = vpack.c.bf16 %v451, %v451
      %v485 = vpack.c.bf16 %v453, %v453
      %502 = vrot.lane.b32.xlu0 %v470, 8
      %v503 = vpop.permute.xlu0 %502
      %504 = vrot.lane.b32.xlu0 %v471, 8
      %v505 = vpop.permute.xlu0 %504
      %506 = vrot.lane.b32.xlu0 %v472, 8
      %v507 = vpop.permute.xlu0 %506
      %508 = vrot.lane.b32.xlu0 %v473, 8
      %v509 = vpop.permute.xlu0 %508
      %510 = vrot.lane.b32.xlu0 %v474, 8
      %v511 = vpop.permute.xlu0 %510
      %512 = vrot.lane.b32.xlu0 %v475, 8
      %v513 = vpop.permute.xlu0 %512
      %514 = vrot.lane.b32.xlu0 %v476, 8
      %v515 = vpop.permute.xlu0 %514
      %516 = vrot.lane.b32.xlu0 %v477, 8
      %v517 = vpop.permute.xlu0 %516
      %518 = vrot.lane.b32.xlu0 %v478, 8
      %v519 = vpop.permute.xlu0 %518
      %520 = vrot.lane.b32.xlu0 %v479, 8
      %v521 = vpop.permute.xlu0 %520
      %522 = vrot.lane.b32.xlu0 %v480, 8
      %v523 = vpop.permute.xlu0 %522
      %524 = vrot.lane.b32.xlu0 %v481, 8
      %v525 = vpop.permute.xlu0 %524
      %526 = vrot.lane.b32.xlu0 %v482, 8
      %v527 = vpop.permute.xlu0 %526
      %528 = vrot.lane.b32.xlu0 %v483, 8
      %v529 = vpop.permute.xlu0 %528
      %530 = vrot.lane.b32.xlu0 %v484, 8
      %v531 = vpop.permute.xlu0 %530
      %532 = vrot.lane.b32.xlu0 %v485, 8
      %v533 = vpop.permute.xlu0 %532
      %vm550 = vcmask 126016
      %551 = vst.msk [vmem:[#allocation2] sm:$0xf] %vm550, %v503
      %552 = vst.msk [vmem:[#allocation2 + $0x8] sm:$0xf] %vm550, %v505
      %553 = vst.msk [vmem:[#allocation2 + $0x10] sm:$0xf] %vm550, %v507
      %554 = vst.msk [vmem:[#allocation2 + $0x18] sm:$0xf] %vm550, %v509
      %555 = vst.msk [vmem:[#allocation2 + $0x20] sm:$0xf] %vm550, %v511
      %556 = vst.msk [vmem:[#allocation2 + $0x28] sm:$0xf] %vm550, %v513
      %557 = vst.msk [vmem:[#allocation2 + $0x30] sm:$0xf] %vm550, %v515
      %558 = vst.msk [vmem:[#allocation2 + $0x38] sm:$0xf] %vm550, %v517
      %559 = vst.msk [vmem:[#allocation2 + $0x40] sm:$0xf] %vm550, %v519
      %560 = vst.msk [vmem:[#allocation2 + $0x48] sm:$0xf] %vm550, %v521
      %561 = vst.msk [vmem:[#allocation2 + $0x50] sm:$0xf] %vm550, %v523
      %562 = vst.msk [vmem:[#allocation2 + $0x58] sm:$0xf] %vm550, %v525
      %563 = vst.msk [vmem:[#allocation2 + $0x60] sm:$0xf] %vm550, %v527
      %564 = vst.msk [vmem:[#allocation2 + $0x68] sm:$0xf] %vm550, %v529
      %565 = vst.msk [vmem:[#allocation2 + $0x70] sm:$0xf] %vm550, %v531
      %566 = vst.msk [vmem:[#allocation2 + $0x78] sm:$0xf] %vm550, %v533
      %vm567 = vcmask 1045504
      %v568 = vrot.slane %v320, 2
      %v569 = vrot.slane %v321, 2
      %v570 = vsel %vm567, %v568, %v569
      %v571 = vrot.slane %v322, 2
      %v572 = vsel %vm567, %v569, %v571
      %v573 = vrot.slane %v323, 2
      %v574 = vrot.slane %v324, 2
      %v575 = vsel %vm567, %v573, %v574
      %v576 = vrot.slane %v325, 2
      %v577 = vsel %vm567, %v574, %v576
      %v578 = vrot.slane %v326, 2
      %v579 = vrot.slane %v327, 2
      %v580 = vsel %vm567, %v578, %v579
      %v581 = vrot.slane %v328, 2
      %v582 = vsel %vm567, %v579, %v581
      %v583 = vrot.slane %v329, 2
      %v584 = vrot.slane %v330, 2
      %v585 = vsel %vm567, %v583, %v584
      %v586 = vrot.slane %v331, 2
      %v587 = vsel %vm567, %v584, %v586
      %v588 = vrot.slane %v332, 2
      %v589 = vrot.slane %v333, 2
      %v590 = vsel %vm567, %v588, %v589
      %v591 = vrot.slane %v334, 2
      %v592 = vsel %vm567, %v589, %v591
      %v593 = vrot.slane %v335, 2
      %v594 = vrot.slane %v336, 2
      %v595 = vsel %vm567, %v593, %v594
      %v596 = vrot.slane %v337, 2
      %v597 = vsel %vm567, %v594, %v596
      %v598 = vrot.slane %v338, 2
      %v599 = vrot.slane %v339, 2
      %v600 = vsel %vm567, %v598, %v599
      %v601 = vrot.slane %v340, 2
      %v602 = vsel %vm567, %v599, %v601
      %v603 = vrot.slane %v341, 2
      %v604 = vrot.slane %v342, 2
      %v605 = vsel %vm567, %v603, %v604
      %v606 = vrot.slane %v343, 2
      %v607 = vsel %vm567, %v604, %v606
      %v624 = vpack.c.bf16 %v570, %v570
      %v625 = vpack.c.bf16 %v572, %v572
      %v626 = vpack.c.bf16 %v575, %v575
      %v627 = vpack.c.bf16 %v577, %v577
      %v628 = vpack.c.bf16 %v580, %v580
      %v629 = vpack.c.bf16 %v582, %v582
      %v630 = vpack.c.bf16 %v585, %v585
      %v631 = vpack.c.bf16 %v587, %v587
      %v632 = vpack.c.bf16 %v590, %v590
      %v633 = vpack.c.bf16 %v592, %v592
      %v634 = vpack.c.bf16 %v595, %v595
      %v635 = vpack.c.bf16 %v597, %v597
      %v636 = vpack.c.bf16 %v600, %v600
      %v637 = vpack.c.bf16 %v602, %v602
      %v638 = vpack.c.bf16 %v605, %v605
      %v639 = vpack.c.bf16 %v607, %v607
      %656 = vrot.lane.b32.xlu0 %v624, 16
      %v657 = vpop.permute.xlu0 %656
      %658 = vrot.lane.b32.xlu0 %v625, 16
      %v659 = vpop.permute.xlu0 %658
      %660 = vrot.lane.b32.xlu0 %v626, 16
      %v661 = vpop.permute.xlu0 %660
      %662 = vrot.lane.b32.xlu0 %v627, 16
      %v663 = vpop.permute.xlu0 %662
      %664 = vrot.lane.b32.xlu0 %v628, 16
      %v665 = vpop.permute.xlu0 %664
      %666 = vrot.lane.b32.xlu0 %v629, 16
      %v667 = vpop.permute.xlu0 %666
      %668 = vrot.lane.b32.xlu0 %v630, 16
      %v669 = vpop.permute.xlu0 %668
      %670 = vrot.lane.b32.xlu0 %v631, 16
      %v671 = vpop.permute.xlu0 %670
      %672 = vrot.lane.b32.xlu0 %v632, 16
      %v673 = vpop.permute.xlu0 %672
      %674 = vrot.lane.b32.xlu0 %v633, 16
      %v675 = vpop.permute.xlu0 %674
      %676 = vrot.lane.b32.xlu0 %v634, 16
      %v677 = vpop.permute.xlu0 %676
      %678 = vrot.lane.b32.xlu0 %v635, 16
      %v679 = vpop.permute.xlu0 %678
      %680 = vrot.lane.b32.xlu0 %v636, 16
      %v681 = vpop.permute.xlu0 %680
      %682 = vrot.lane.b32.xlu0 %v637, 16
      %v683 = vpop.permute.xlu0 %682
      %684 = vrot.lane.b32.xlu0 %v638, 16
      %v685 = vpop.permute.xlu0 %684
      %686 = vrot.lane.b32.xlu0 %v639, 16
      %v687 = vpop.permute.xlu0 %686
      %vm704 = vcmask 191616
      %705 = vst.msk [vmem:[#allocation2] sm:$0xf] %vm704, %v657
      %706 = vst.msk [vmem:[#allocation2 + $0x8] sm:$0xf] %vm704, %v659
      %707 = vst.msk [vmem:[#allocation2 + $0x10] sm:$0xf] %vm704, %v661
      %708 = vst.msk [vmem:[#allocation2 + $0x18] sm:$0xf] %vm704, %v663
      %709 = vst.msk [vmem:[#allocation2 + $0x20] sm:$0xf] %vm704, %v665
      %710 = vst.msk [vmem:[#allocation2 + $0x28] sm:$0xf] %vm704, %v667
      %711 = vst.msk [vmem:[#allocation2 + $0x30] sm:$0xf] %vm704, %v669
      %712 = vst.msk [vmem:[#allocation2 + $0x38] sm:$0xf] %vm704, %v671
      %713 = vst.msk [vmem:[#allocation2 + $0x40] sm:$0xf] %vm704, %v673
      %714 = vst.msk [vmem:[#allocation2 + $0x48] sm:$0xf] %vm704, %v675
      %715 = vst.msk [vmem:[#allocation2 + $0x50] sm:$0xf] %vm704, %v677
      %716 = vst.msk [vmem:[#allocation2 + $0x58] sm:$0xf] %vm704, %v679
      %717 = vst.msk [vmem:[#allocation2 + $0x60] sm:$0xf] %vm704, %v681
      %718 = vst.msk [vmem:[#allocation2 + $0x68] sm:$0xf] %vm704, %v683
      %719 = vst.msk [vmem:[#allocation2 + $0x70] sm:$0xf] %vm704, %v685
      %720 = vst.msk [vmem:[#allocation2 + $0x78] sm:$0xf] %vm704, %v687
      %vm721 = vcmask 1044480
      %v722 = vrot.slane %v320, 3
      %v723 = vrot.slane %v321, 3
      %v724 = vsel %vm721, %v722, %v723
      %v725 = vrot.slane %v322, 3
      %v726 = vsel %vm721, %v723, %v725
      %v727 = vrot.slane %v323, 3
      %v728 = vrot.slane %v324, 3
      %v729 = vsel %vm721, %v727, %v728
      %v730 = vrot.slane %v325, 3
      %v731 = vsel %vm721, %v728, %v730
      %v732 = vrot.slane %v326, 3
      %v733 = vrot.slane %v327, 3
      %v734 = vsel %vm721, %v732, %v733
      %v735 = vrot.slane %v328, 3
      %v736 = vsel %vm721, %v733, %v735
      %v737 = vrot.slane %v329, 3
      %v738 = vrot.slane %v330, 3
      %v739 = vsel %vm721, %v737, %v738
      %v740 = vrot.slane %v331, 3
      %v741 = vsel %vm721, %v738, %v740
      %v742 = vrot.slane %v332, 3
      %v743 = vrot.slane %v333, 3
      %v744 = vsel %vm721, %v742, %v743
      %v745 = vrot.slane %v334, 3
      %v746 = vsel %vm721, %v743, %v745
      %v747 = vrot.slane %v335, 3
      %v748 = vrot.slane %v336, 3
      %v749 = vsel %vm721, %v747, %v748
      %v750 = vrot.slane %v337, 3
      %v751 = vsel %vm721, %v748, %v750
      %v752 = vrot.slane %v338, 3
      %v753 = vrot.slane %v339, 3
      %v754 = vsel %vm721, %v752, %v753
      %v755 = vrot.slane %v340, 3
      %v756 = vsel %vm721, %v753, %v755
      %v757 = vrot.slane %v341, 3
      %v758 = vrot.slane %v342, 3
      %v759 = vsel %vm721, %v757, %v758
      %v760 = vrot.slane %v343, 3
      %v761 = vsel %vm721, %v758, %v760
      %v778 = vpack.c.bf16 %v724, %v724
      %v779 = vpack.c.bf16 %v726, %v726
      %v780 = vpack.c.bf16 %v729, %v729
      %v781 = vpack.c.bf16 %v731, %v731
      %v782 = vpack.c.bf16 %v734, %v734
      %v783 = vpack.c.bf16 %v736, %v736
      %v784 = vpack.c.bf16 %v739, %v739
      %v785 = vpack.c.bf16 %v741, %v741
      %v786 = vpack.c.bf16 %v744, %v744
      %v787 = vpack.c.bf16 %v746, %v746
      %v788 = vpack.c.bf16 %v749, %v749
      %v789 = vpack.c.bf16 %v751, %v751
      %v790 = vpack.c.bf16 %v754, %v754
      %v791 = vpack.c.bf16 %v756, %v756
      %v792 = vpack.c.bf16 %v759, %v759
      %v793 = vpack.c.bf16 %v761, %v761
      %810 = vrot.lane.b32.xlu0 %v778, 24
      %v811 = vpop.permute.xlu0 %810
      %812 = vrot.lane.b32.xlu0 %v779, 24
      %v813 = vpop.permute.xlu0 %812
      %814 = vrot.lane.b32.xlu0 %v780, 24
      %v815 = vpop.permute.xlu0 %814
      %816 = vrot.lane.b32.xlu0 %v781, 24
      %v817 = vpop.permute.xlu0 %816
      %818 = vrot.lane.b32.xlu0 %v782, 24
      %v819 = vpop.permute.xlu0 %818
      %820 = vrot.lane.b32.xlu0 %v783, 24
      %v821 = vpop.permute.xlu0 %820
      %822 = vrot.lane.b32.xlu0 %v784, 24
      %v823 = vpop.permute.xlu0 %822
      %824 = vrot.lane.b32.xlu0 %v785, 24
      %v825 = vpop.permute.xlu0 %824
      %826 = vrot.lane.b32.xlu0 %v786, 24
      %v827 = vpop.permute.xlu0 %826
      %828 = vrot.lane.b32.xlu0 %v787, 24
      %v829 = vpop.permute.xlu0 %828
      %830 = vrot.lane.b32.xlu0 %v788, 24
      %v831 = vpop.permute.xlu0 %830
      %832 = vrot.lane.b32.xlu0 %v789, 24
      %v833 = vpop.permute.xlu0 %832
      %834 = vrot.lane.b32.xlu0 %v790, 24
      %v835 = vpop.permute.xlu0 %834
      %836 = vrot.lane.b32.xlu0 %v791, 24
      %v837 = vpop.permute.xlu0 %836
      %838 = vrot.lane.b32.xlu0 %v792, 24
      %v839 = vpop.permute.xlu0 %838
      %840 = vrot.lane.b32.xlu0 %v793, 24
      %v841 = vpop.permute.xlu0 %840
      %vm858 = vcmask 257216
      %859 = vst.msk [vmem:[#allocation2] sm:$0xf] %vm858, %v811
      %860 = vst.msk [vmem:[#allocation2 + $0x8] sm:$0xf] %vm858, %v813
      %861 = vst.msk [vmem:[#allocation2 + $0x10] sm:$0xf] %vm858, %v815
      %862 = vst.msk [vmem:[#allocation2 + $0x18] sm:$0xf] %vm858, %v817
      %863 = vst.msk [vmem:[#allocation2 + $0x20] sm:$0xf] %vm858, %v819
      %864 = vst.msk [vmem:[#allocation2 + $0x28] sm:$0xf] %vm858, %v821
      %865 = vst.msk [vmem:[#allocation2 + $0x30] sm:$0xf] %vm858, %v823
      %866 = vst.msk [vmem:[#allocation2 + $0x38] sm:$0xf] %vm858, %v825
      %867 = vst.msk [vmem:[#allocation2 + $0x40] sm:$0xf] %vm858, %v827
      %868 = vst.msk [vmem:[#allocation2 + $0x48] sm:$0xf] %vm858, %v829
      %869 = vst.msk [vmem:[#allocation2 + $0x50] sm:$0xf] %vm858, %v831
      %870 = vst.msk [vmem:[#allocation2 + $0x58] sm:$0xf] %vm858, %v833
      %871 = vst.msk [vmem:[#allocation2 + $0x60] sm:$0xf] %vm858, %v835
      %872 = vst.msk [vmem:[#allocation2 + $0x68] sm:$0xf] %vm858, %v837
      %873 = vst.msk [vmem:[#allocation2 + $0x70] sm:$0xf] %vm858, %v839
      %874 = vst.msk [vmem:[#allocation2 + $0x78] sm:$0xf] %vm858, %v841
      %vm875 = vcmask 1043456
      %v876 = vrot.slane %v320, 4
      %v877 = vrot.slane %v321, 4
      %v878 = vsel %vm875, %v876, %v877
      %v879 = vrot.slane %v322, 4
      %v880 = vsel %vm875, %v877, %v879
      %v881 = vrot.slane %v323, 4
      %v882 = vrot.slane %v324, 4
      %v883 = vsel %vm875, %v881, %v882
      %v884 = vrot.slane %v325, 4
      %v885 = vsel %vm875, %v882, %v884
      %v886 = vrot.slane %v326, 4
      %v887 = vrot.slane %v327, 4
      %v888 = vsel %vm875, %v886, %v887
      %v889 = vrot.slane %v328, 4
      %v890 = vsel %vm875, %v887, %v889
      %v891 = vrot.slane %v329, 4
      %v892 = vrot.slane %v330, 4
      %v893 = vsel %vm875, %v891, %v892
      %v894 = vrot.slane %v331, 4
      %v895 = vsel %vm875, %v892, %v894
      %v896 = vrot.slane %v332, 4
      %v897 = vrot.slane %v333, 4
      %v898 = vsel %vm875, %v896, %v897
      %v899 = vrot.slane %v334, 4
      %v900 = vsel %vm875, %v897, %v899
      %v901 = vrot.slane %v335, 4
      %v902 = vrot.slane %v336, 4
      %v903 = vsel %vm875, %v901, %v902
      %v904 = vrot.slane %v337, 4
      %v905 = vsel %vm875, %v902, %v904
      %v906 = vrot.slane %v338, 4
      %v907 = vrot.slane %v339, 4
      %v908 = vsel %vm875, %v906, %v907
      %v909 = vrot.slane %v340, 4
      %v910 = vsel %vm875, %v907, %v909
      %v911 = vrot.slane %v341, 4
      %v912 = vrot.slane %v342, 4
      %v913 = vsel %vm875, %v911, %v912
      %v914 = vrot.slane %v343, 4
      %v915 = vsel %vm875, %v912, %v914
      %v932 = vpack.c.bf16 %v878, %v878
      %v933 = vpack.c.bf16 %v880, %v880
      %v934 = vpack.c.bf16 %v883, %v883
      %v935 = vpack.c.bf16 %v885, %v885
      %v936 = vpack.c.bf16 %v888, %v888
      %v937 = vpack.c.bf16 %v890, %v890
      %v938 = vpack.c.bf16 %v893, %v893
      %v939 = vpack.c.bf16 %v895, %v895
      %v940 = vpack.c.bf16 %v898, %v898
      %v941 = vpack.c.bf16 %v900, %v900
      %v942 = vpack.c.bf16 %v903, %v903
      %v943 = vpack.c.bf16 %v905, %v905
      %v944 = vpack.c.bf16 %v908, %v908
      %v945 = vpack.c.bf16 %v910, %v910
      %v946 = vpack.c.bf16 %v913, %v913
      %v947 = vpack.c.bf16 %v915, %v915
      %964 = vrot.lane.b32.xlu0 %v932, 32
      %v965 = vpop.permute.xlu0 %964
      %966 = vrot.lane.b32.xlu0 %v933, 32
      %v967 = vpop.permute.xlu0 %966
      %968 = vrot.lane.b32.xlu0 %v934, 32
      %v969 = vpop.permute.xlu0 %968
      %970 = vrot.lane.b32.xlu0 %v935, 32
      %v971 = vpop.permute.xlu0 %970
      %972 = vrot.lane.b32.xlu0 %v936, 32
      %v973 = vpop.permute.xlu0 %972
      %974 = vrot.lane.b32.xlu0 %v937, 32
      %v975 = vpop.permute.xlu0 %974
      %976 = vrot.lane.b32.xlu0 %v938, 32
      %v977 = vpop.permute.xlu0 %976
      %978 = vrot.lane.b32.xlu0 %v939, 32
      %v979 = vpop.permute.xlu0 %978
      %980 = vrot.lane.b32.xlu0 %v940, 32
      %v981 = vpop.permute.xlu0 %980
      %982 = vrot.lane.b32.xlu0 %v941, 32
      %v983 = vpop.permute.xlu0 %982
      %984 = vrot.lane.b32.xlu0 %v942, 32
      %v985 = vpop.permute.xlu0 %984
      %986 = vrot.lane.b32.xlu0 %v943, 32
      %v987 = vpop.permute.xlu0 %986
      %988 = vrot.lane.b32.xlu0 %v944, 32
      %v989 = vpop.permute.xlu0 %988
      %990 = vrot.lane.b32.xlu0 %v945, 32
      %v991 = vpop.permute.xlu0 %990
      %992 = vrot.lane.b32.xlu0 %v946, 32
      %v993 = vpop.permute.xlu0 %992
      %994 = vrot.lane.b32.xlu0 %v947, 32
      %v995 = vpop.permute.xlu0 %994
      %vm1012 = vcmask 322816
      %1013 = vst.msk [vmem:[#allocation2] sm:$0xf] %vm1012, %v965
      %1014 = vst.msk [vmem:[#allocation2 + $0x8] sm:$0xf] %vm1012, %v967
      %1015 = vst.msk [vmem:[#allocation2 + $0x10] sm:$0xf] %vm1012, %v969
      %1016 = vst.msk [vmem:[#allocation2 + $0x18] sm:$0xf] %vm1012, %v971
      %1017 = vst.msk [vmem:[#allocation2 + $0x20] sm:$0xf] %vm1012, %v973
      %1018 = vst.msk [vmem:[#allocation2 + $0x28] sm:$0xf] %vm1012, %v975
      %1019 = vst.msk [vmem:[#allocation2 + $0x30] sm:$0xf] %vm1012, %v977
      %1020 = vst.msk [vmem:[#allocation2 + $0x38] sm:$0xf] %vm1012, %v979
      %1021 = vst.msk [vmem:[#allocation2 + $0x40] sm:$0xf] %vm1012, %v981
      %1022 = vst.msk [vmem:[#allocation2 + $0x48] sm:$0xf] %vm1012, %v983
      %1023 = vst.msk [vmem:[#allocation2 + $0x50] sm:$0xf] %vm1012, %v985
      %1024 = vst.msk [vmem:[#allocation2 + $0x58] sm:$0xf] %vm1012, %v987
      %1025 = vst.msk [vmem:[#allocation2 + $0x60] sm:$0xf] %vm1012, %v989
      %1026 = vst.msk [vmem:[#allocation2 + $0x68] sm:$0xf] %vm1012, %v991
      %1027 = vst.msk [vmem:[#allocation2 + $0x70] sm:$0xf] %vm1012, %v993
      %1028 = vst.msk [vmem:[#allocation2 + $0x78] sm:$0xf] %vm1012, %v995
      %v1029 = vpack.c.bf16 %v344, %v344
      %v1030 = vpack.c.bf16 %v345, %v345
      %1047 = vrot.lane.b32.xlu0 %v358, 40
      %v1048 = vpop.permute.xlu0 %1047
      %1049 = vrot.lane.b32.xlu0 %v359, 40
      %v1050 = vpop.permute.xlu0 %1049
      %1051 = vrot.lane.b32.xlu0 %v360, 40
      %v1052 = vpop.permute.xlu0 %1051
      %1053 = vrot.lane.b32.xlu0 %v361, 40
      %v1054 = vpop.permute.xlu0 %1053
      %1055 = vrot.lane.b32.xlu0 %v362, 40
      %v1056 = vpop.permute.xlu0 %1055
      %1057 = vrot.lane.b32.xlu0 %v363, 40
      %v1058 = vpop.permute.xlu0 %1057
      %1059 = vrot.lane.b32.xlu0 %v364, 40
      %v1060 = vpop.permute.xlu0 %1059
      %1061 = vrot.lane.b32.xlu0 %v365, 40
      %v1062 = vpop.permute.xlu0 %1061
      %1063 = vrot.lane.b32.xlu0 %v366, 40
      %v1064 = vpop.permute.xlu0 %1063
      %1065 = vrot.lane.b32.xlu0 %v367, 40
      %v1066 = vpop.permute.xlu0 %1065
      %1067 = vrot.lane.b32.xlu0 %v368, 40
      %v1068 = vpop.permute.xlu0 %1067
      %1069 = vrot.lane.b32.xlu0 %v369, 40
      %v1070 = vpop.permute.xlu0 %1069
      %1071 = vrot.lane.b32.xlu0 %v370, 40
      %v1072 = vpop.permute.xlu0 %1071
      %1073 = vrot.lane.b32.xlu0 %v371, 40
      %v1074 = vpop.permute.xlu0 %1073
      %1075 = vrot.lane.b32.xlu0 %v1029, 40
      %v1076 = vpop.permute.xlu0 %1075
      %1077 = vrot.lane.b32.xlu0 %v1030, 40
      %v1078 = vpop.permute.xlu0 %1077
      %vm1095 = vcmask 388416
      %1096 = vst.msk [vmem:[#allocation2] sm:$0xf] %vm1095, %v1048
      %1097 = vst.msk [vmem:[#allocation2 + $0x8] sm:$0xf] %vm1095, %v1050
      %1098 = vst.msk [vmem:[#allocation2 + $0x10] sm:$0xf] %vm1095, %v1052
      %1099 = vst.msk [vmem:[#allocation2 + $0x18] sm:$0xf] %vm1095, %v1054
      %1100 = vst.msk [vmem:[#allocation2 + $0x20] sm:$0xf] %vm1095, %v1056
      %1101 = vst.msk [vmem:[#allocation2 + $0x28] sm:$0xf] %vm1095, %v1058
      %1102 = vst.msk [vmem:[#allocation2 + $0x30] sm:$0xf] %vm1095, %v1060
      %1103 = vst.msk [vmem:[#allocation2 + $0x38] sm:$0xf] %vm1095, %v1062
      %1104 = vst.msk [vmem:[#allocation2 + $0x40] sm:$0xf] %vm1095, %v1064
      %1105 = vst.msk [vmem:[#allocation2 + $0x48] sm:$0xf] %vm1095, %v1066
      %1106 = vst.msk [vmem:[#allocation2 + $0x50] sm:$0xf] %vm1095, %v1068
      %1107 = vst.msk [vmem:[#allocation2 + $0x58] sm:$0xf] %vm1095, %v1070
      %1108 = vst.msk [vmem:[#allocation2 + $0x60] sm:$0xf] %vm1095, %v1072
      %1109 = vst.msk [vmem:[#allocation2 + $0x68] sm:$0xf] %vm1095, %v1074
      %1110 = vst.msk [vmem:[#allocation2 + $0x70] sm:$0xf] %vm1095, %v1076
      %1111 = vst.msk [vmem:[#allocation2 + $0x78] sm:$0xf] %vm1095, %v1078
      %v1115 = vrot.slane %v344, 1
      %v1116 = vrot.slane %v345, 1
      %v1117 = vsel %vm413, %v1115, %v1116
      %v1118 = vrot.slane %v346, 1
      %v1119 = vsel %vm413, %v1116, %v1118
      %v1122 = vpack.c.bf16 %v1117, %v1117
      %v1123 = vpack.c.bf16 %v1119, %v1119
      %1126 = vrot.lane.b32.xlu0 %v472, 48
      %v1127 = vpop.permute.xlu0 %1126
      %1128 = vrot.lane.b32.xlu0 %v473, 48
      %v1129 = vpop.permute.xlu0 %1128
      %1130 = vrot.lane.b32.xlu0 %v474, 48
      %v1131 = vpop.permute.xlu0 %1130
      %1132 = vrot.lane.b32.xlu0 %v475, 48
      %v1133 = vpop.permute.xlu0 %1132
      %1134 = vrot.lane.b32.xlu0 %v476, 48
      %v1135 = vpop.permute.xlu0 %1134
      %1136 = vrot.lane.b32.xlu0 %v477, 48
      %v1137 = vpop.permute.xlu0 %1136
      %1138 = vrot.lane.b32.xlu0 %v478, 48
      %v1139 = vpop.permute.xlu0 %1138
      %1140 = vrot.lane.b32.xlu0 %v479, 48
      %v1141 = vpop.permute.xlu0 %1140
      %1142 = vrot.lane.b32.xlu0 %v480, 48
      %v1143 = vpop.permute.xlu0 %1142
      %1144 = vrot.lane.b32.xlu0 %v481, 48
      %v1145 = vpop.permute.xlu0 %1144
      %1146 = vrot.lane.b32.xlu0 %v482, 48
      %v1147 = vpop.permute.xlu0 %1146
      %1148 = vrot.lane.b32.xlu0 %v483, 48
      %v1149 = vpop.permute.xlu0 %1148
      %1150 = vrot.lane.b32.xlu0 %v484, 48
      %v1151 = vpop.permute.xlu0 %1150
      %1152 = vrot.lane.b32.xlu0 %v485, 48
      %v1153 = vpop.permute.xlu0 %1152
      %1154 = vrot.lane.b32.xlu0 %v1122, 48
      %v1155 = vpop.permute.xlu0 %1154
      %1156 = vrot.lane.b32.xlu0 %v1123, 48
      %v1157 = vpop.permute.xlu0 %1156
      %vm1174 = vcmask 454016
      %1175 = vst.msk [vmem:[#allocation2] sm:$0xf] %vm1174, %v1127
      %1176 = vst.msk [vmem:[#allocation2 + $0x8] sm:$0xf] %vm1174, %v1129
      %1177 = vst.msk [vmem:[#allocation2 + $0x10] sm:$0xf] %vm1174, %v1131
      %1178 = vst.msk [vmem:[#allocation2 + $0x18] sm:$0xf] %vm1174, %v1133
      %1179 = vst.msk [vmem:[#allocation2 + $0x20] sm:$0xf] %vm1174, %v1135
      %1180 = vst.msk [vmem:[#allocation2 + $0x28] sm:$0xf] %vm1174, %v1137
      %1181 = vst.msk [vmem:[#allocation2 + $0x30] sm:$0xf] %vm1174, %v1139
      %1182 = vst.msk [vmem:[#allocation2 + $0x38] sm:$0xf] %vm1174, %v1141
      %1183 = vst.msk [vmem:[#allocation2 + $0x40] sm:$0xf] %vm1174, %v1143
      %1184 = vst.msk [vmem:[#allocation2 + $0x48] sm:$0xf] %vm1174, %v1145
      %1185 = vst.msk [vmem:[#allocation2 + $0x50] sm:$0xf] %vm1174, %v1147
      %1186 = vst.msk [vmem:[#allocation2 + $0x58] sm:$0xf] %vm1174, %v1149
      %1187 = vst.msk [vmem:[#allocation2 + $0x60] sm:$0xf] %vm1174, %v1151
      %1188 = vst.msk [vmem:[#allocation2 + $0x68] sm:$0xf] %vm1174, %v1153
      %1189 = vst.msk [vmem:[#allocation2 + $0x70] sm:$0xf] %vm1174, %v1155
      %1190 = vst.msk [vmem:[#allocation2 + $0x78] sm:$0xf] %vm1174, %v1157
      %v1191 = vrot.slane %v344, 2
      %v1192 = vrot.slane %v345, 2
      %v1193 = vsel %vm567, %v1191, %v1192
      %v1194 = vrot.slane %v346, 2
      %v1195 = vsel %vm567, %v1192, %v1194
      %v1198 = vpack.c.bf16 %v1193, %v1193
      %v1199 = vpack.c.bf16 %v1195, %v1195
      %1202 = vrot.lane.b32.xlu0 %v626, 56
      %v1203 = vpop.permute.xlu0 %1202
      %1204 = vrot.lane.b32.xlu0 %v627, 56
      %v1205 = vpop.permute.xlu0 %1204
      %1206 = vrot.lane.b32.xlu0 %v628, 56
      %v1207 = vpop.permute.xlu0 %1206
      %1208 = vrot.lane.b32.xlu0 %v629, 56
      %v1209 = vpop.permute.xlu0 %1208
      %1210 = vrot.lane.b32.xlu0 %v630, 56
      %v1211 = vpop.permute.xlu0 %1210
      %1212 = vrot.lane.b32.xlu0 %v631, 56
      %v1213 = vpop.permute.xlu0 %1212
      %1214 = vrot.lane.b32.xlu0 %v632, 56
      %v1215 = vpop.permute.xlu0 %1214
      %1216 = vrot.lane.b32.xlu0 %v633, 56
      %v1217 = vpop.permute.xlu0 %1216
      %1218 = vrot.lane.b32.xlu0 %v634, 56
      %v1219 = vpop.permute.xlu0 %1218
      %1220 = vrot.lane.b32.xlu0 %v635, 56
      %v1221 = vpop.permute.xlu0 %1220
      %1222 = vrot.lane.b32.xlu0 %v636, 56
      %v1223 = vpop.permute.xlu0 %1222
      %1224 = vrot.lane.b32.xlu0 %v637, 56
      %v1225 = vpop.permute.xlu0 %1224
      %1226 = vrot.lane.b32.xlu0 %v638, 56
      %v1227 = vpop.permute.xlu0 %1226
      %1228 = vrot.lane.b32.xlu0 %v639, 56
      %v1229 = vpop.permute.xlu0 %1228
      %1230 = vrot.lane.b32.xlu0 %v1198, 56
      %v1231 = vpop.permute.xlu0 %1230
      %1232 = vrot.lane.b32.xlu0 %v1199, 56
      %v1233 = vpop.permute.xlu0 %1232
      %vm1250 = vcmask 519616
      %1251 = vst.msk [vmem:[#allocation2] sm:$0xf] %vm1250, %v1203
      %1252 = vst.msk [vmem:[#allocation2 + $0x8] sm:$0xf] %vm1250, %v1205
      %1253 = vst.msk [vmem:[#allocation2 + $0x10] sm:$0xf] %vm1250, %v1207
      %1254 = vst.msk [vmem:[#allocation2 + $0x18] sm:$0xf] %vm1250, %v1209
      %1255 = vst.msk [vmem:[#allocation2 + $0x20] sm:$0xf] %vm1250, %v1211
      %1256 = vst.msk [vmem:[#allocation2 + $0x28] sm:$0xf] %vm1250, %v1213
      %1257 = vst.msk [vmem:[#allocation2 + $0x30] sm:$0xf] %vm1250, %v1215
      %1258 = vst.msk [vmem:[#allocation2 + $0x38] sm:$0xf] %vm1250, %v1217
      %1259 = vst.msk [vmem:[#allocation2 + $0x40] sm:$0xf] %vm1250, %v1219
      %1260 = vst.msk [vmem:[#allocation2 + $0x48] sm:$0xf] %vm1250, %v1221
      %1261 = vst.msk [vmem:[#allocation2 + $0x50] sm:$0xf] %vm1250, %v1223
      %1262 = vst.msk [vmem:[#allocation2 + $0x58] sm:$0xf] %vm1250, %v1225
      %1263 = vst.msk [vmem:[#allocation2 + $0x60] sm:$0xf] %vm1250, %v1227
      %1264 = vst.msk [vmem:[#allocation2 + $0x68] sm:$0xf] %vm1250, %v1229
      %1265 = vst.msk [vmem:[#allocation2 + $0x70] sm:$0xf] %vm1250, %v1231
      %1266 = vst.msk [vmem:[#allocation2 + $0x78] sm:$0xf] %vm1250, %v1233
      %v1267 = vrot.slane %v344, 3
      %v1268 = vrot.slane %v345, 3
      %v1269 = vsel %vm721, %v1267, %v1268
      %v1270 = vrot.slane %v346, 3
      %v1271 = vsel %vm721, %v1268, %v1270
      %v1274 = vpack.c.bf16 %v1269, %v1269
      %v1275 = vpack.c.bf16 %v1271, %v1271
      %1278 = vrot.lane.b32.xlu0 %v780, 64
      %v1279 = vpop.permute.xlu0 %1278
      %1280 = vrot.lane.b32.xlu0 %v781, 64
      %v1281 = vpop.permute.xlu0 %1280
      %1282 = vrot.lane.b32.xlu0 %v782, 64
      %v1283 = vpop.permute.xlu0 %1282
      %1284 = vrot.lane.b32.xlu0 %v783, 64
      %v1285 = vpop.permute.xlu0 %1284
      %1286 = vrot.lane.b32.xlu0 %v784, 64
      %v1287 = vpop.permute.xlu0 %1286
      %1288 = vrot.lane.b32.xlu0 %v785, 64
      %v1289 = vpop.permute.xlu0 %1288
      %1290 = vrot.lane.b32.xlu0 %v786, 64
      %v1291 = vpop.permute.xlu0 %1290
      %1292 = vrot.lane.b32.xlu0 %v787, 64
      %v1293 = vpop.permute.xlu0 %1292
      %1294 = vrot.lane.b32.xlu0 %v788, 64
      %v1295 = vpop.permute.xlu0 %1294
      %1296 = vrot.lane.b32.xlu0 %v789, 64
      %v1297 = vpop.permute.xlu0 %1296
      %1298 = vrot.lane.b32.xlu0 %v790, 64
      %v1299 = vpop.permute.xlu0 %1298
      %1300 = vrot.lane.b32.xlu0 %v791, 64
      %v1301 = vpop.permute.xlu0 %1300
      %1302 = vrot.lane.b32.xlu0 %v792, 64
      %v1303 = vpop.permute.xlu0 %1302
      %1304 = vrot.lane.b32.xlu0 %v793, 64
      %v1305 = vpop.permute.xlu0 %1304
      %1306 = vrot.lane.b32.xlu0 %v1274, 64
      %v1307 = vpop.permute.xlu0 %1306
      %1308 = vrot.lane.b32.xlu0 %v1275, 64
      %v1309 = vpop.permute.xlu0 %1308
      %vm1326 = vcmask 585216
      %1327 = vst.msk [vmem:[#allocation2] sm:$0xf] %vm1326, %v1279
      %1328 = vst.msk [vmem:[#allocation2 + $0x8] sm:$0xf] %vm1326, %v1281
      %1329 = vst.msk [vmem:[#allocation2 + $0x10] sm:$0xf] %vm1326, %v1283
      %1330 = vst.msk [vmem:[#allocation2 + $0x18] sm:$0xf] %vm1326, %v1285
      %1331 = vst.msk [vmem:[#allocation2 + $0x20] sm:$0xf] %vm1326, %v1287
      %1332 = vst.msk [vmem:[#allocation2 + $0x28] sm:$0xf] %vm1326, %v1289
      %1333 = vst.msk [vmem:[#allocation2 + $0x30] sm:$0xf] %vm1326, %v1291
      %1334 = vst.msk [vmem:[#allocation2 + $0x38] sm:$0xf] %vm1326, %v1293
      %1335 = vst.msk [vmem:[#allocation2 + $0x40] sm:$0xf] %vm1326, %v1295
      %1336 = vst.msk [vmem:[#allocation2 + $0x48] sm:$0xf] %vm1326, %v1297
      %1337 = vst.msk [vmem:[#allocation2 + $0x50] sm:$0xf] %vm1326, %v1299
      %1338 = vst.msk [vmem:[#allocation2 + $0x58] sm:$0xf] %vm1326, %v1301
      %1339 = vst.msk [vmem:[#allocation2 + $0x60] sm:$0xf] %vm1326, %v1303
      %1340 = vst.msk [vmem:[#allocation2 + $0x68] sm:$0xf] %vm1326, %v1305
      %1341 = vst.msk [vmem:[#allocation2 + $0x70] sm:$0xf] %vm1326, %v1307
      %1342 = vst.msk [vmem:[#allocation2 + $0x78] sm:$0xf] %vm1326, %v1309
      %v1343 = vrot.slane %v344, 4
      %v1344 = vrot.slane %v345, 4
      %v1345 = vsel %vm875, %v1343, %v1344
      %v1346 = vrot.slane %v346, 4
      %v1347 = vsel %vm875, %v1344, %v1346
      %v1350 = vpack.c.bf16 %v1345, %v1345
      %v1351 = vpack.c.bf16 %v1347, %v1347
      %1354 = vrot.lane.b32.xlu0 %v934, 72
      %v1355 = vpop.permute.xlu0 %1354
      %1356 = vrot.lane.b32.xlu0 %v935, 72
      %v1357 = vpop.permute.xlu0 %1356
      %1358 = vrot.lane.b32.xlu0 %v936, 72
      %v1359 = vpop.permute.xlu0 %1358
      %1360 = vrot.lane.b32.xlu0 %v937, 72
      %v1361 = vpop.permute.xlu0 %1360
      %1362 = vrot.lane.b32.xlu0 %v938, 72
      %v1363 = vpop.permute.xlu0 %1362
      %1364 = vrot.lane.b32.xlu0 %v939, 72
      %v1365 = vpop.permute.xlu0 %1364
      %1366 = vrot.lane.b32.xlu0 %v940, 72
      %v1367 = vpop.permute.xlu0 %1366
      %1368 = vrot.lane.b32.xlu0 %v941, 72
      %v1369 = vpop.permute.xlu0 %1368
      %1370 = vrot.lane.b32.xlu0 %v942, 72
      %v1371 = vpop.permute.xlu0 %1370
      %1372 = vrot.lane.b32.xlu0 %v943, 72
      %v1373 = vpop.permute.xlu0 %1372
      %1374 = vrot.lane.b32.xlu0 %v944, 72
      %v1375 = vpop.permute.xlu0 %1374
      %1376 = vrot.lane.b32.xlu0 %v945, 72
      %v1377 = vpop.permute.xlu0 %1376
      %1378 = vrot.lane.b32.xlu0 %v946, 72
      %v1379 = vpop.permute.xlu0 %1378
      %1380 = vrot.lane.b32.xlu0 %v947, 72
      %v1381 = vpop.permute.xlu0 %1380
      %1382 = vrot.lane.b32.xlu0 %v1350, 72
      %v1383 = vpop.permute.xlu0 %1382
      %1384 = vrot.lane.b32.xlu0 %v1351, 72
      %v1385 = vpop.permute.xlu0 %1384
      %vm1402 = vcmask 650816
      %1403 = vst.msk [vmem:[#allocation2] sm:$0xf] %vm1402, %v1355
      %1404 = vst.msk [vmem:[#allocation2 + $0x8] sm:$0xf] %vm1402, %v1357
      %1405 = vst.msk [vmem:[#allocation2 + $0x10] sm:$0xf] %vm1402, %v1359
      %1406 = vst.msk [vmem:[#allocation2 + $0x18] sm:$0xf] %vm1402, %v1361
      %1407 = vst.msk [vmem:[#allocation2 + $0x20] sm:$0xf] %vm1402, %v1363
      %1408 = vst.msk [vmem:[#allocation2 + $0x28] sm:$0xf] %vm1402, %v1365
      %1409 = vst.msk [vmem:[#allocation2 + $0x30] sm:$0xf] %vm1402, %v1367
      %1410 = vst.msk [vmem:[#allocation2 + $0x38] sm:$0xf] %vm1402, %v1369
      %1411 = vst.msk [vmem:[#allocation2 + $0x40] sm:$0xf] %vm1402, %v1371
      %1412 = vst.msk [vmem:[#allocation2 + $0x48] sm:$0xf] %vm1402, %v1373
      %1413 = vst.msk [vmem:[#allocation2 + $0x50] sm:$0xf] %vm1402, %v1375
      %1414 = vst.msk [vmem:[#allocation2 + $0x58] sm:$0xf] %vm1402, %v1377
      %1415 = vst.msk [vmem:[#allocation2 + $0x60] sm:$0xf] %vm1402, %v1379
      %1416 = vst.msk [vmem:[#allocation2 + $0x68] sm:$0xf] %vm1402, %v1381
      %1417 = vst.msk [vmem:[#allocation2 + $0x70] sm:$0xf] %vm1402, %v1383
      %1418 = vst.msk [vmem:[#allocation2 + $0x78] sm:$0xf] %vm1402, %v1385
      %v1419 = vpack.c.bf16 %v347, %v347
      %v1420 = vpack.c.bf16 %v348, %v348
      %1423 = vrot.lane.b32.xlu0 %v360, 80
      %v1424 = vpop.permute.xlu0 %1423
      %1425 = vrot.lane.b32.xlu0 %v361, 80
      %v1426 = vpop.permute.xlu0 %1425
      %1427 = vrot.lane.b32.xlu0 %v362, 80
      %v1428 = vpop.permute.xlu0 %1427
      %1429 = vrot.lane.b32.xlu0 %v363, 80
      %v1430 = vpop.permute.xlu0 %1429
      %1431 = vrot.lane.b32.xlu0 %v364, 80
      %v1432 = vpop.permute.xlu0 %1431
      %1433 = vrot.lane.b32.xlu0 %v365, 80
      %v1434 = vpop.permute.xlu0 %1433
      %1435 = vrot.lane.b32.xlu0 %v366, 80
      %v1436 = vpop.permute.xlu0 %1435
      %1437 = vrot.lane.b32.xlu0 %v367, 80
      %v1438 = vpop.permute.xlu0 %1437
      %1439 = vrot.lane.b32.xlu0 %v368, 80
      %v1440 = vpop.permute.xlu0 %1439
      %1441 = vrot.lane.b32.xlu0 %v369, 80
      %v1442 = vpop.permute.xlu0 %1441
      %1443 = vrot.lane.b32.xlu0 %v370, 80
      %v1444 = vpop.permute.xlu0 %1443
      %1445 = vrot.lane.b32.xlu0 %v371, 80
      %v1446 = vpop.permute.xlu0 %1445
      %1447 = vrot.lane.b32.xlu0 %v1029, 80
      %v1448 = vpop.permute.xlu0 %1447
      %1449 = vrot.lane.b32.xlu0 %v1030, 80
      %v1450 = vpop.permute.xlu0 %1449
      %1451 = vrot.lane.b32.xlu0 %v1419, 80
      %v1452 = vpop.permute.xlu0 %1451
      %1453 = vrot.lane.b32.xlu0 %v1420, 80
      %v1454 = vpop.permute.xlu0 %1453
      %vm1471 = vcmask 716416
      %1472 = vst.msk [vmem:[#allocation2] sm:$0xf] %vm1471, %v1424
      %1473 = vst.msk [vmem:[#allocation2 + $0x8] sm:$0xf] %vm1471, %v1426
      %1474 = vst.msk [vmem:[#allocation2 + $0x10] sm:$0xf] %vm1471, %v1428
      %1475 = vst.msk [vmem:[#allocation2 + $0x18] sm:$0xf] %vm1471, %v1430
      %1476 = vst.msk [vmem:[#allocation2 + $0x20] sm:$0xf] %vm1471, %v1432
      %1477 = vst.msk [vmem:[#allocation2 + $0x28] sm:$0xf] %vm1471, %v1434
      %1478 = vst.msk [vmem:[#allocation2 + $0x30] sm:$0xf] %vm1471, %v1436
      %1479 = vst.msk [vmem:[#allocation2 + $0x38] sm:$0xf] %vm1471, %v1438
      %1480 = vst.msk [vmem:[#allocation2 + $0x40] sm:$0xf] %vm1471, %v1440
      %1481 = vst.msk [vmem:[#allocation2 + $0x48] sm:$0xf] %vm1471, %v1442
      %1482 = vst.msk [vmem:[#allocation2 + $0x50] sm:$0xf] %vm1471, %v1444
      %1483 = vst.msk [vmem:[#allocation2 + $0x58] sm:$0xf] %vm1471, %v1446
      %1484 = vst.msk [vmem:[#allocation2 + $0x60] sm:$0xf] %vm1471, %v1448
      %1485 = vst.msk [vmem:[#allocation2 + $0x68] sm:$0xf] %vm1471, %v1450
      %1486 = vst.msk [vmem:[#allocation2 + $0x70] sm:$0xf] %vm1471, %v1452
      %1487 = vst.msk [vmem:[#allocation2 + $0x78] sm:$0xf] %vm1471, %v1454
      %v1491 = vrot.slane %v347, 1
      %v1492 = vrot.slane %v348, 1
      %v1493 = vsel %vm413, %v1491, %v1492
      %v1494 = vrot.slane %v349, 1
      %v1495 = vsel %vm413, %v1492, %v1494
      %v1498 = vpack.c.bf16 %v1493, %v1493
      %v1499 = vpack.c.bf16 %v1495, %v1495
      %1502 = vrot.lane.b32.xlu0 %v474, 88
      %v1503 = vpop.permute.xlu0 %1502
      %1504 = vrot.lane.b32.xlu0 %v475, 88
      %v1505 = vpop.permute.xlu0 %1504
      %1506 = vrot.lane.b32.xlu0 %v476, 88
      %v1507 = vpop.permute.xlu0 %1506
      %1508 = vrot.lane.b32.xlu0 %v477, 88
      %v1509 = vpop.permute.xlu0 %1508
      %1510 = vrot.lane.b32.xlu0 %v478, 88
      %v1511 = vpop.permute.xlu0 %1510
      %1512 = vrot.lane.b32.xlu0 %v479, 88
      %v1513 = vpop.permute.xlu0 %1512
      %1514 = vrot.lane.b32.xlu0 %v480, 88
      %v1515 = vpop.permute.xlu0 %1514
      %1516 = vrot.lane.b32.xlu0 %v481, 88
      %v1517 = vpop.permute.xlu0 %1516
      %1518 = vrot.lane.b32.xlu0 %v482, 88
      %v1519 = vpop.permute.xlu0 %1518
      %1520 = vrot.lane.b32.xlu0 %v483, 88
      %v1521 = vpop.permute.xlu0 %1520
      %1522 = vrot.lane.b32.xlu0 %v484, 88
      %v1523 = vpop.permute.xlu0 %1522
      %1524 = vrot.lane.b32.xlu0 %v485, 88
      %v1525 = vpop.permute.xlu0 %1524
      %1526 = vrot.lane.b32.xlu0 %v1122, 88
      %v1527 = vpop.permute.xlu0 %1526
      %1528 = vrot.lane.b32.xlu0 %v1123, 88
      %v1529 = vpop.permute.xlu0 %1528
      %1530 = vrot.lane.b32.xlu0 %v1498, 88
      %v1531 = vpop.permute.xlu0 %1530
      %1532 = vrot.lane.b32.xlu0 %v1499, 88
      %v1533 = vpop.permute.xlu0 %1532
      %vm1550 = vcmask 782016
      %1551 = vst.msk [vmem:[#allocation2] sm:$0xf] %vm1550, %v1503
      %1552 = vst.msk [vmem:[#allocation2 + $0x8] sm:$0xf] %vm1550, %v1505
      %1553 = vst.msk [vmem:[#allocation2 + $0x10] sm:$0xf] %vm1550, %v1507
      %1554 = vst.msk [vmem:[#allocation2 + $0x18] sm:$0xf] %vm1550, %v1509
      %1555 = vst.msk [vmem:[#allocation2 + $0x20] sm:$0xf] %vm1550, %v1511
      %1556 = vst.msk [vmem:[#allocation2 + $0x28] sm:$0xf] %vm1550, %v1513
      %1557 = vst.msk [vmem:[#allocation2 + $0x30] sm:$0xf] %vm1550, %v1515
      %1558 = vst.msk [vmem:[#allocation2 + $0x38] sm:$0xf] %vm1550, %v1517
      %1559 = vst.msk [vmem:[#allocation2 + $0x40] sm:$0xf] %vm1550, %v1519
      %1560 = vst.msk [vmem:[#allocation2 + $0x48] sm:$0xf] %vm1550, %v1521
      %1561 = vst.msk [vmem:[#allocation2 + $0x50] sm:$0xf] %vm1550, %v1523
      %1562 = vst.msk [vmem:[#allocation2 + $0x58] sm:$0xf] %vm1550, %v1525
      %1563 = vst.msk [vmem:[#allocation2 + $0x60] sm:$0xf] %vm1550, %v1527
      %1564 = vst.msk [vmem:[#allocation2 + $0x68] sm:$0xf] %vm1550, %v1529
      %1565 = vst.msk [vmem:[#allocation2 + $0x70] sm:$0xf] %vm1550, %v1531
      %1566 = vst.msk [vmem:[#allocation2 + $0x78] sm:$0xf] %vm1550, %v1533
      %v1567 = vrot.slane %v347, 2
      %v1568 = vrot.slane %v348, 2
      %v1569 = vsel %vm567, %v1567, %v1568
      %v1570 = vrot.slane %v349, 2
      %v1571 = vsel %vm567, %v1568, %v1570
      %v1574 = vpack.c.bf16 %v1569, %v1569
      %v1575 = vpack.c.bf16 %v1571, %v1571
      %1578 = vrot.lane.b32.xlu0 %v628, 96
      %v1579 = vpop.permute.xlu0 %1578
      %1580 = vrot.lane.b32.xlu0 %v629, 96
      %v1581 = vpop.permute.xlu0 %1580
      %1582 = vrot.lane.b32.xlu0 %v630, 96
      %v1583 = vpop.permute.xlu0 %1582
      %1584 = vrot.lane.b32.xlu0 %v631, 96
      %v1585 = vpop.permute.xlu0 %1584
      %1586 = vrot.lane.b32.xlu0 %v632, 96
      %v1587 = vpop.permute.xlu0 %1586
      %1588 = vrot.lane.b32.xlu0 %v633, 96
      %v1589 = vpop.permute.xlu0 %1588
      %1590 = vrot.lane.b32.xlu0 %v634, 96
      %v1591 = vpop.permute.xlu0 %1590
      %1592 = vrot.lane.b32.xlu0 %v635, 96
      %v1593 = vpop.permute.xlu0 %1592
      %1594 = vrot.lane.b32.xlu0 %v636, 96
      %v1595 = vpop.permute.xlu0 %1594
      %1596 = vrot.lane.b32.xlu0 %v637, 96
      %v1597 = vpop.permute.xlu0 %1596
      %1598 = vrot.lane.b32.xlu0 %v638, 96
      %v1599 = vpop.permute.xlu0 %1598
      %1600 = vrot.lane.b32.xlu0 %v639, 96
      %v1601 = vpop.permute.xlu0 %1600
      %1602 = vrot.lane.b32.xlu0 %v1198, 96
      %v1603 = vpop.permute.xlu0 %1602
      %1604 = vrot.lane.b32.xlu0 %v1199, 96
      %v1605 = vpop.permute.xlu0 %1604
      %1606 = vrot.lane.b32.xlu0 %v1574, 96
      %v1607 = vpop.permute.xlu0 %1606
      %1608 = vrot.lane.b32.xlu0 %v1575, 96
      %v1609 = vpop.permute.xlu0 %1608
      %vm1626 = vcmask 847616
      %1627 = vst.msk [vmem:[#allocation2] sm:$0xf] %vm1626, %v1579
      %1628 = vst.msk [vmem:[#allocation2 + $0x8] sm:$0xf] %vm1626, %v1581
      %1629 = vst.msk [vmem:[#allocation2 + $0x10] sm:$0xf] %vm1626, %v1583
      %1630 = vst.msk [vmem:[#allocation2 + $0x18] sm:$0xf] %vm1626, %v1585
      %1631 = vst.msk [vmem:[#allocation2 + $0x20] sm:$0xf] %vm1626, %v1587
      %1632 = vst.msk [vmem:[#allocation2 + $0x28] sm:$0xf] %vm1626, %v1589
      %1633 = vst.msk [vmem:[#allocation2 + $0x30] sm:$0xf] %vm1626, %v1591
      %1634 = vst.msk [vmem:[#allocation2 + $0x38] sm:$0xf] %vm1626, %v1593
      %1635 = vst.msk [vmem:[#allocation2 + $0x40] sm:$0xf] %vm1626, %v1595
      %1636 = vst.msk [vmem:[#allocation2 + $0x48] sm:$0xf] %vm1626, %v1597
      %1637 = vst.msk [vmem:[#allocation2 + $0x50] sm:$0xf] %vm1626, %v1599
      %1638 = vst.msk [vmem:[#allocation2 + $0x58] sm:$0xf] %vm1626, %v1601
      %1639 = vst.msk [vmem:[#allocation2 + $0x60] sm:$0xf] %vm1626, %v1603
      %1640 = vst.msk [vmem:[#allocation2 + $0x68] sm:$0xf] %vm1626, %v1605
      %1641 = vst.msk [vmem:[#allocation2 + $0x70] sm:$0xf] %vm1626, %v1607
      %1642 = vst.msk [vmem:[#allocation2 + $0x78] sm:$0xf] %vm1626, %v1609
      %v1643 = vrot.slane %v347, 3
      %v1644 = vrot.slane %v348, 3
      %v1645 = vsel %vm721, %v1643, %v1644
      %v1646 = vrot.slane %v349, 3
      %v1647 = vsel %vm721, %v1644, %v1646
      %v1650 = vpack.c.bf16 %v1645, %v1645
      %v1651 = vpack.c.bf16 %v1647, %v1647
      %1654 = vrot.lane.b32.xlu0 %v782, 104
      %v1655 = vpop.permute.xlu0 %1654
      %1656 = vrot.lane.b32.xlu0 %v783, 104
      %v1657 = vpop.permute.xlu0 %1656
      %1658 = vrot.lane.b32.xlu0 %v784, 104
      %v1659 = vpop.permute.xlu0 %1658
      %1660 = vrot.lane.b32.xlu0 %v785, 104
      %v1661 = vpop.permute.xlu0 %1660
      %1662 = vrot.lane.b32.xlu0 %v786, 104
      %v1663 = vpop.permute.xlu0 %1662
      %1664 = vrot.lane.b32.xlu0 %v787, 104
      %v1665 = vpop.permute.xlu0 %1664
      %1666 = vrot.lane.b32.xlu0 %v788, 104
      %v1667 = vpop.permute.xlu0 %1666
      %1668 = vrot.lane.b32.xlu0 %v789, 104
      %v1669 = vpop.permute.xlu0 %1668
      %1670 = vrot.lane.b32.xlu0 %v790, 104
      %v1671 = vpop.permute.xlu0 %1670
      %1672 = vrot.lane.b32.xlu0 %v791, 104
      %v1673 = vpop.permute.xlu0 %1672
      %1674 = vrot.lane.b32.xlu0 %v792, 104
      %v1675 = vpop.permute.xlu0 %1674
      %1676 = vrot.lane.b32.xlu0 %v793, 104
      %v1677 = vpop.permute.xlu0 %1676
      %1678 = vrot.lane.b32.xlu0 %v1274, 104
      %v1679 = vpop.permute.xlu0 %1678
      %1680 = vrot.lane.b32.xlu0 %v1275, 104
      %v1681 = vpop.permute.xlu0 %1680
      %1682 = vrot.lane.b32.xlu0 %v1650, 104
      %v1683 = vpop.permute.xlu0 %1682
      %1684 = vrot.lane.b32.xlu0 %v1651, 104
      %v1685 = vpop.permute.xlu0 %1684
      %vm1702 = vcmask 913216
      %1703 = vst.msk [vmem:[#allocation2] sm:$0xf] %vm1702, %v1655
      %1704 = vst.msk [vmem:[#allocation2 + $0x8] sm:$0xf] %vm1702, %v1657
      %1705 = vst.msk [vmem:[#allocation2 + $0x10] sm:$0xf] %vm1702, %v1659
      %1706 = vst.msk [vmem:[#allocation2 + $0x18] sm:$0xf] %vm1702, %v1661
      %1707 = vst.msk [vmem:[#allocation2 + $0x20] sm:$0xf] %vm1702, %v1663
      %1708 = vst.msk [vmem:[#allocation2 + $0x28] sm:$0xf] %vm1702, %v1665
      %1709 = vst.msk [vmem:[#allocation2 + $0x30] sm:$0xf] %vm1702, %v1667
      %1710 = vst.msk [vmem:[#allocation2 + $0x38] sm:$0xf] %vm1702, %v1669
      %1711 = vst.msk [vmem:[#allocation2 + $0x40] sm:$0xf] %vm1702, %v1671
      %1712 = vst.msk [vmem:[#allocation2 + $0x48] sm:$0xf] %vm1702, %v1673
      %1713 = vst.msk [vmem:[#allocation2 + $0x50] sm:$0xf] %vm1702, %v1675
      %1714 = vst.msk [vmem:[#allocation2 + $0x58] sm:$0xf] %vm1702, %v1677
      %1715 = vst.msk [vmem:[#allocation2 + $0x60] sm:$0xf] %vm1702, %v1679
      %1716 = vst.msk [vmem:[#allocation2 + $0x68] sm:$0xf] %vm1702, %v1681
      %1717 = vst.msk [vmem:[#allocation2 + $0x70] sm:$0xf] %vm1702, %v1683
      %1718 = vst.msk [vmem:[#allocation2 + $0x78] sm:$0xf] %vm1702, %v1685
      %v1719 = vrot.slane %v347, 4
      %v1720 = vrot.slane %v348, 4
      %v1721 = vsel %vm875, %v1719, %v1720
      %v1722 = vrot.slane %v349, 4
      %v1723 = vsel %vm875, %v1720, %v1722
      %v1726 = vpack.c.bf16 %v1721, %v1721
      %v1727 = vpack.c.bf16 %v1723, %v1723
      %1730 = vrot.lane.b32.xlu0 %v936, 112
      %v1731 = vpop.permute.xlu0 %1730
      %1732 = vrot.lane.b32.xlu0 %v937, 112
      %v1733 = vpop.permute.xlu0 %1732
      %1734 = vrot.lane.b32.xlu0 %v938, 112
      %v1735 = vpop.permute.xlu0 %1734
      %1736 = vrot.lane.b32.xlu0 %v939, 112
      %v1737 = vpop.permute.xlu0 %1736
      %1738 = vrot.lane.b32.xlu0 %v940, 112
      %v1739 = vpop.permute.xlu0 %1738
      %1740 = vrot.lane.b32.xlu0 %v941, 112
      %v1741 = vpop.permute.xlu0 %1740
      %1742 = vrot.lane.b32.xlu0 %v942, 112
      %v1743 = vpop.permute.xlu0 %1742
      %1744 = vrot.lane.b32.xlu0 %v943, 112
      %v1745 = vpop.permute.xlu0 %1744
      %1746 = vrot.lane.b32.xlu0 %v944, 112
      %v1747 = vpop.permute.xlu0 %1746
      %1748 = vrot.lane.b32.xlu0 %v945, 112
      %v1749 = vpop.permute.xlu0 %1748
      %1750 = vrot.lane.b32.xlu0 %v946, 112
      %v1751 = vpop.permute.xlu0 %1750
      %1752 = vrot.lane.b32.xlu0 %v947, 112
      %v1753 = vpop.permute.xlu0 %1752
      %1754 = vrot.lane.b32.xlu0 %v1350, 112
      %v1755 = vpop.permute.xlu0 %1754
      %1756 = vrot.lane.b32.xlu0 %v1351, 112
      %v1757 = vpop.permute.xlu0 %1756
      %1758 = vrot.lane.b32.xlu0 %v1726, 112
      %v1759 = vpop.permute.xlu0 %1758
      %1760 = vrot.lane.b32.xlu0 %v1727, 112
      %v1761 = vpop.permute.xlu0 %1760
      %vm1778 = vcmask 978816
      %1779 = vst.msk [vmem:[#allocation2] sm:$0xf] %vm1778, %v1731
      %1780 = vst.msk [vmem:[#allocation2 + $0x8] sm:$0xf] %vm1778, %v1733
      %1781 = vst.msk [vmem:[#allocation2 + $0x10] sm:$0xf] %vm1778, %v1735
      %1782 = vst.msk [vmem:[#allocation2 + $0x18] sm:$0xf] %vm1778, %v1737
      %1783 = vst.msk [vmem:[#allocation2 + $0x20] sm:$0xf] %vm1778, %v1739
      %1784 = vst.msk [vmem:[#allocation2 + $0x28] sm:$0xf] %vm1778, %v1741
      %1785 = vst.msk [vmem:[#allocation2 + $0x30] sm:$0xf] %vm1778, %v1743
      %1786 = vst.msk [vmem:[#allocation2 + $0x38] sm:$0xf] %vm1778, %v1745
      %1787 = vst.msk [vmem:[#allocation2 + $0x40] sm:$0xf] %vm1778, %v1747
      %1788 = vst.msk [vmem:[#allocation2 + $0x48] sm:$0xf] %vm1778, %v1749
      %1789 = vst.msk [vmem:[#allocation2 + $0x50] sm:$0xf] %vm1778, %v1751
      %1790 = vst.msk [vmem:[#allocation2 + $0x58] sm:$0xf] %vm1778, %v1753
      %1791 = vst.msk [vmem:[#allocation2 + $0x60] sm:$0xf] %vm1778, %v1755
      %1792 = vst.msk [vmem:[#allocation2 + $0x68] sm:$0xf] %vm1778, %v1757
      %1793 = vst.msk [vmem:[#allocation2 + $0x70] sm:$0xf] %vm1778, %v1759
      %1794 = vst.msk [vmem:[#allocation2 + $0x78] sm:$0xf] %vm1778, %v1761
      %v1795 = vpack.c.bf16 %v350, %v350
      %v1796 = vpack.c.bf16 %v351, %v351
      %1799 = vrot.lane.b32.xlu0 %v362, 120
      %v1800 = vpop.permute.xlu0 %1799
      %1801 = vrot.lane.b32.xlu0 %v363, 120
      %v1802 = vpop.permute.xlu0 %1801
      %1803 = vrot.lane.b32.xlu0 %v364, 120
      %v1804 = vpop.permute.xlu0 %1803
      %1805 = vrot.lane.b32.xlu0 %v365, 120
      %v1806 = vpop.permute.xlu0 %1805
      %1807 = vrot.lane.b32.xlu0 %v366, 120
      %v1808 = vpop.permute.xlu0 %1807
      %1809 = vrot.lane.b32.xlu0 %v367, 120
      %v1810 = vpop.permute.xlu0 %1809
      %1811 = vrot.lane.b32.xlu0 %v368, 120
      %v1812 = vpop.permute.xlu0 %1811
      %1813 = vrot.lane.b32.xlu0 %v369, 120
      %v1814 = vpop.permute.xlu0 %1813
      %1815 = vrot.lane.b32.xlu0 %v370, 120
      %v1816 = vpop.permute.xlu0 %1815
      %1817 = vrot.lane.b32.xlu0 %v371, 120
      %v1818 = vpop.permute.xlu0 %1817
      %1819 = vrot.lane.b32.xlu0 %v1029, 120
      %v1820 = vpop.permute.xlu0 %1819
      %1821 = vrot.lane.b32.xlu0 %v1030, 120
      %v1822 = vpop.permute.xlu0 %1821
      %1823 = vrot.lane.b32.xlu0 %v1419, 120
      %v1824 = vpop.permute.xlu0 %1823
      %1825 = vrot.lane.b32.xlu0 %v1420, 120
      %v1826 = vpop.permute.xlu0 %1825
      %1827 = vrot.lane.b32.xlu0 %v1795, 120
      %v1828 = vpop.permute.xlu0 %1827
      %1829 = vrot.lane.b32.xlu0 %v1796, 120
      %v1830 = vpop.permute.xlu0 %1829
      %vm1847 = vcmask 1044416
      %1848 = vst.msk [vmem:[#allocation2] sm:$0xf] %vm1847, %v1800
      %1849 = vst.msk [vmem:[#allocation2 + $0x8] sm:$0xf] %vm1847, %v1802
      %1850 = vst.msk [vmem:[#allocation2 + $0x10] sm:$0xf] %vm1847, %v1804
      %1851 = vst.msk [vmem:[#allocation2 + $0x18] sm:$0xf] %vm1847, %v1806
      %1852 = vst.msk [vmem:[#allocation2 + $0x20] sm:$0xf] %vm1847, %v1808
      %1853 = vst.msk [vmem:[#allocation2 + $0x28] sm:$0xf] %vm1847, %v1810
      %1854 = vst.msk [vmem:[#allocation2 + $0x30] sm:$0xf] %vm1847, %v1812
      %1855 = vst.msk [vmem:[#allocation2 + $0x38] sm:$0xf] %vm1847, %v1814
      %1856 = vst.msk [vmem:[#allocation2 + $0x40] sm:$0xf] %vm1847, %v1816
      %1857 = vst.msk [vmem:[#allocation2 + $0x48] sm:$0xf] %vm1847, %v1818
      %1858 = vst.msk [vmem:[#allocation2 + $0x50] sm:$0xf] %vm1847, %v1820
      %1859 = vst.msk [vmem:[#allocation2 + $0x58] sm:$0xf] %vm1847, %v1822
      %1860 = vst.msk [vmem:[#allocation2 + $0x60] sm:$0xf] %vm1847, %v1824
      %1861 = vst.msk [vmem:[#allocation2 + $0x68] sm:$0xf] %vm1847, %v1826
      %1862 = vst.msk [vmem:[#allocation2 + $0x70] sm:$0xf] %vm1847, %v1828
      %1863 = vst.msk [vmem:[#allocation2 + $0x78] sm:$0xf] %vm1847, %v1830
      %v1867 = vrot.slane %v350, 1
      %v1868 = vrot.slane %v351, 1
      %v1869 = vsel %vm413, %v1867, %v1868
      %v1870 = vrot.slane %v352, 1
      %v1871 = vsel %vm413, %v1868, %v1870
      %v1874 = vpack.c.bf16 %v1869, %v1869
      %v1875 = vpack.c.bf16 %v1871, %v1871
      %1876 = vst.msk [vmem:[#allocation2 + $0x4] sm:$0xf] %vm372, %v476
      %1877 = vst.msk [vmem:[#allocation2 + $0xc] sm:$0xf] %vm372, %v477
      %1878 = vst.msk [vmem:[#allocation2 + $0x14] sm:$0xf] %vm372, %v478
      %1879 = vst.msk [vmem:[#allocation2 + $0x1c] sm:$0xf] %vm372, %v479
      %1880 = vst.msk [vmem:[#allocation2 + $0x24] sm:$0xf] %vm372, %v480
      %1881 = vst.msk [vmem:[#allocation2 + $0x2c] sm:$0xf] %vm372, %v481
      %1882 = vst.msk [vmem:[#allocation2 + $0x34] sm:$0xf] %vm372, %v482
      %1883 = vst.msk [vmem:[#allocation2 + $0x3c] sm:$0xf] %vm372, %v483
      %1884 = vst.msk [vmem:[#allocation2 + $0x44] sm:$0xf] %vm372, %v484
      %1885 = vst.msk [vmem:[#allocation2 + $0x4c] sm:$0xf] %vm372, %v485
      %1886 = vst.msk [vmem:[#allocation2 + $0x54] sm:$0xf] %vm372, %v1122
      %1887 = vst.msk [vmem:[#allocation2 + $0x5c] sm:$0xf] %vm372, %v1123
      %1888 = vst.msk [vmem:[#allocation2 + $0x64] sm:$0xf] %vm372, %v1498
      %1889 = vst.msk [vmem:[#allocation2 + $0x6c] sm:$0xf] %vm372, %v1499
      %1890 = vst.msk [vmem:[#allocation2 + $0x74] sm:$0xf] %vm372, %v1874
      %1891 = vst.msk [vmem:[#allocation2 + $0x7c] sm:$0xf] %vm372, %v1875
      %v1892 = vrot.slane %v350, 2
      %v1893 = vrot.slane %v351, 2
      %v1894 = vsel %vm567, %v1892, %v1893
      %v1895 = vrot.slane %v352, 2
      %v1896 = vsel %vm567, %v1893, %v1895
      %v1899 = vpack.c.bf16 %v1894, %v1894
      %v1900 = vpack.c.bf16 %v1896, %v1896
      %1903 = vrot.lane.b32.xlu0 %v630, 8
      %v1904 = vpop.permute.xlu0 %1903
      %1905 = vrot.lane.b32.xlu0 %v631, 8
      %v1906 = vpop.permute.xlu0 %1905
      %1907 = vrot.lane.b32.xlu0 %v632, 8
      %v1908 = vpop.permute.xlu0 %1907
      %1909 = vrot.lane.b32.xlu0 %v633, 8
      %v1910 = vpop.permute.xlu0 %1909
      %1911 = vrot.lane.b32.xlu0 %v634, 8
      %v1912 = vpop.permute.xlu0 %1911
      %1913 = vrot.lane.b32.xlu0 %v635, 8
      %v1914 = vpop.permute.xlu0 %1913
      %1915 = vrot.lane.b32.xlu0 %v636, 8
      %v1916 = vpop.permute.xlu0 %1915
      %1917 = vrot.lane.b32.xlu0 %v637, 8
      %v1918 = vpop.permute.xlu0 %1917
      %1919 = vrot.lane.b32.xlu0 %v638, 8
      %v1920 = vpop.permute.xlu0 %1919
      %1921 = vrot.lane.b32.xlu0 %v639, 8
      %v1922 = vpop.permute.xlu0 %1921
      %1923 = vrot.lane.b32.xlu0 %v1198, 8
      %v1924 = vpop.permute.xlu0 %1923
      %1925 = vrot.lane.b32.xlu0 %v1199, 8
      %v1926 = vpop.permute.xlu0 %1925
      %1927 = vrot.lane.b32.xlu0 %v1574, 8
      %v1928 = vpop.permute.xlu0 %1927
      %1929 = vrot.lane.b32.xlu0 %v1575, 8
      %v1930 = vpop.permute.xlu0 %1929
      %1931 = vrot.lane.b32.xlu0 %v1899, 8
      %v1932 = vpop.permute.xlu0 %1931
      %1933 = vrot.lane.b32.xlu0 %v1900, 8
      %v1934 = vpop.permute.xlu0 %1933
      %1951 = vst.msk [vmem:[#allocation2 + $0x4] sm:$0xf] %vm550, %v1904
      %1952 = vst.msk [vmem:[#allocation2 + $0xc] sm:$0xf] %vm550, %v1906
      %1953 = vst.msk [vmem:[#allocation2 + $0x14] sm:$0xf] %vm550, %v1908
      %1954 = vst.msk [vmem:[#allocation2 + $0x1c] sm:$0xf] %vm550, %v1910
      %1955 = vst.msk [vmem:[#allocation2 + $0x24] sm:$0xf] %vm550, %v1912
      %1956 = vst.msk [vmem:[#allocation2 + $0x2c] sm:$0xf] %vm550, %v1914
      %1957 = vst.msk [vmem:[#allocation2 + $0x34] sm:$0xf] %vm550, %v1916
      %1958 = vst.msk [vmem:[#allocation2 + $0x3c] sm:$0xf] %vm550, %v1918
      %1959 = vst.msk [vmem:[#allocation2 + $0x44] sm:$0xf] %vm550, %v1920
      %1960 = vst.msk [vmem:[#allocation2 + $0x4c] sm:$0xf] %vm550, %v1922
      %1961 = vst.msk [vmem:[#allocation2 + $0x54] sm:$0xf] %vm550, %v1924
      %1962 = vst.msk [vmem:[#allocation2 + $0x5c] sm:$0xf] %vm550, %v1926
      %1963 = vst.msk [vmem:[#allocation2 + $0x64] sm:$0xf] %vm550, %v1928
      %1964 = vst.msk [vmem:[#allocation2 + $0x6c] sm:$0xf] %vm550, %v1930
      %1965 = vst.msk [vmem:[#allocation2 + $0x74] sm:$0xf] %vm550, %v1932
      %1966 = vst.msk [vmem:[#allocation2 + $0x7c] sm:$0xf] %vm550, %v1934
      %v1967 = vrot.slane %v350, 3
      %v1968 = vrot.slane %v351, 3
      %v1969 = vsel %vm721, %v1967, %v1968
      %v1970 = vrot.slane %v352, 3
      %v1971 = vsel %vm721, %v1968, %v1970
      %v1974 = vpack.c.bf16 %v1969, %v1969
      %v1975 = vpack.c.bf16 %v1971, %v1971
      %1978 = vrot.lane.b32.xlu0 %v784, 16
      %v1979 = vpop.permute.xlu0 %1978
      %1980 = vrot.lane.b32.xlu0 %v785, 16
      %v1981 = vpop.permute.xlu0 %1980
      %1982 = vrot.lane.b32.xlu0 %v786, 16
      %v1983 = vpop.permute.xlu0 %1982
      %1984 = vrot.lane.b32.xlu0 %v787, 16
      %v1985 = vpop.permute.xlu0 %1984
      %1986 = vrot.lane.b32.xlu0 %v788, 16
      %v1987 = vpop.permute.xlu0 %1986
      %1988 = vrot.lane.b32.xlu0 %v789, 16
      %v1989 = vpop.permute.xlu0 %1988
      %1990 = vrot.lane.b32.xlu0 %v790, 16
      %v1991 = vpop.permute.xlu0 %1990
      %1992 = vrot.lane.b32.xlu0 %v791, 16
      %v1993 = vpop.permute.xlu0 %1992
      %1994 = vrot.lane.b32.xlu0 %v792, 16
      %v1995 = vpop.permute.xlu0 %1994
      %1996 = vrot.lane.b32.xlu0 %v793, 16
      %v1997 = vpop.permute.xlu0 %1996
      %1998 = vrot.lane.b32.xlu0 %v1274, 16
      %v1999 = vpop.permute.xlu0 %1998
      %2000 = vrot.lane.b32.xlu0 %v1275, 16
      %v2001 = vpop.permute.xlu0 %2000
      %2002 = vrot.lane.b32.xlu0 %v1650, 16
      %v2003 = vpop.permute.xlu0 %2002
      %2004 = vrot.lane.b32.xlu0 %v1651, 16
      %v2005 = vpop.permute.xlu0 %2004
      %2006 = vrot.lane.b32.xlu0 %v1974, 16
      %v2007 = vpop.permute.xlu0 %2006
      %2008 = vrot.lane.b32.xlu0 %v1975, 16
      %v2009 = vpop.permute.xlu0 %2008
      %2026 = vst.msk [vmem:[#allocation2 + $0x4] sm:$0xf] %vm704, %v1979
      %2027 = vst.msk [vmem:[#allocation2 + $0xc] sm:$0xf] %vm704, %v1981
      %2028 = vst.msk [vmem:[#allocation2 + $0x14] sm:$0xf] %vm704, %v1983
      %2029 = vst.msk [vmem:[#allocation2 + $0x1c] sm:$0xf] %vm704, %v1985
      %2030 = vst.msk [vmem:[#allocation2 + $0x24] sm:$0xf] %vm704, %v1987
      %2031 = vst.msk [vmem:[#allocation2 + $0x2c] sm:$0xf] %vm704, %v1989
      %2032 = vst.msk [vmem:[#allocation2 + $0x34] sm:$0xf] %vm704, %v1991
      %2033 = vst.msk [vmem:[#allocation2 + $0x3c] sm:$0xf] %vm704, %v1993
      %2034 = vst.msk [vmem:[#allocation2 + $0x44] sm:$0xf] %vm704, %v1995
      %2035 = vst.msk [vmem:[#allocation2 + $0x4c] sm:$0xf] %vm704, %v1997
      %2036 = vst.msk [vmem:[#allocation2 + $0x54] sm:$0xf] %vm704, %v1999
      %2037 = vst.msk [vmem:[#allocation2 + $0x5c] sm:$0xf] %vm704, %v2001
      %2038 = vst.msk [vmem:[#allocation2 + $0x64] sm:$0xf] %vm704, %v2003
      %2039 = vst.msk [vmem:[#allocation2 + $0x6c] sm:$0xf] %vm704, %v2005
      %2040 = vst.msk [vmem:[#allocation2 + $0x74] sm:$0xf] %vm704, %v2007
      %2041 = vst.msk [vmem:[#allocation2 + $0x7c] sm:$0xf] %vm704, %v2009
      %v2042 = vrot.slane %v350, 4
      %v2043 = vrot.slane %v351, 4
      %v2044 = vsel %vm875, %v2042, %v2043
      %v2045 = vrot.slane %v352, 4
      %v2046 = vsel %vm875, %v2043, %v2045
      %v2049 = vpack.c.bf16 %v2044, %v2044
      %v2050 = vpack.c.bf16 %v2046, %v2046
      %2053 = vrot.lane.b32.xlu0 %v938, 24
      %v2054 = vpop.permute.xlu0 %2053
      %2055 = vrot.lane.b32.xlu0 %v939, 24
      %v2056 = vpop.permute.xlu0 %2055
      %2057 = vrot.lane.b32.xlu0 %v940, 24
      %v2058 = vpop.permute.xlu0 %2057
      %2059 = vrot.lane.b32.xlu0 %v941, 24
      %v2060 = vpop.permute.xlu0 %2059
      %2061 = vrot.lane.b32.xlu0 %v942, 24
      %v2062 = vpop.permute.xlu0 %2061
      %2063 = vrot.lane.b32.xlu0 %v943, 24
      %v2064 = vpop.permute.xlu0 %2063
      %2065 = vrot.lane.b32.xlu0 %v944, 24
      %v2066 = vpop.permute.xlu0 %2065
      %2067 = vrot.lane.b32.xlu0 %v945, 24
      %v2068 = vpop.permute.xlu0 %2067
      %2069 = vrot.lane.b32.xlu0 %v946, 24
      %v2070 = vpop.permute.xlu0 %2069
      %2071 = vrot.lane.b32.xlu0 %v947, 24
      %v2072 = vpop.permute.xlu0 %2071
      %2073 = vrot.lane.b32.xlu0 %v1350, 24
      %v2074 = vpop.permute.xlu0 %2073
      %2075 = vrot.lane.b32.xlu0 %v1351, 24
      %v2076 = vpop.permute.xlu0 %2075
      %2077 = vrot.lane.b32.xlu0 %v1726, 24
      %v2078 = vpop.permute.xlu0 %2077
      %2079 = vrot.lane.b32.xlu0 %v1727, 24
      %v2080 = vpop.permute.xlu0 %2079
      %2081 = vrot.lane.b32.xlu0 %v2049, 24
      %v2082 = vpop.permute.xlu0 %2081
      %2083 = vrot.lane.b32.xlu0 %v2050, 24
      %v2084 = vpop.permute.xlu0 %2083
      %2101 = vst.msk [vmem:[#allocation2 + $0x4] sm:$0xf] %vm858, %v2054
      %2102 = vst.msk [vmem:[#allocation2 + $0xc] sm:$0xf] %vm858, %v2056
      %2103 = vst.msk [vmem:[#allocation2 + $0x14] sm:$0xf] %vm858, %v2058
      %2104 = vst.msk [vmem:[#allocation2 + $0x1c] sm:$0xf] %vm858, %v2060
      %2105 = vst.msk [vmem:[#allocation2 + $0x24] sm:$0xf] %vm858, %v2062
      %2106 = vst.msk [vmem:[#allocation2 + $0x2c] sm:$0xf] %vm858, %v2064
      %2107 = vst.msk [vmem:[#allocation2 + $0x34] sm:$0xf] %vm858, %v2066
      %2108 = vst.msk [vmem:[#allocation2 + $0x3c] sm:$0xf] %vm858, %v2068
      %2109 = vst.msk [vmem:[#allocation2 + $0x44] sm:$0xf] %vm858, %v2070
      %2110 = vst.msk [vmem:[#allocation2 + $0x4c] sm:$0xf] %vm858, %v2072
      %2111 = vst.msk [vmem:[#allocation2 + $0x54] sm:$0xf] %vm858, %v2074
      %2112 = vst.msk [vmem:[#allocation2 + $0x5c] sm:$0xf] %vm858, %v2076
      %2113 = vst.msk [vmem:[#allocation2 + $0x64] sm:$0xf] %vm858, %v2078
      %2114 = vst.msk [vmem:[#allocation2 + $0x6c] sm:$0xf] %vm858, %v2080
      %2115 = vst.msk [vmem:[#allocation2 + $0x74] sm:$0xf] %vm858, %v2082
      %2116 = vst.msk [vmem:[#allocation2 + $0x7c] sm:$0xf] %vm858, %v2084
      %v2117 = vpack.c.bf16 %v353, %v353
      %v2118 = vpack.c.bf16 %v354, %v354
      %2121 = vrot.lane.b32.xlu0 %v364, 32
      %v2122 = vpop.permute.xlu0 %2121
      %2123 = vrot.lane.b32.xlu0 %v365, 32
      %v2124 = vpop.permute.xlu0 %2123
      %2125 = vrot.lane.b32.xlu0 %v366, 32
      %v2126 = vpop.permute.xlu0 %2125
      %2127 = vrot.lane.b32.xlu0 %v367, 32
      %v2128 = vpop.permute.xlu0 %2127
      %2129 = vrot.lane.b32.xlu0 %v368, 32
      %v2130 = vpop.permute.xlu0 %2129
      %2131 = vrot.lane.b32.xlu0 %v369, 32
      %v2132 = vpop.permute.xlu0 %2131
      %2133 = vrot.lane.b32.xlu0 %v370, 32
      %v2134 = vpop.permute.xlu0 %2133
      %2135 = vrot.lane.b32.xlu0 %v371, 32
      %v2136 = vpop.permute.xlu0 %2135
      %2137 = vrot.lane.b32.xlu0 %v1029, 32
      %v2138 = vpop.permute.xlu0 %2137
      %2139 = vrot.lane.b32.xlu0 %v1030, 32
      %v2140 = vpop.permute.xlu0 %2139
      %2141 = vrot.lane.b32.xlu0 %v1419, 32
      %v2142 = vpop.permute.xlu0 %2141
      %2143 = vrot.lane.b32.xlu0 %v1420, 32
      %v2144 = vpop.permute.xlu0 %2143
      %2145 = vrot.lane.b32.xlu0 %v1795, 32
      %v2146 = vpop.permute.xlu0 %2145
      %2147 = vrot.lane.b32.xlu0 %v1796, 32
      %v2148 = vpop.permute.xlu0 %2147
      %2149 = vrot.lane.b32.xlu0 %v2117, 32
      %v2150 = vpop.permute.xlu0 %2149
      %2151 = vrot.lane.b32.xlu0 %v2118, 32
      %v2152 = vpop.permute.xlu0 %2151
      %2169 = vst.msk [vmem:[#allocation2 + $0x4] sm:$0xf] %vm1012, %v2122
      %2170 = vst.msk [vmem:[#allocation2 + $0xc] sm:$0xf] %vm1012, %v2124
      %2171 = vst.msk [vmem:[#allocation2 + $0x14] sm:$0xf] %vm1012, %v2126
      %2172 = vst.msk [vmem:[#allocation2 + $0x1c] sm:$0xf] %vm1012, %v2128
      %2173 = vst.msk [vmem:[#allocation2 + $0x24] sm:$0xf] %vm1012, %v2130
      %2174 = vst.msk [vmem:[#allocation2 + $0x2c] sm:$0xf] %vm1012, %v2132
      %2175 = vst.msk [vmem:[#allocation2 + $0x34] sm:$0xf] %vm1012, %v2134
      %2176 = vst.msk [vmem:[#allocation2 + $0x3c] sm:$0xf] %vm1012, %v2136
      %2177 = vst.msk [vmem:[#allocation2 + $0x44] sm:$0xf] %vm1012, %v2138
      %2178 = vst.msk [vmem:[#allocation2 + $0x4c] sm:$0xf] %vm1012, %v2140
      %2179 = vst.msk [vmem:[#allocation2 + $0x54] sm:$0xf] %vm1012, %v2142
      %2180 = vst.msk [vmem:[#allocation2 + $0x5c] sm:$0xf] %vm1012, %v2144
      %2181 = vst.msk [vmem:[#allocation2 + $0x64] sm:$0xf] %vm1012, %v2146
      %2182 = vst.msk [vmem:[#allocation2 + $0x6c] sm:$0xf] %vm1012, %v2148
      %2183 = vst.msk [vmem:[#allocation2 + $0x74] sm:$0xf] %vm1012, %v2150
      %2184 = vst.msk [vmem:[#allocation2 + $0x7c] sm:$0xf] %vm1012, %v2152
      %v2188 = vrot.slane %v353, 1
      %v2189 = vrot.slane %v354, 1
      %v2190 = vsel %vm413, %v2188, %v2189
      %v2191 = vrot.slane %v355, 1
      %v2192 = vsel %vm413, %v2189, %v2191
      %v2195 = vpack.c.bf16 %v2190, %v2190
      %v2196 = vpack.c.bf16 %v2192, %v2192
      %2201 = vrot.lane.b32.xlu0 %v478, 40
      %v2202 = vpop.permute.xlu0 %2201
      %2203 = vrot.lane.b32.xlu0 %v479, 40
      %v2204 = vpop.permute.xlu0 %2203
      %2205 = vrot.lane.b32.xlu0 %v480, 40
      %v2206 = vpop.permute.xlu0 %2205
      %2207 = vrot.lane.b32.xlu0 %v481, 40
      %v2208 = vpop.permute.xlu0 %2207
      %2209 = vrot.lane.b32.xlu0 %v482, 40
      %v2210 = vpop.permute.xlu0 %2209
      %2211 = vrot.lane.b32.xlu0 %v483, 40
      %v2212 = vpop.permute.xlu0 %2211
      %2213 = vrot.lane.b32.xlu0 %v484, 40
      %v2214 = vpop.permute.xlu0 %2213
      %2215 = vrot.lane.b32.xlu0 %v485, 40
      %v2216 = vpop.permute.xlu0 %2215
      %2217 = vrot.lane.b32.xlu0 %v1122, 40
      %v2218 = vpop.permute.xlu0 %2217
      %2219 = vrot.lane.b32.xlu0 %v1123, 40
      %v2220 = vpop.permute.xlu0 %2219
      %2221 = vrot.lane.b32.xlu0 %v1498, 40
      %v2222 = vpop.permute.xlu0 %2221
      %2223 = vrot.lane.b32.xlu0 %v1499, 40
      %v2224 = vpop.permute.xlu0 %2223
      %2225 = vrot.lane.b32.xlu0 %v1874, 40
      %v2226 = vpop.permute.xlu0 %2225
      %2227 = vrot.lane.b32.xlu0 %v1875, 40
      %v2228 = vpop.permute.xlu0 %2227
      %2229 = vrot.lane.b32.xlu0 %v2195, 40
      %v2230 = vpop.permute.xlu0 %2229
      %2231 = vrot.lane.b32.xlu0 %v2196, 40
      %v2232 = vpop.permute.xlu0 %2231
      %2249 = vst.msk [vmem:[#allocation2 + $0x4] sm:$0xf] %vm1095, %v2202
      %2250 = vst.msk [vmem:[#allocation2 + $0xc] sm:$0xf] %vm1095, %v2204
      %2251 = vst.msk [vmem:[#allocation2 + $0x14] sm:$0xf] %vm1095, %v2206
      %2252 = vst.msk [vmem:[#allocation2 + $0x1c] sm:$0xf] %vm1095, %v2208
      %2253 = vst.msk [vmem:[#allocation2 + $0x24] sm:$0xf] %vm1095, %v2210
      %2254 = vst.msk [vmem:[#allocation2 + $0x2c] sm:$0xf] %vm1095, %v2212
      %2255 = vst.msk [vmem:[#allocation2 + $0x34] sm:$0xf] %vm1095, %v2214
      %2256 = vst.msk [vmem:[#allocation2 + $0x3c] sm:$0xf] %vm1095, %v2216
      %2257 = vst.msk [vmem:[#allocation2 + $0x44] sm:$0xf] %vm1095, %v2218
      %2258 = vst.msk [vmem:[#allocation2 + $0x4c] sm:$0xf] %vm1095, %v2220
      %2259 = vst.msk [vmem:[#allocation2 + $0x54] sm:$0xf] %vm1095, %v2222
      %2260 = vst.msk [vmem:[#allocation2 + $0x5c] sm:$0xf] %vm1095, %v2224
      %2261 = vst.msk [vmem:[#allocation2 + $0x64] sm:$0xf] %vm1095, %v2226
      %2262 = vst.msk [vmem:[#allocation2 + $0x6c] sm:$0xf] %vm1095, %v2228
      %2263 = vst.msk [vmem:[#allocation2 + $0x74] sm:$0xf] %vm1095, %v2230
      %2264 = vst.msk [vmem:[#allocation2 + $0x7c] sm:$0xf] %vm1095, %v2232
      %v2265 = vrot.slane %v353, 2
      %v2266 = vrot.slane %v354, 2
      %v2267 = vsel %vm567, %v2265, %v2266
      %v2268 = vrot.slane %v355, 2
      %v2269 = vsel %vm567, %v2266, %v2268
      %v2272 = vpack.c.bf16 %v2267, %v2267
      %v2273 = vpack.c.bf16 %v2269, %v2269
      %2276 = vrot.lane.b32.xlu0 %v632, 48
      %v2277 = vpop.permute.xlu0 %2276
      %2278 = vrot.lane.b32.xlu0 %v633, 48
      %v2279 = vpop.permute.xlu0 %2278
      %2280 = vrot.lane.b32.xlu0 %v634, 48
      %v2281 = vpop.permute.xlu0 %2280
      %2282 = vrot.lane.b32.xlu0 %v635, 48
      %v2283 = vpop.permute.xlu0 %2282
      %2284 = vrot.lane.b32.xlu0 %v636, 48
      %v2285 = vpop.permute.xlu0 %2284
      %2286 = vrot.lane.b32.xlu0 %v637, 48
      %v2287 = vpop.permute.xlu0 %2286
      %2288 = vrot.lane.b32.xlu0 %v638, 48
      %v2289 = vpop.permute.xlu0 %2288
      %2290 = vrot.lane.b32.xlu0 %v639, 48
      %v2291 = vpop.permute.xlu0 %2290
      %2292 = vrot.lane.b32.xlu0 %v1198, 48
      %v2293 = vpop.permute.xlu0 %2292
      %2294 = vrot.lane.b32.xlu0 %v1199, 48
      %v2295 = vpop.permute.xlu0 %2294
      %2296 = vrot.lane.b32.xlu0 %v1574, 48
      %v2297 = vpop.permute.xlu0 %2296
      %2298 = vrot.lane.b32.xlu0 %v1575, 48
      %v2299 = vpop.permute.xlu0 %2298
      %2300 = vrot.lane.b32.xlu0 %v1899, 48
      %v2301 = vpop.permute.xlu0 %2300
      %2302 = vrot.lane.b32.xlu0 %v1900, 48
      %v2303 = vpop.permute.xlu0 %2302
      %2304 = vrot.lane.b32.xlu0 %v2272, 48
      %v2305 = vpop.permute.xlu0 %2304
      %2306 = vrot.lane.b32.xlu0 %v2273, 48
      %v2307 = vpop.permute.xlu0 %2306
      %2324 = vst.msk [vmem:[#allocation2 + $0x4] sm:$0xf] %vm1174, %v2277
      %2325 = vst.msk [vmem:[#allocation2 + $0xc] sm:$0xf] %vm1174, %v2279
      %2326 = vst.msk [vmem:[#allocation2 + $0x14] sm:$0xf] %vm1174, %v2281
      %2327 = vst.msk [vmem:[#allocation2 + $0x1c] sm:$0xf] %vm1174, %v2283
      %2328 = vst.msk [vmem:[#allocation2 + $0x24] sm:$0xf] %vm1174, %v2285
      %2329 = vst.msk [vmem:[#allocation2 + $0x2c] sm:$0xf] %vm1174, %v2287
      %2330 = vst.msk [vmem:[#allocation2 + $0x34] sm:$0xf] %vm1174, %v2289
      %2331 = vst.msk [vmem:[#allocation2 + $0x3c] sm:$0xf] %vm1174, %v2291
      %2332 = vst.msk [vmem:[#allocation2 + $0x44] sm:$0xf] %vm1174, %v2293
      %2333 = vst.msk [vmem:[#allocation2 + $0x4c] sm:$0xf] %vm1174, %v2295
      %2334 = vst.msk [vmem:[#allocation2 + $0x54] sm:$0xf] %vm1174, %v2297
      %2335 = vst.msk [vmem:[#allocation2 + $0x5c] sm:$0xf] %vm1174, %v2299
      %2336 = vst.msk [vmem:[#allocation2 + $0x64] sm:$0xf] %vm1174, %v2301
      %2337 = vst.msk [vmem:[#allocation2 + $0x6c] sm:$0xf] %vm1174, %v2303
      %2338 = vst.msk [vmem:[#allocation2 + $0x74] sm:$0xf] %vm1174, %v2305
      %2339 = vst.msk [vmem:[#allocation2 + $0x7c] sm:$0xf] %vm1174, %v2307
      %v2340 = vrot.slane %v353, 3
      %v2341 = vrot.slane %v354, 3
      %v2342 = vsel %vm721, %v2340, %v2341
      %v2343 = vrot.slane %v355, 3
      %v2344 = vsel %vm721, %v2341, %v2343
      %v2347 = vpack.c.bf16 %v2342, %v2342
      %v2348 = vpack.c.bf16 %v2344, %v2344
      %2351 = vrot.lane.b32.xlu0 %v786, 56
      %v2352 = vpop.permute.xlu0 %2351
      %2353 = vrot.lane.b32.xlu0 %v787, 56
      %v2354 = vpop.permute.xlu0 %2353
      %2355 = vrot.lane.b32.xlu0 %v788, 56
      %v2356 = vpop.permute.xlu0 %2355
      %2357 = vrot.lane.b32.xlu0 %v789, 56
      %v2358 = vpop.permute.xlu0 %2357
      %2359 = vrot.lane.b32.xlu0 %v790, 56
      %v2360 = vpop.permute.xlu0 %2359
      %2361 = vrot.lane.b32.xlu0 %v791, 56
      %v2362 = vpop.permute.xlu0 %2361
      %2363 = vrot.lane.b32.xlu0 %v792, 56
      %v2364 = vpop.permute.xlu0 %2363
      %2365 = vrot.lane.b32.xlu0 %v793, 56
      %v2366 = vpop.permute.xlu0 %2365
      %2367 = vrot.lane.b32.xlu0 %v1274, 56
      %v2368 = vpop.permute.xlu0 %2367
      %2369 = vrot.lane.b32.xlu0 %v1275, 56
      %v2370 = vpop.permute.xlu0 %2369
      %2371 = vrot.lane.b32.xlu0 %v1650, 56
      %v2372 = vpop.permute.xlu0 %2371
      %2373 = vrot.lane.b32.xlu0 %v1651, 56
      %v2374 = vpop.permute.xlu0 %2373
      %2375 = vrot.lane.b32.xlu0 %v1974, 56
      %v2376 = vpop.permute.xlu0 %2375
      %2377 = vrot.lane.b32.xlu0 %v1975, 56
      %v2378 = vpop.permute.xlu0 %2377
      %2379 = vrot.lane.b32.xlu0 %v2347, 56
      %v2380 = vpop.permute.xlu0 %2379
      %2381 = vrot.lane.b32.xlu0 %v2348, 56
      %v2382 = vpop.permute.xlu0 %2381
      %2399 = vst.msk [vmem:[#allocation2 + $0x4] sm:$0xf] %vm1250, %v2352
      %2400 = vst.msk [vmem:[#allocation2 + $0xc] sm:$0xf] %vm1250, %v2354
      %2401 = vst.msk [vmem:[#allocation2 + $0x14] sm:$0xf] %vm1250, %v2356
      %2402 = vst.msk [vmem:[#allocation2 + $0x1c] sm:$0xf] %vm1250, %v2358
      %2403 = vst.msk [vmem:[#allocation2 + $0x24] sm:$0xf] %vm1250, %v2360
      %2404 = vst.msk [vmem:[#allocation2 + $0x2c] sm:$0xf] %vm1250, %v2362
      %2405 = vst.msk [vmem:[#allocation2 + $0x34] sm:$0xf] %vm1250, %v2364
      %2406 = vst.msk [vmem:[#allocation2 + $0x3c] sm:$0xf] %vm1250, %v2366
      %2407 = vst.msk [vmem:[#allocation2 + $0x44] sm:$0xf] %vm1250, %v2368
      %2408 = vst.msk [vmem:[#allocation2 + $0x4c] sm:$0xf] %vm1250, %v2370
      %2409 = vst.msk [vmem:[#allocation2 + $0x54] sm:$0xf] %vm1250, %v2372
      %2410 = vst.msk [vmem:[#allocation2 + $0x5c] sm:$0xf] %vm1250, %v2374
      %2411 = vst.msk [vmem:[#allocation2 + $0x64] sm:$0xf] %vm1250, %v2376
      %2412 = vst.msk [vmem:[#allocation2 + $0x6c] sm:$0xf] %vm1250, %v2378
      %2413 = vst.msk [vmem:[#allocation2 + $0x74] sm:$0xf] %vm1250, %v2380
      %2414 = vst.msk [vmem:[#allocation2 + $0x7c] sm:$0xf] %vm1250, %v2382
      %v2415 = vrot.slane %v353, 4
      %v2416 = vrot.slane %v354, 4
      %v2417 = vsel %vm875, %v2415, %v2416
      %v2418 = vrot.slane %v355, 4
      %v2419 = vsel %vm875, %v2416, %v2418
      %v2422 = vpack.c.bf16 %v2417, %v2417
      %v2423 = vpack.c.bf16 %v2419, %v2419
      %2426 = vrot.lane.b32.xlu0 %v940, 64
      %v2427 = vpop.permute.xlu0 %2426
      %2428 = vrot.lane.b32.xlu0 %v941, 64
      %v2429 = vpop.permute.xlu0 %2428
      %2430 = vrot.lane.b32.xlu0 %v942, 64
      %v2431 = vpop.permute.xlu0 %2430
      %2432 = vrot.lane.b32.xlu0 %v943, 64
      %v2433 = vpop.permute.xlu0 %2432
      %2434 = vrot.lane.b32.xlu0 %v944, 64
      %v2435 = vpop.permute.xlu0 %2434
      %2436 = vrot.lane.b32.xlu0 %v945, 64
      %v2437 = vpop.permute.xlu0 %2436
      %2438 = vrot.lane.b32.xlu0 %v946, 64
      %v2439 = vpop.permute.xlu0 %2438
      %2440 = vrot.lane.b32.xlu0 %v947, 64
      %v2441 = vpop.permute.xlu0 %2440
      %2442 = vrot.lane.b32.xlu0 %v1350, 64
      %v2443 = vpop.permute.xlu0 %2442
      %2444 = vrot.lane.b32.xlu0 %v1351, 64
      %v2445 = vpop.permute.xlu0 %2444
      %2446 = vrot.lane.b32.xlu0 %v1726, 64
      %v2447 = vpop.permute.xlu0 %2446
      %2448 = vrot.lane.b32.xlu0 %v1727, 64
      %v2449 = vpop.permute.xlu0 %2448
      %2450 = vrot.lane.b32.xlu0 %v2049, 64
      %v2451 = vpop.permute.xlu0 %2450
      %2452 = vrot.lane.b32.xlu0 %v2050, 64
      %v2453 = vpop.permute.xlu0 %2452
      %2454 = vrot.lane.b32.xlu0 %v2422, 64
      %v2455 = vpop.permute.xlu0 %2454
      %2456 = vrot.lane.b32.xlu0 %v2423, 64
      %v2457 = vpop.permute.xlu0 %2456
      %2474 = vst.msk [vmem:[#allocation2 + $0x4] sm:$0xf] %vm1326, %v2427
      %2475 = vst.msk [vmem:[#allocation2 + $0xc] sm:$0xf] %vm1326, %v2429
      %2476 = vst.msk [vmem:[#allocation2 + $0x14] sm:$0xf] %vm1326, %v2431
      %2477 = vst.msk [vmem:[#allocation2 + $0x1c] sm:$0xf] %vm1326, %v2433
      %2478 = vst.msk [vmem:[#allocation2 + $0x24] sm:$0xf] %vm1326, %v2435
      %2479 = vst.msk [vmem:[#allocation2 + $0x2c] sm:$0xf] %vm1326, %v2437
      %2480 = vst.msk [vmem:[#allocation2 + $0x34] sm:$0xf] %vm1326, %v2439
      %2481 = vst.msk [vmem:[#allocation2 + $0x3c] sm:$0xf] %vm1326, %v2441
      %2482 = vst.msk [vmem:[#allocation2 + $0x44] sm:$0xf] %vm1326, %v2443
      %2483 = vst.msk [vmem:[#allocation2 + $0x4c] sm:$0xf] %vm1326, %v2445
      %2484 = vst.msk [vmem:[#allocation2 + $0x54] sm:$0xf] %vm1326, %v2447
      %2485 = vst.msk [vmem:[#allocation2 + $0x5c] sm:$0xf] %vm1326, %v2449
      %2486 = vst.msk [vmem:[#allocation2 + $0x64] sm:$0xf] %vm1326, %v2451
      %2487 = vst.msk [vmem:[#allocation2 + $0x6c] sm:$0xf] %vm1326, %v2453
      %2488 = vst.msk [vmem:[#allocation2 + $0x74] sm:$0xf] %vm1326, %v2455
      %2489 = vst.msk [vmem:[#allocation2 + $0x7c] sm:$0xf] %vm1326, %v2457
      %v2490 = vld [vmem:[#allocation2] sm:$0xff]
      %v2491 = vld [vmem:[#allocation2 + $0x8] sm:$0xff]
      %v2492 = vld [vmem:[#allocation2 + $0x10] sm:$0xff]
      %v2493 = vld [vmem:[#allocation2 + $0x18] sm:$0xff]
      %v2494 = vld [vmem:[#allocation2 + $0x20] sm:$0xff]
      %v2495 = vld [vmem:[#allocation2 + $0x28] sm:$0xff]
      %v2496 = vld [vmem:[#allocation2 + $0x30] sm:$0xff]
      %v2497 = vld [vmem:[#allocation2 + $0x38] sm:$0xff]
      %v2498 = vld [vmem:[#allocation2 + $0x40] sm:$0xff]
      %v2499 = vld [vmem:[#allocation2 + $0x48] sm:$0xff]
      %v2500 = vld [vmem:[#allocation2 + $0x50] sm:$0xff]
      %v2501 = vld [vmem:[#allocation2 + $0x58] sm:$0xff]
      %v2502 = vld [vmem:[#allocation2 + $0x60] sm:$0xff]
      %v2503 = vld [vmem:[#allocation2 + $0x68] sm:$0xff]
      %v2504 = vld [vmem:[#allocation2 + $0x70] sm:$0xff]
      %v2505 = vld [vmem:[#allocation2 + $0x78] sm:$0xff]
      %v2506 = vld [vmem:[%s1] sm:$0xf]
      %v2507 = vld [vmem:[%s1 + $0x4] sm:$0xf]
      %v2508 = vld [vmem:[%s1 + $0x8] sm:$0xf]
      %v2509 = vld [vmem:[%s1 + $0xc] sm:$0xf]
      %v2510 = vld [vmem:[%s1 + $0x10] sm:$0xf]
      %v2511 = vld [vmem:[%s1 + $0x14] sm:$0xf]
      %v2512 = vld [vmem:[%s1 + $0x18] sm:$0xf]
      %v2513 = vld [vmem:[%s1 + $0x1c] sm:$0xf]
      %v2514 = vld [vmem:[%s1 + $0x20] sm:$0xf]
      %v2515 = vld [vmem:[%s1 + $0x24] sm:$0xf]
      %v2516 = vld [vmem:[%s1 + $0x28] sm:$0xf]
      %v2517 = vld [vmem:[%s1 + $0x2c] sm:$0xf]
      %v2518 = vld [vmem:[%s1 + $0x30] sm:$0xf]
      %v2519 = vld [vmem:[%s1 + $0x34] sm:$0xf]
      %v2520 = vld [vmem:[%s1 + $0x38] sm:$0xf]
      %v2521 = vld [vmem:[%s1 + $0x3c] sm:$0xf]
      %v2522 = vld [vmem:[%s1 + $0x40] sm:$0xf]
      %v2523 = vld [vmem:[%s1 + $0x44] sm:$0xf]
      %v2524 = vld [vmem:[%s1 + $0x48] sm:$0xf]
      %v2525 = vld [vmem:[%s1 + $0x4c] sm:$0xf]
      %v2526 = vld [vmem:[%s1 + $0x50] sm:$0xf]
      %v2527 = vld [vmem:[%s1 + $0x54] sm:$0xf]
      %v2528 = vld [vmem:[%s1 + $0x58] sm:$0xf]
      %v2529 = vld [vmem:[%s1 + $0x5c] sm:$0xf]
      %v2530 = vld [vmem:[%s1 + $0x60] sm:$0xf]
      %v2531 = vld [vmem:[%s2] sm:$0x1]
      %v2533 = vperm.slane %v2531, 0
      %v2551 = vunpack.c.l.b16 %v2490
      %v2552 = vunpack.c.h.b16 %v2490
      %v2553 = vunpack.c.l.b16 %v2491
      %v2554 = vunpack.c.h.b16 %v2491
      %v2555 = vunpack.c.l.b16 %v2492
      %v2556 = vunpack.c.h.b16 %v2492
      %v2557 = vunpack.c.l.b16 %v2493
      %v2558 = vunpack.c.h.b16 %v2493
      %v2559 = vunpack.c.l.b16 %v2494
      %v2560 = vunpack.c.h.b16 %v2494
      %v2561 = vunpack.c.l.b16 %v2495
      %v2562 = vunpack.c.h.b16 %v2495
      %v2563 = vunpack.c.l.b16 %v2496
      %v2564 = vunpack.c.h.b16 %v2496
      %v2565 = vunpack.c.l.b16 %v2497
      %v2566 = vunpack.c.h.b16 %v2497
      %v2567 = vunpack.c.l.b16 %v2498
      %v2568 = vunpack.c.h.b16 %v2498
      %v2569 = vunpack.c.l.b16 %v2499
      %v2570 = vunpack.c.h.b16 %v2499
      %v2571 = vunpack.c.l.b16 %v2500
      %v2572 = vunpack.c.h.b16 %v2500
      %v2573 = vunpack.c.l.b16 %v2501
      %v2574 = vunpack.c.h.b16 %v2501
      %v2575 = vunpack.c.l.b16 %v2502
      %v2576 = vunpack.c.h.b16 %v2502
      %v2577 = vunpack.c.l.b16 %v2503
      %v2578 = vunpack.c.h.b16 %v2503
      %v2579 = vunpack.c.l.b16 %v2504
      %v2580 = vunpack.c.h.b16 %v2504
      %v2581 = vunpack.c.l.b16 %v2505
      %v2582 = vunpack.c.h.b16 %v2505
      %v2583 = vpack.c.b16 %v2553, %v2551
      %v2584 = vpack.c.b16 %v2554, %v2552
      %v2585 = vpack.c.b16 %v2557, %v2555
      %v2586 = vpack.c.b16 %v2558, %v2556
      %v2587 = vpack.c.b16 %v2561, %v2559
      %v2588 = vpack.c.b16 %v2562, %v2560
      %v2589 = vpack.c.b16 %v2565, %v2563
      %v2590 = vpack.c.b16 %v2566, %v2564
      %v2591 = vpack.c.b16 %v2569, %v2567
      %v2592 = vpack.c.b16 %v2570, %v2568
      %v2593 = vpack.c.b16 %v2573, %v2571
      %v2594 = vpack.c.b16 %v2574, %v2572
      %v2595 = vpack.c.b16 %v2577, %v2575
      %v2596 = vpack.c.b16 %v2578, %v2576
      %v2597 = vpack.c.b16 %v2581, %v2579
      %v2598 = vpack.c.b16 %v2582, %v2580
      %v2632 = vunpack.c.l.b16 %v2506
      %v2633 = vunpack.c.l.b16 %v2507
      %v2634 = vunpack.c.l.b16 %v2508
      %v2635 = vunpack.c.l.b16 %v2509
      %v2636 = vunpack.c.l.b16 %v2510
      %v2637 = vunpack.c.l.b16 %v2511
      %v2638 = vunpack.c.l.b16 %v2512
      %v2639 = vunpack.c.l.b16 %v2513
      %v2640 = vunpack.c.l.b16 %v2514
      %v2641 = vunpack.c.l.b16 %v2515
      %v2642 = vunpack.c.l.b16 %v2516
      %v2643 = vunpack.c.l.b16 %v2517
      %v2644 = vunpack.c.l.b16 %v2518
      %v2645 = vunpack.c.l.b16 %v2519
      %v2646 = vunpack.c.l.b16 %v2520
      %v2647 = vunpack.c.l.b16 %v2521
      %v2648 = vunpack.c.l.b16 %v2522
      %v2649 = vunpack.c.l.b16 %v2523
      %v2650 = vunpack.c.l.b16 %v2524
      %v2651 = vunpack.c.l.b16 %v2525
      %v2652 = vunpack.c.l.b16 %v2526
      %v2653 = vunpack.c.l.b16 %v2527
      %v2654 = vunpack.c.l.b16 %v2528
      %v2655 = vunpack.c.l.b16 %v2529
      %v2656 = vunpack.c.l.b16 %v2530
      %v2657 = vpack.c.b16 %v2633, %v2632
      %v2658 = vpack.c.b16 %v2635, %v2634
      %v2659 = vpack.c.b16 %v2637, %v2636
      %v2660 = vpack.c.b16 %v2639, %v2638
      %v2661 = vpack.c.b16 %v2641, %v2640
      %v2662 = vpack.c.b16 %v2643, %v2642
      %v2663 = vpack.c.b16 %v2645, %v2644
      %v2664 = vpack.c.b16 %v2647, %v2646
      %v2665 = vpack.c.b16 %v2649, %v2648
      %v2666 = vpack.c.b16 %v2651, %v2650
      %v2667 = vpack.c.b16 %v2653, %v2652
      %v2668 = vpack.c.b16 %v2655, %v2654
      %v2669 = vpack.c.b16 %v2656, %v2656
      %vm2682 = vcmask 588800
      %v2684 = vsel %vm2682, %v2584, 0
      %v2687 = vsel %vm2682, %v2586, 0
      %v2690 = vsel %vm2682, %v2588, 0
      %v2693 = vsel %vm2682, %v2590, 0
      %v2696 = vsel %vm2682, %v2592, 0
      %v2699 = vsel %vm2682, %v2594, 0
      %v2702 = vsel %vm2682, %v2596, 0
      %v2705 = vsel %vm2682, %v2598, 0
      %v2708 = vsel %vm875, %v2669, 0
      %2710 = vmatpush.bf16.msra.mxu0 %v2664
      %2711 = vmatpush.bf16.msra.mxu0 %v2663
      %2712 = vmatpush.bf16.msra.mxu0 %v2662
      %2713 = vmatpush.bf16.msra.mxu0 %v2661
      %2714 = vmatpush.bf16.msra.mxu0 %v2660
      %2715 = vmatpush.bf16.msra.mxu0 %v2659
      %2716 = vmatpush.bf16.msra.mxu0 %v2658
      %2717 = vmatpush.bf16.msra.mxu0 %v2657
      %2718 = vmatmul.bf16.gmra.mxu0 %v2583
      %v2719 = vpop.f32.mrf.mxu0
      %v2720 = vadd.f32 %v2533, %v2719
      %v2721 = vpop.f32.mrf.mxu0
      %v2722 = vadd.f32 %v2533, %v2721
      %2723 = vmatmul.bf16.gmra.mxu0 %v2585
      %v2724 = vpop.f32.mrf.mxu0
      %v2725 = vadd.f32 %v2533, %v2724
      %v2726 = vpop.f32.mrf.mxu0
      %v2727 = vadd.f32 %v2533, %v2726
      %2728 = vmatmul.bf16.gmra.mxu0 %v2587
      %v2729 = vpop.f32.mrf.mxu0
      %v2730 = vadd.f32 %v2533, %v2729
      %v2731 = vpop.f32.mrf.mxu0
      %v2732 = vadd.f32 %v2533, %v2731
      %2733 = vmatmul.bf16.gmra.mxu0 %v2589
      %v2734 = vpop.f32.mrf.mxu0
      %v2735 = vadd.f32 %v2533, %v2734
      %v2736 = vpop.f32.mrf.mxu0
      %v2737 = vadd.f32 %v2533, %v2736
      %2738 = vmatmul.bf16.gmra.mxu0 %v2591
      %v2739 = vpop.f32.mrf.mxu0
      %v2740 = vadd.f32 %v2533, %v2739
      %v2741 = vpop.f32.mrf.mxu0
      %v2742 = vadd.f32 %v2533, %v2741
      %2743 = vmatmul.bf16.gmra.mxu0 %v2593
      %v2744 = vpop.f32.mrf.mxu0
      %v2745 = vadd.f32 %v2533, %v2744
      %v2746 = vpop.f32.mrf.mxu0
      %v2747 = vadd.f32 %v2533, %v2746
      %2748 = vmatmul.bf16.gmra.mxu0 %v2595
      %v2749 = vpop.f32.mrf.mxu0
      %v2750 = vadd.f32 %v2533, %v2749
      %v2751 = vpop.f32.mrf.mxu0
      %v2752 = vadd.f32 %v2533, %v2751
      %2753 = vmatmul.bf16.gmra.mxu0 %v2597
      %v2754 = vpop.f32.mrf.mxu0
      %v2755 = vadd.f32 %v2533, %v2754
      %v2756 = vpop.f32.mrf.mxu0
      %v2757 = vadd.f32 %v2533, %v2756
      %2758 = vdwg.mxu0
      %2759 = vmatpush.bf16.msra.mxu0 0
      %2760 = vmatpush.bf16.msra.mxu0 0
      %2761 = vmatpush.bf16.msra.mxu0 0
      %2762 = vmatpush.bf16.msra.mxu0 %v2708
      %2763 = vmatpush.bf16.msra.mxu0 %v2668
      %2764 = vmatpush.bf16.msra.mxu0 %v2667
      %2765 = vmatpush.bf16.msra.mxu0 %v2666
      %2766 = vmatpush.bf16.msra.mxu0 %v2665
      %2767 = vmatmul.bf16.gmra.mxu0 %v2684
      %v2768 = vpop.f32.mrf.mxu0
      %v2769 = vadd.f32 %v2720, %v2768
      %v2770 = vpop.f32.mrf.mxu0
      %v2771 = vadd.f32 %v2722, %v2770
      %2772 = vmatmul.bf16.gmra.mxu0 %v2687
      %v2773 = vpop.f32.mrf.mxu0
      %v2774 = vadd.f32 %v2725, %v2773
      %v2775 = vpop.f32.mrf.mxu0
      %v2776 = vadd.f32 %v2727, %v2775
      %2777 = vmatmul.bf16.gmra.mxu0 %v2690
      %v2778 = vpop.f32.mrf.mxu0
      %v2779 = vadd.f32 %v2730, %v2778
      %v2780 = vpop.f32.mrf.mxu0
      %v2781 = vadd.f32 %v2732, %v2780
      %2782 = vmatmul.bf16.gmra.mxu0 %v2693
      %v2783 = vpop.f32.mrf.mxu0
      %v2784 = vadd.f32 %v2735, %v2783
      %v2785 = vpop.f32.mrf.mxu0
      %v2786 = vadd.f32 %v2737, %v2785
      %2787 = vmatmul.bf16.gmra.mxu0 %v2696
      %v2788 = vpop.f32.mrf.mxu0
      %v2789 = vadd.f32 %v2740, %v2788
      %v2790 = vpop.f32.mrf.mxu0
      %v2791 = vadd.f32 %v2742, %v2790
      %2792 = vmatmul.bf16.gmra.mxu0 %v2699
      %v2793 = vpop.f32.mrf.mxu0
      %v2794 = vadd.f32 %v2745, %v2793
      %v2795 = vpop.f32.mrf.mxu0
      %v2796 = vadd.f32 %v2747, %v2795
      %2797 = vmatmul.bf16.gmra.mxu0 %v2702
      %v2798 = vpop.f32.mrf.mxu0
      %v2799 = vadd.f32 %v2750, %v2798
      %v2800 = vpop.f32.mrf.mxu0
      %v2801 = vadd.f32 %v2752, %v2800
      %2802 = vmatmul.bf16.gmra.mxu0 %v2705
      %v2803 = vpop.f32.mrf.mxu0
      %v2804 = vadd.f32 %v2755, %v2803
      %v2805 = vpop.f32.mrf.mxu0
      %v2806 = vadd.f32 %v2757, %v2805
      %2807 = vdwg.mxu0
      %v2808 = vmax.f32 %v2769, 0.0
      %v2809 = vmax.f32 %v2771, 0.0
      %v2810 = vmax.f32 %v2774, 0.0
      %v2811 = vmax.f32 %v2776, 0.0
      %v2812 = vmax.f32 %v2779, 0.0
      %v2813 = vmax.f32 %v2781, 0.0
      %v2814 = vmax.f32 %v2784, 0.0
      %v2815 = vmax.f32 %v2786, 0.0
      %v2816 = vmax.f32 %v2789, 0.0
      %v2817 = vmax.f32 %v2791, 0.0
      %v2818 = vmax.f32 %v2794, 0.0
      %v2819 = vmax.f32 %v2796, 0.0
      %v2820 = vmax.f32 %v2799, 0.0
      %v2821 = vmax.f32 %v2801, 0.0
      %v2822 = vmax.f32 %v2804, 0.0
      %v2823 = vmax.f32 %v2806, 0.0
      %v2824 = vpack.c.bf16 %v2809, %v2808
      %v2825 = vpack.c.bf16 %v2811, %v2810
      %v2826 = vpack.c.bf16 %v2813, %v2812
      %v2827 = vpack.c.bf16 %v2815, %v2814
      %v2828 = vpack.c.bf16 %v2817, %v2816
      %v2829 = vpack.c.bf16 %v2819, %v2818
      %v2830 = vpack.c.bf16 %v2821, %v2820
      %v2831 = vpack.c.bf16 %v2823, %v2822
      %v2832 = vld [vmem:[%s3] sm:$0xf]
      %v2833 = vld [vmem:[%s3 + $0x4] sm:$0xf]
      %v2834 = vld [vmem:[%s4] sm:$0x1]
      %v2836 = vperm.slane %v2834, 0
      %v2840 = vunpack.c.l.b16 %v2832
      %v2841 = vunpack.c.l.b16 %v2833
      %v2842 = vpack.c.b16 %v2841, %v2840
      %vm2844 = vcmask 130048
      %v2846 = vsel %vm2844, %v2824, 0
      %v2849 = vsel %vm2844, %v2825, 0
      %v2852 = vsel %vm2844, %v2826, 0
      %v2855 = vsel %vm2844, %v2827, 0
      %v2858 = vsel %vm2844, %v2828, 0
      %v2861 = vsel %vm2844, %v2829, 0
      %v2864 = vsel %vm2844, %v2830, 0
      %v2867 = vsel %vm2844, %v2831, 0
      %2869 = vmatpush.bf16.msra.mxu0 0
      %2870 = vmatpush.bf16.msra.mxu0 0
      %2871 = vmatpush.bf16.msra.mxu0 0
      %2872 = vmatpush.bf16.msra.mxu0 0
      %2873 = vmatpush.bf16.msra.mxu0 0
      %2874 = vmatpush.bf16.msra.mxu0 0
      %2875 = vmatpush.bf16.msra.mxu0 0
      %2876 = vmatpush.bf16.msra.mxu0 %v2842
      %2877 = vmatmul.bf16.gmra.mxu0 %v2846
      %v2878 = vpop.f32.mrf.mxu0
      %v2879 = vadd.f32 %v2836, %v2878
      %v2880 = vpop.f32.mrf.mxu0
      %v2881 = vadd.f32 %v2836, %v2880
      %2882 = vmatmul.bf16.gmra.mxu0 %v2849
      %v2883 = vpop.f32.mrf.mxu0
      %v2884 = vadd.f32 %v2836, %v2883
      %v2885 = vpop.f32.mrf.mxu0
      %v2886 = vadd.f32 %v2836, %v2885
      %2887 = vmatmul.bf16.gmra.mxu0 %v2852
      %v2888 = vpop.f32.mrf.mxu0
      %v2889 = vadd.f32 %v2836, %v2888
      %v2890 = vpop.f32.mrf.mxu0
      %v2891 = vadd.f32 %v2836, %v2890
      %2892 = vmatmul.bf16.gmra.mxu0 %v2855
      %v2893 = vpop.f32.mrf.mxu0
      %v2894 = vadd.f32 %v2836, %v2893
      %v2895 = vpop.f32.mrf.mxu0
      %v2896 = vadd.f32 %v2836, %v2895
      %2897 = vmatmul.bf16.gmra.mxu0 %v2858
      %v2898 = vpop.f32.mrf.mxu0
      %v2899 = vadd.f32 %v2836, %v2898
      %v2900 = vpop.f32.mrf.mxu0
      %v2901 = vadd.f32 %v2836, %v2900
      %2902 = vmatmul.bf16.gmra.mxu0 %v2861
      %v2903 = vpop.f32.mrf.mxu0
      %v2904 = vadd.f32 %v2836, %v2903
      %v2905 = vpop.f32.mrf.mxu0
      %v2906 = vadd.f32 %v2836, %v2905
      %2907 = vmatmul.bf16.gmra.mxu0 %v2864
      %v2908 = vpop.f32.mrf.mxu0
      %v2909 = vadd.f32 %v2836, %v2908
      %v2910 = vpop.f32.mrf.mxu0
      %v2911 = vadd.f32 %v2836, %v2910
      %2912 = vmatmul.bf16.gmra.mxu0 %v2867
      %v2913 = vpop.f32.mrf.mxu0
      %v2914 = vadd.f32 %v2836, %v2913
      %v2915 = vpop.f32.mrf.mxu0
      %v2916 = vadd.f32 %v2836, %v2915
      %2917 = vdwg.mxu0
      %v2918 = vld [vmem:[%s303] sm:$0xff]
      %v2919 = vld [vmem:[%s303 + $0x8] sm:$0xff]
      %v2920 = vld [vmem:[%s303 + $0x10] sm:$0xff]
      %v2921 = vld [vmem:[%s303 + $0x18] sm:$0xff]
      %v2922 = vld [vmem:[%s303 + $0x20] sm:$0xff]
      %v2923 = vld [vmem:[%s303 + $0x28] sm:$0xff]
      %v2924 = vld [vmem:[%s303 + $0x30] sm:$0xff]
      %v2925 = vld [vmem:[%s303 + $0x38] sm:$0xff]
      %v2926 = vld [vmem:[%s303 + $0x40] sm:$0xff]
      %v2927 = vld [vmem:[%s303 + $0x48] sm:$0xff]
      %v2928 = vld [vmem:[%s303 + $0x50] sm:$0xff]
      %v2929 = vld [vmem:[%s303 + $0x58] sm:$0xff]
      %v2930 = vld [vmem:[%s303 + $0x60] sm:$0xff]
      %v2931 = vld [vmem:[%s303 + $0x68] sm:$0xff]
      %v2932 = vld [vmem:[%s303 + $0x70] sm:$0xff]
      %v2933 = vld [vmem:[%s303 + $0x78] sm:$0xff]
      %v2934 = vadd.f32 %v2879, %v2918
      %v2935 = vadd.f32 %v2881, %v2919
      %v2936 = vadd.f32 %v2884, %v2920
      %v2937 = vadd.f32 %v2886, %v2921
      %v2938 = vadd.f32 %v2889, %v2922
      %v2939 = vadd.f32 %v2891, %v2923
      %v2940 = vadd.f32 %v2894, %v2924
      %v2941 = vadd.f32 %v2896, %v2925
      %v2942 = vadd.f32 %v2899, %v2926
      %v2943 = vadd.f32 %v2901, %v2927
      %v2944 = vadd.f32 %v2904, %v2928
      %v2945 = vadd.f32 %v2906, %v2929
      %v2946 = vadd.f32 %v2909, %v2930
      %v2947 = vadd.f32 %v2911, %v2931
      %v2948 = vadd.f32 %v2914, %v2932
      %v2949 = vadd.f32 %v2916, %v2933
      %vm2950 = vcmask 31744
      %2951 = vst.msk [vmem:[%s314] sm:$0xff] %vm2950, %v2934
      %2952 = vst.msk [vmem:[%s314 + $0x8] sm:$0xff] %vm2950, %v2935
      %2953 = vst.msk [vmem:[%s314 + $0x10] sm:$0xff] %vm2950, %v2936
      %2954 = vst.msk [vmem:[%s314 + $0x18] sm:$0xff] %vm2950, %v2937
      %2955 = vst.msk [vmem:[%s314 + $0x20] sm:$0xff] %vm2950, %v2938
      %2956 = vst.msk [vmem:[%s314 + $0x28] sm:$0xff] %vm2950, %v2939
      %2957 = vst.msk [vmem:[%s314 + $0x30] sm:$0xff] %vm2950, %v2940
      %2958 = vst.msk [vmem:[%s314 + $0x38] sm:$0xff] %vm2950, %v2941
      %2959 = vst.msk [vmem:[%s314 + $0x40] sm:$0xff] %vm2950, %v2942
      %2960 = vst.msk [vmem:[%s314 + $0x48] sm:$0xff] %vm2950, %v2943
      %2961 = vst.msk [vmem:[%s314 + $0x50] sm:$0xff] %vm2950, %v2944
      %2962 = vst.msk [vmem:[%s314 + $0x58] sm:$0xff] %vm2950, %v2945
      %2963 = vst.msk [vmem:[%s314 + $0x60] sm:$0xff] %vm2950, %v2946
      %2964 = vst.msk [vmem:[%s314 + $0x68] sm:$0xff] %vm2950, %v2947
      %2965 = vst.msk [vmem:[%s314 + $0x70] sm:$0xff] %vm2950, %v2948
      %2966 = vst.msk [vmem:[%s314 + $0x78] sm:$0xff] %vm2950, %v2949
      %s2967 = smul.u32 8, %s22
      %p2968 = scmp.lt.s32.totalorder %s21, 1
      %s2969 = scalar_select %p2968, %s21, 1
      %p2970 = scmp.lt.s32.totalorder %s2967, 15
      %s2971 = scalar_select %p2970, %s2967, 15
      %s2972 = smul.addr %s2971, 2
      %s2973 = smul.addr %s2969, 32
      %s2974 = sadd.s32 %s2972, %s2973
      %s2975 = smul.addr %s2974, 8
      %s2976 = scalar_lea.vmem %s6, %s2975
      // Predicated region
      $region45: #{msrb_forward.3} parent=43 // pred_check
        %p2977 = pneg %p187
      $region46: #{msrb_forward.3} parent=43 // pred_check_branch
        %2979 = sbr.rel (%p2977) target = $region48
      $region47: #{msrb_forward.3} parent=43 // pred_region
        %s2980 = smul.u32 8, %s22
      $region48: #{msrb_forward.3} parent=43 // pred_fallthru
        _
    $region44: #{msrb_forward.3} parent=5 // pred_fallthru
      _
    %p2981 = scmp.le.s32.totalorder 2, %s12
    // Predicated region
    $region49: #{msrb_forward.3} parent=5 // pred_check
      %p2982 = pneg %p2981
    $region50: #{msrb_forward.3} parent=5 // pred_check_branch
      %2984 = sbr.rel (%p2982) target = $region52
    $region51: #{msrb_forward.3} parent=5 // pred_region
      %s2985 = ssub.s32 %s12, 2
      // Predicated region
      $region53: #{msrb_forward.3} parent=51 // pred_check
        %p2986 = pneg %p193
      $region54: #{msrb_forward.3} parent=51 // pred_check_branch
        %2988 = sbr.rel (%p2986) target = $region56
      $region55: #{msrb_forward.3} parent=51 // pred_region
        %s2989 = smul.u32 8, %s24
        %p2990 = scmp.lt.s32.totalorder %s23, 1
        %s2991 = scalar_select %p2990, %s23, 1
        %p2992 = scmp.lt.s32.totalorder %s2989, 15
        %s2993 = scalar_select %p2992, %s2989, 15
        %s2994 = smul.addr %s2993, 2
        %s2995 = smul.addr %s2991, 32
        %s2996 = sadd.s32 %s2994, %s2995
        %s2997 = smul.addr %s2996, 8
        %s2998 = scalar_lea.vmem %s6, %s2997
      $region56: #{msrb_forward.3} parent=51 // pred_fallthru
        _
    $region52: #{msrb_forward.3} parent=5 // pred_fallthru
      _
  $region6: #{msrb_forward.3} parent=0 // loop_footer
    %s16 = sadd.s32 1, %s12
  $region7: #{msrb_forward.3} parent=0 // loop_footer_branch
    %11 = sbr.rel target = $region3
  $region8: #{msrb_forward.3} parent=0 // loop_exit
    _

</llo_original>
